<compile_context>
chip_gen: v7x
topology: tpu7x:2x2x1
jax: 0.10.0
libtpu: 0.0.40
codegen_flags: <defaults>
</compile_context>

<pallas_src>
import functools
import math

import jax
import jax.numpy as jnp
from jax.experimental import pallas as pl
from jax.experimental.pallas import tpu as pltpu


# ----------------------------- attention kernel -------------------------------

def _attn_kernel(x_ref, g_ref, cos_ref, sin_ref, wq_ref, wk_ref, wv_ref, wo_ref,
                 o_ref, acc_ref, *, n_rep, head_dim, eps):
    """Grid = (batch, n_kv_heads). Accumulates x + sum_groups attn_g @ wo_g in f32."""
    kvh = pl.program_id(1)
    x = x_ref[...].astype(jnp.float32)                               # (S, D)
    ms = jnp.mean(x * x, axis=-1, keepdims=True)
    xn = x * jax.lax.rsqrt(ms + eps) * g_ref[...]                    # RMSNorm (f32)
    cdtype = wq_ref.dtype
    xc = xn.astype(cdtype)

    @pl.when(kvh == 0)
    def _():
        acc_ref[...] = x                                             # residual

    # Per-kv-group projections. wq carries the 1/sqrt(head_dim) scale; wq/wk columns are
    # pre-permuted per head to (even | odd) so RoPE below is one lane roll.
    qg = jnp.dot(xc, wq_ref[...], preferred_element_type=jnp.float32)    # (S, n_rep*hd)
    kh = jnp.dot(xc, wk_ref[...], preferred_element_type=jnp.float32)    # (S, hd)
    vh = jnp.dot(xc, wv_ref[...], preferred_element_type=jnp.float32)    # (S, hd)

    cos = cos_ref[...]                                               # (S, hd)  [ c |  c]
    sin = sin_ref[...]                                               # (S, hd)  [-s |  s]
    half = head_dim // 2

    def rope(t):                                                     # t: (S, hd) f32
        return t * cos + pltpu.roll(t, half, 1) * sin                # XLU roll (free slot)

    kh_c = rope(kh).astype(cdtype)                                   # bf16 for the MXU
    vh_c = vh.astype(cdtype)

    seq = x.shape[0]
    row = jax.lax.broadcasted_iota(jnp.int32, (seq, seq), 0)
    col = jax.lax.broadcasted_iota(jnp.int32, (seq, seq), 1)
    causal = col > row

    # Static loop over this kv-group's n_rep query heads; wo partials accumulate in
    # registers (no concat).  TODO(synk): flash-style KV tiling for very long S.
    wo_out = None
    for r in range(n_rep):
        qh = rope(qg[:, r * head_dim:(r + 1) * head_dim]).astype(cdtype)
        s = jax.lax.dot_general(qh, kh_c, (((1,), (1,)), ((), ())),
                                preferred_element_type=jnp.float32)  # (S, S) bf16 MXU
        s = jnp.where(causal, jnp.float32(-1e30), s)
        s = s - jnp.max(s, axis=-1, keepdims=True)                   # stable softmax, f32
        p = jnp.exp(s)
        l = jnp.sum(p, axis=-1, keepdims=True)
        oh = jnp.dot(p.astype(cdtype), vh_c, preferred_element_type=jnp.float32)
        oh = oh * pl.reciprocal(l, approx=True)                      # EUP, once per row
        part = jnp.dot(oh.astype(cdtype), wo_ref[r * head_dim:(r + 1) * head_dim, :],
                       preferred_element_type=jnp.float32)           # (S, D)
        wo_out = part if wo_out is None else wo_out + part
    acc_ref[...] += wo_out

    # TODO(synk): attn/resid dropout (p>0) and use_cache/past_key_values not implemented.
    @pl.when(kvh == pl.num_programs(1) - 1)
    def _():
        o_ref[...] = acc_ref[...].astype(o_ref.dtype)


# -------------------------------- FFN kernel ----------------------------------

def _ffn_kernel(h_ref, g_ref, w1_ref, w3_ref, w2_ref, o_ref, hn_ref, acc_ref, *, eps):
    """Grid = (row tiles, hidden tiles). Hidden axis is a reduction with f32 accumulator."""
    j = pl.program_id(1)

    @pl.when(j == 0)
    def _():
        h = h_ref[...].astype(jnp.float32)                           # (tm, D)
        ms = jnp.mean(h * h, axis=-1, keepdims=True)
        hn = h * jax.lax.rsqrt(ms + eps) * g_ref[...]
        hn_ref[...] = hn.astype(hn_ref.dtype)                        # cached RMSNorm(h)
        acc_ref[...] = h                                             # residual

    hn = hn_ref[...]
    h1 = jnp.dot(hn, w1_ref[...], preferred_element_type=jnp.float32)    # (tm, tn)
    h3 = jnp.dot(hn, w3_ref[...], preferred_element_type=jnp.float32)
    gated = (h1 * jax.nn.sigmoid(h1)) * h3                           # SiLU gate in f32
    acc_ref[...] += jnp.dot(gated.astype(w2_ref.dtype), w2_ref[...],
                            preferred_element_type=jnp.float32)      # (tm, D)

    # TODO(synk): FFN dropout (p>0) and MoE FFN (use_moe=True) not implemented.
    @pl.when(j == pl.num_programs(1) - 1)
    def _():
        o_ref[...] = acc_ref[...].astype(o_ref.dtype)


# --------------------------- init-time param prep -----------------------------

def _rope_angles(seq_len, head_dim, theta=10000.0):
    freqs = 1.0 / (theta ** (jnp.arange(0, head_dim, 2, dtype=jnp.float32) / head_dim))
    return jnp.outer(jnp.arange(seq_len, dtype=jnp.float32), freqs)       # (S, hd//2)


def _split_even_odd_cols(w_t, n_heads_w, head_dim):
    """Per head, reorder output columns from interleaved (x0,x1,x2,...) to (evens | odds)
    so RoPE inside the kernel is a single lane roll.  Scores are invariant since q and k
    get the same permutation."""
    d_in = w_t.shape[0]
    w = w_t.reshape(d_in, n_heads_w, head_dim // 2, 2)
    return jnp.concatenate([w[..., 0], w[..., 1]], axis=-1).reshape(d_in, n_heads_w * head_dim)


def prepare_block_params(raw, n_heads, n_kv_heads, seq_len, *, dtype, rope_theta=10000.0):
    """One-time prep (outside the per-call path): transpose nn.Linear weights to [in,out],
    fold 1/sqrt(head_dim) into wq, permute wq/wk columns for roll-based RoPE, build (S, hd)
    cos/sin tables with the rotation sign folded into sin, cast to compute dtype."""
    dq = raw["wq"].shape[0]
    head_dim = dq // n_heads
    ang = _rope_angles(seq_len, head_dim, rope_theta)
    cos_h, sin_h = jnp.cos(ang), jnp.sin(ang)                             # (S, hd//2)

    scale = 1.0 / math.sqrt(head_dim)
    wq_t = raw["wq"].T.astype(jnp.float32) * scale
    wk_t = raw["wk"].T.astype(jnp.float32)
    return {
        "wq_t": _split_even_odd_cols(wq_t, n_heads, head_dim).astype(dtype),
        "wk_t": _split_even_odd_cols(wk_t, n_kv_heads, head_dim).astype(dtype),
        "wv_t": raw["wv"].T.astype(dtype),
        "wo_t": raw["wo"].T.astype(dtype),
        "w1_t": raw["w1"].T.astype(dtype),
        "w3_t": raw["w3"].T.astype(dtype),
        "w2_t": raw["w2"].T.astype(dtype),
        "g_attn": raw["g_attn"].reshape(1, -1).astype(jnp.float32),
        "g_ffn": raw["g_ffn"].reshape(1, -1).astype(jnp.float32),
        "cos": jnp.concatenate([cos_h, cos_h], axis=-1),                  # (S, hd)
        "sin": jnp.concatenate([-sin_h, sin_h], axis=-1),                 # (S, hd), signed
    }


# --------------------------------- forward ------------------------------------

def _round_up(x, m):
    return (x + m - 1) // m * m


def _pick_divisor_tile(total, target, quantum=128):
    """Largest multiple of `quantum` <= target that divides `total` (fallback: total)."""
    if total <= target:
        return total
    t = (min(target, total) // quantum) * quantum
    while t >= quantum:
        if total % t == 0:
            return t
        t -= quantum
    return total


def _vmem_limit_bytes():
    # Generation-aware: ~3/4 of physical VMEM (v7x: 64 -> 48 MiB, v5e/v6e: 128 -> 96 MiB).
    try:
        cap = int(pltpu.get_tpu_info().vmem_capacity_bytes)
    except Exception:
        cap = 128 * 1024 * 1024
    return max(32 * 1024 * 1024, (cap * 3) // 4)


@functools.partial(jax.jit, static_argnames=("n_heads", "n_kv_heads", "eps", "tm", "tn"))
def llm_block_forward(x, params, *, n_heads, n_kv_heads, eps=1e-5, tm=256, tn=512):
    """x: [batch, seq, dim]; params from prepare_block_params. Returns [batch, seq, dim].
    Note: the per-kv-head weight blocks require head_dim % 128 == 0 (or n_kv_heads == 1)."""
    batch, seq, dim = x.shape
    dq = params["wq_t"].shape[1]
    hidden = params["w2_t"].shape[0]
    head_dim = dq // n_heads
    n_rep = n_heads // n_kv_heads
    gdim = n_rep * head_dim                                          # per-kv-group q width

    cparams = pltpu.CompilerParams(
        dimension_semantics=("parallel", "arbitrary"),
        vmem_limit_bytes=_vmem_limit_bytes(),
    )

    # ---- attention: grid (batch, kv heads); kv-head axis accumulates x + attn @ wo ----
    attn_kernel = functools.partial(_attn_kernel, n_rep=n_rep, head_dim=head_dim, eps=eps)
    h = pl.pallas_call(
        attn_kernel,
        out_shape=jax.ShapeDtypeStruct((batch, seq, dim), x.dtype),
        grid_spec=pltpu.PrefetchScalarGridSpec(
            num_scalar_prefetch=0,
            grid=(batch, n_kv_heads),
            in_specs=[
                pl.BlockSpec((None, seq, dim), lambda b, kh: (b, 0, 0)),     # x
                pl.BlockSpec((1, dim), lambda b, kh: (0, 0)),                # atten_norm w
                pl.BlockSpec((seq, head_dim), lambda b, kh: (0, 0)),         # cos
                pl.BlockSpec((seq, head_dim), lambda b, kh: (0, 0)),         # sin (signed)
                pl.BlockSpec((dim, gdim), lambda b, kh: (0, kh)),            # wq^T group
                pl.BlockSpec((dim, head_dim), lambda b, kh: (0, kh)),        # wk^T head
                pl.BlockSpec((dim, head_dim), lambda b, kh: (0, kh)),        # wv^T head
                pl.BlockSpec((gdim, dim), lambda b, kh: (kh, 0)),            # wo^T group
            ],
            out_specs=pl.BlockSpec((None, seq, dim), lambda b, kh: (b, 0, 0)),
            scratch_shapes=[pltpu.VMEM((seq, dim), jnp.float32)],            # f32 accumulator
        ),
        compiler_params=cparams,
    )(x, params["g_attn"], params["cos"], params["sin"],
      params["wq_t"], params["wk_t"], params["wv_t"], params["wo_t"])

    # ---- FFN: flattened rows x hidden tiles; hidden axis streams w1/w3/w2 blocks ----
    m = batch * seq
    tm_eff = min(tm, _round_up(m, 16))                               # bf16 sublane packing
    m_pad = _round_up(m, tm_eff)
    tn_eff = _pick_divisor_tile(hidden, tn)
    h2d = h.reshape(m, dim)
    if m_pad != m:
        h2d = jnp.pad(h2d, ((0, m_pad - m), (0, 0)))

    ffn_kernel = functools.partial(_ffn_kernel, eps=eps)
    cdtype = params["w1_t"].dtype
    out2d = pl.pallas_call(
        ffn_kernel,
        out_shape=jax.ShapeDtypeStruct((m_pad, dim), x.dtype),
        grid_spec=pltpu.PrefetchScalarGridSpec(
            num_scalar_prefetch=0,
            grid=(m_pad // tm_eff, hidden // tn_eff),
            in_specs=[
                pl.BlockSpec((tm_eff, dim), lambda i, j: (i, 0)),            # h tile
                pl.BlockSpec((1, dim), lambda i, j: (0, 0)),                 # ffn_norm w
                pl.BlockSpec((dim, tn_eff), lambda i, j: (0, j)),            # w1^T tile
                pl.BlockSpec((dim, tn_eff), lambda i, j: (0, j)),            # w3^T tile
                pl.BlockSpec((tn_eff, dim), lambda i, j: (j, 0)),            # w2^T tile
            ],
            out_specs=pl.BlockSpec((tm_eff, dim), lambda i, j: (i, 0)),
            scratch_shapes=[pltpu.VMEM((tm_eff, dim), cdtype),               # cached RMSNorm(h)
                            pltpu.VMEM((tm_eff, dim), jnp.float32)],         # f32 accumulator
        ),
        compiler_params=cparams,
    )(h2d, params["g_ffn"], params["w1_t"], params["w3_t"], params["w2_t"])

    return out2d[:m].reshape(batch, seq, dim)


# ------------------------------ pure-JAX reference -----------------------------

def _rms_ref(x, g, eps):
    return x / jnp.sqrt(jnp.mean(x * x, axis=-1, keepdims=True) + eps) * g


def _rope_ref(t, cos_h, sin_h):
    b, s, h, d = t.shape
    tr = t.reshape(b, s, h, d // 2, 2)
    t0, t1 = tr[..., 0], tr[..., 1]
    c = cos_h[None, :, None, :]
    sn = sin_h[None, :, None, :]
    return jnp.stack([t0 * c - t1 * sn, t0 * sn + t1 * c], axis=-1).reshape(b, s, h, d)


def reference_block(x, raw, n_heads, n_kv_heads, eps, rope_theta=10000.0):
    b, s, _ = x.shape
    hd = raw["wq"].shape[0] // n_heads
    n_rep = n_heads // n_kv_heads
    ang = _rope_angles(s, hd, rope_theta)
    cos_h, sin_h = jnp.cos(ang), jnp.sin(ang)
    xn = _rms_ref(x, raw["g_attn"], eps)
    q = (xn @ raw["wq"].T).reshape(b, s, n_heads, hd)
    k = (xn @ raw["wk"].T).reshape(b, s, n_kv_heads, hd)
    v = (xn @ raw["wv"].T).reshape(b, s, n_kv_heads, hd)
    q = _rope_ref(q, cos_h, sin_h)
    k = _rope_ref(k, cos_h, sin_h)
    k = jnp.repeat(k, n_rep, axis=2)
    v = jnp.repeat(v, n_rep, axis=2)
    scores = jnp.einsum("bqhd,bkhd->bhqk", q, k) / math.sqrt(hd)
    mask = jnp.where(jnp.arange(s)[None, :] > jnp.arange(s)[:, None], -jnp.inf, 0.0)
    scores = scores + mask[None, None]
    p = jax.nn.softmax(scores, axis=-1)
    o = jnp.einsum("bhqk,bkhd->bqhd", p, v).reshape(b, s, n_heads * hd)
    h = x + o @ raw["wo"].T
    hn = _rms_ref(h, raw["g_ffn"], eps)
    h1 = hn @ raw["w1"].T
    h3 = hn @ raw["w3"].T
    return h + (jax.nn.silu(h1) * h3) @ raw["w2"].T


# ---------------------------------- self-test ----------------------------------

if __name__ == "__main__":
    # Toy LLMconfig: dim=512, n_heads=4, n_kv_heads=2 (GQA n_rep=2, head_dim=128),
    # multiple_of=128 -> hidden_dim = 128*ceil((2/3*4*512)/128) = 1408, dropout=0.0,
    # norm_eps=1e-5, no MoE.  Exercises kv-head accumulation and FFN hidden tiling.
    dim, n_heads, n_kv_heads = 512, 4, 2
    batch, seq = 2, 8
    multiple_of = 128
    eps = 1e-5
    head_dim = dim // n_heads
    kv_dim = n_kv_heads * head_dim
    hidden = multiple_of * ((int(2 / 3 * (dim * 4)) + multiple_of - 1) // multiple_of)

    key = jax.random.PRNGKey(0)
    ks = jax.random.split(key, 10)

    def _w(k, shape, fan_in):
        return jax.random.normal(k, shape, dtype=jnp.float32) * (fan_in ** -0.5)

    raw = {
        "wq": _w(ks[0], (n_heads * head_dim, dim), dim),   # nn.Linear layout: (out, in)
        "wk": _w(ks[1], (kv_dim, dim), dim),
        "wv": _w(ks[2], (kv_dim, dim), dim),
        "wo": _w(ks[3], (dim, n_heads * head_dim), dim),
        "w1": _w(ks[4], (hidden, dim), dim),
        "w2": _w(ks[5], (dim, hidden), hidden),
        "w3": _w(ks[6], (hidden, dim), dim),
        "g_attn": 1.0 + 0.1 * jax.random.normal(ks[7], (dim,), dtype=jnp.float32),
        "g_ffn": 1.0 + 0.1 * jax.random.normal(ks[8], (dim,), dtype=jnp.float32),
    }
    x = jax.random.normal(ks[9], (batch, seq, dim), dtype=jnp.float32)

    ref = reference_block(x, raw, n_heads, n_kv_heads, eps)

    def rel_err(a, b):
        return float(jnp.linalg.norm(a.astype(jnp.float32) - b) / jnp.linalg.norm(b))

    # f32 path
    params32 = prepare_block_params(raw, n_heads, n_kv_heads, seq, dtype=jnp.float32)
    out32 = jax.block_until_ready(
        llm_block_forward(x, params32, n_heads=n_heads, n_kv_heads=n_kv_heads, eps=eps))
    assert out32.shape == (batch, seq, dim)
    e32 = rel_err(out32, ref)
    assert e32 < 1e-2, f"f32 mismatch vs reference: rel_err={e32}"

    # bf16 path (MXU-native inputs everywhere, f32 accumulation inside the kernels)
    params16 = prepare_block_params(raw, n_heads, n_kv_heads, seq, dtype=jnp.bfloat16)
    out16 = jax.block_until_ready(
        llm_block_forward(x.astype(jnp.bfloat16), params16,
                          n_heads=n_heads, n_kv_heads=n_kv_heads, eps=eps))
    assert out16.shape == (batch, seq, dim)
    e16 = rel_err(out16, ref)
    assert e16 < 5e-2, f"bf16 mismatch vs reference: rel_err={e16}"

    print("KERNEL_OK")
</pallas_src>

<mosaic_0001>
module attributes {stable_mosaic.version = 11 : i64} {
  func.func @_ffn_kernel(%arg0: i32, %arg1: i32, %arg2: memref<16x512xf32, #tpu.memory_space<vmem>>, %arg3: memref<1x512xf32, #tpu.memory_space<vmem>>, %arg4: memref<512x128xf32, #tpu.memory_space<vmem>>, %arg5: memref<512x128xf32, #tpu.memory_space<vmem>>, %arg6: memref<128x512xf32, #tpu.memory_space<vmem>>, %arg7: memref<16x512xf32, #tpu.memory_space<vmem>>, %arg8: memref<16x512xf32, #tpu.memory_space<vmem>>, %arg9: memref<16x512xf32, #tpu.memory_space<vmem>>) attributes {dimension_semantics = [#tpu.dimension_semantics<parallel>, #tpu.dimension_semantics<arbitrary>], iteration_bounds = array<i64: 1, 11>, scalar_prefetch = 0 : i64, scratch_operands = 2 : i64, tpu.core_type = #tpu.core_type<tc>, window_params = [{transform_indices = @transform_0, window_bounds = array<i64: 16, 512>}, {pipeline_mode = #tpu.pipeline_mode<synchronous>, transform_indices = @transform_1, window_bounds = array<i64: 1, 512>}, {transform_indices = @transform_2, window_bounds = array<i64: 512, 128>}, {transform_indices = @transform_3, window_bounds = array<i64: 512, 128>}, {transform_indices = @transform_4, window_bounds = array<i64: 128, 512>}, {transform_indices = @transform_5, window_bounds = array<i64: 16, 512>}]} {
    %c0_i32 = arith.constant 0 : i32
    %0 = arith.cmpi eq, %arg1, %c0_i32 : i32
    %1 = arith.extui %0 : i1 to i32
    %c0_i32_0 = arith.constant 0 : i32
    %2 = arith.cmpi ne, %1, %c0_i32_0 : i32
    scf.if %2 {
      %c0_16 = arith.constant 0 : index
      %c0_17 = arith.constant 0 : index
      %23 = vector.load %arg2[%c0_16, %c0_17] : memref<16x512xf32, #tpu.memory_space<vmem>>, vector<16x512xf32>
      %24 = arith.mulf %23, %23 : vector<16x512xf32>
      %cst_18 = arith.constant dense<0.000000e+00> : vector<16xf32>
      %25 = vector.multi_reduction <add>, %24, %cst_18 [1] : vector<16x512xf32> to vector<16xf32>
      %26 = vector.shape_cast %25 : vector<16xf32> to vector<16x1xf32>
      %cst_19 = arith.constant 5.120000e+02 : f32
      %27 = vector.broadcast %cst_19 : f32 to vector<16x1xf32>
      %28 = arith.divf %26, %27 : vector<16x1xf32>
      %cst_20 = arith.constant 9.99999974E-6 : f32
      %29 = vector.broadcast %cst_20 : f32 to vector<16x1xf32>
      %30 = arith.addf %28, %29 : vector<16x1xf32>
      %31 = math.rsqrt %30 : vector<16x1xf32>
      %32 = vector.broadcast %31 : vector<16x1xf32> to vector<16x512xf32>
      %33 = arith.mulf %23, %32 : vector<16x512xf32>
      %c0_21 = arith.constant 0 : index
      %c0_22 = arith.constant 0 : index
      %34 = vector.load %arg3[%c0_21, %c0_22] : memref<1x512xf32, #tpu.memory_space<vmem>>, vector<1x512xf32>
      %35 = vector.broadcast %34 : vector<1x512xf32> to vector<16x512xf32>
      %36 = arith.mulf %33, %35 : vector<16x512xf32>
      %c0_23 = arith.constant 0 : index
      %c0_24 = arith.constant 0 : index
      %37 = vector.load %arg8[%c0_23, %c0_24] : memref<16x512xf32, #tpu.memory_space<vmem>>, vector<16x512xf32>
      tpu.vector_store %arg8[%c0_23, %c0_24], %36 {strides = array<i32>} : memref<16x512xf32, #tpu.memory_space<vmem>>, vector<16x512xf32>,
      %c0_25 = arith.constant 0 : index
      %c0_26 = arith.constant 0 : index
      %38 = vector.load %arg9[%c0_25, %c0_26] : memref<16x512xf32, #tpu.memory_space<vmem>>, vector<16x512xf32>
      tpu.vector_store %arg9[%c0_25, %c0_26], %23 {strides = array<i32>} : memref<16x512xf32, #tpu.memory_space<vmem>>, vector<16x512xf32>,
    } else {
    }
    %c0 = arith.constant 0 : index
    %c0_1 = arith.constant 0 : index
    %3 = vector.load %arg8[%c0, %c0_1] : memref<16x512xf32, #tpu.memory_space<vmem>>, vector<16x512xf32>
    %c0_2 = arith.constant 0 : index
    %c0_3 = arith.constant 0 : index
    %4 = vector.load %arg4[%c0_2, %c0_3] : memref<512x128xf32, #tpu.memory_space<vmem>>, vector<512x128xf32>
    %cst = arith.constant dense<0.000000e+00> : vector<16x128xf32>
    %5 = tpu.matmul %3, %4, %cst {dimension_numbers = #tpu.dot_dimension_numbers<[1], [0], [0], [1], [0, 0, 1, 1], [], []>} : vector<16x512xf32>, vector<512x128xf32>, vector<16x128xf32> -> vector<16x128xf32>
    %c0_4 = arith.constant 0 : index
    %c0_5 = arith.constant 0 : index
    %6 = vector.load %arg5[%c0_4, %c0_5] : memref<512x128xf32, #tpu.memory_space<vmem>>, vector<512x128xf32>
    %cst_6 = arith.constant dense<0.000000e+00> : vector<16x128xf32>
    %7 = tpu.matmul %3, %6, %cst_6 {dimension_numbers = #tpu.dot_dimension_numbers<[1], [0], [0], [1], [0, 0, 1, 1], [], []>} : vector<16x512xf32>, vector<512x128xf32>, vector<16x128xf32> -> vector<16x128xf32>
    %8 = arith.negf %5 : vector<16x128xf32>
    %9 = math.exp %8 : vector<16x128xf32>
    %cst_7 = arith.constant 1.000000e+00 : f32
    %10 = vector.broadcast %cst_7 : f32 to vector<16x128xf32>
    %11 = arith.addf %10, %9 : vector<16x128xf32>
    %12 = arith.divf %10, %11 : vector<16x128xf32>
    %13 = arith.mulf %5, %12 : vector<16x128xf32>
    %14 = arith.mulf %13, %7 : vector<16x128xf32>
    %c0_8 = arith.constant 0 : index
    %c0_9 = arith.constant 0 : index
    %15 = vector.load %arg9[%c0_8, %c0_9] : memref<16x512xf32, #tpu.memory_space<vmem>>, vector<16x512xf32>
    %c0_10 = arith.constant 0 : index
    %c0_11 = arith.constant 0 : index
    %16 = vector.load %arg6[%c0_10, %c0_11] : memref<128x512xf32, #tpu.memory_space<vmem>>, vector<128x512xf32>
    %cst_12 = arith.constant dense<0.000000e+00> : vector<16x512xf32>
    %17 = tpu.matmul %14, %16, %cst_12 {dimension_numbers = #tpu.dot_dimension_numbers<[1], [0], [0], [1], [0, 0, 1, 1], [], []>} : vector<16x128xf32>, vector<128x512xf32>, vector<16x512xf32> -> vector<16x512xf32>
    %18 = arith.addf %15, %17 : vector<16x512xf32>
    %c0_13 = arith.constant 0 : index
    %c0_14 = arith.constant 0 : index
    %19 = vector.load %arg9[%c0_13, %c0_14] : memref<16x512xf32, #tpu.memory_space<vmem>>, vector<16x512xf32>
    tpu.vector_store %arg9[%c0_13, %c0_14], %18 {strides = array<i32>} : memref<16x512xf32, #tpu.memory_space<vmem>>, vector<16x512xf32>,
    %c10_i32 = arith.constant 10 : i32
    %20 = arith.cmpi eq, %arg1, %c10_i32 : i32
    %21 = arith.extui %20 : i1 to i32
    %c0_i32_15 = arith.constant 0 : i32
    %22 = arith.cmpi ne, %21, %c0_i32_15 : i32
    scf.if %22 {
      %c0_16 = arith.constant 0 : index
      %c0_17 = arith.constant 0 : index
      %23 = vector.load %arg9[%c0_16, %c0_17] : memref<16x512xf32, #tpu.memory_space<vmem>>, vector<16x512xf32>
      %c0_18 = arith.constant 0 : index
      %c0_19 = arith.constant 0 : index
      %24 = vector.load %arg7[%c0_18, %c0_19] : memref<16x512xf32, #tpu.memory_space<vmem>>, vector<16x512xf32>
      tpu.vector_store %arg7[%c0_18, %c0_19], %23 {strides = array<i32>} : memref<16x512xf32, #tpu.memory_space<vmem>>, vector<16x512xf32>,
    } else {
    }
    return
  }
  func.func @transform_0(%arg0: i32, %arg1: i32) -> (i32, i32) {
    %c0_i32 = arith.constant 0 : i32
    %c0_i32_0 = arith.constant 0 : i32
    return %arg0, %c0_i32 : i32, i32
  }
  func.func @transform_1(%arg0: i32, %arg1: i32) -> (i32, i32) {
    %c0_i32 = arith.constant 0 : i32
    %c0_i32_0 = arith.constant 0 : i32
    %c0_i32_1 = arith.constant 0 : i32
    return %c0_i32, %c0_i32_0 : i32, i32
  }
  func.func @transform_2(%arg0: i32, %arg1: i32) -> (i32, i32) {
    %c0_i32 = arith.constant 0 : i32
    %c0_i32_0 = arith.constant 0 : i32
    return %c0_i32, %arg1 : i32, i32
  }
  func.func @transform_3(%arg0: i32, %arg1: i32) -> (i32, i32) {
    %c0_i32 = arith.constant 0 : i32
    %c0_i32_0 = arith.constant 0 : i32
    return %c0_i32, %arg1 : i32, i32
  }
  func.func @transform_4(%arg0: i32, %arg1: i32) -> (i32, i32) {
    %c0_i32 = arith.constant 0 : i32
    %c0_i32_0 = arith.constant 0 : i32
    return %arg1, %c0_i32 : i32, i32
  }
  func.func @transform_5(%arg0: i32, %arg1: i32) -> (i32, i32) {
    %c0_i32 = arith.constant 0 : i32
    %c0_i32_0 = arith.constant 0 : i32
    return %arg0, %c0_i32 : i32, i32
  }
}

module attributes {stable_mosaic.version = 11 : i64} {
  func.func @_attn_kernel(%arg0: i32, %arg1: i32, %arg2: memref<1x8x512xf32, #tpu.memory_space<vmem>>, %arg3: memref<1x512xf32, #tpu.memory_space<vmem>>, %arg4: memref<8x128xf32, #tpu.memory_space<vmem>>, %arg5: memref<8x128xf32, #tpu.memory_space<vmem>>, %arg6: memref<512x256xf32, #tpu.memory_space<vmem>>, %arg7: memref<512x128xf32, #tpu.memory_space<vmem>>, %arg8: memref<512x128xf32, #tpu.memory_space<vmem>>, %arg9: memref<256x512xf32, #tpu.memory_space<vmem>>, %arg10: memref<1x8x512xf32, #tpu.memory_space<vmem>>, %arg11: memref<8x512xf32, #tpu.memory_space<vmem>>) attributes {dimension_semantics = [#tpu.dimension_semantics<parallel>, #tpu.dimension_semantics<arbitrary>], iteration_bounds = array<i64: 2, 2>, scalar_prefetch = 0 : i64, scratch_operands = 1 : i64, tpu.core_type = #tpu.core_type<tc>, window_params = [{transform_indices = @transform_0, window_bounds = array<i64: 1, 8, 512>}, {pipeline_mode = #tpu.pipeline_mode<synchronous>, transform_indices = @transform_1, window_bounds = array<i64: 1, 512>}, {pipeline_mode = #tpu.pipeline_mode<synchronous>, transform_indices = @transform_2, window_bounds = array<i64: 8, 128>}, {pipeline_mode = #tpu.pipeline_mode<synchronous>, transform_indices = @transform_3, window_bounds = array<i64: 8, 128>}, {transform_indices = @transform_4, window_bounds = array<i64: 512, 256>}, {transform_indices = @transform_5, window_bounds = array<i64: 512, 128>}, {transform_indices = @transform_6, window_bounds = array<i64: 512, 128>}, {transform_indices = @transform_7, window_bounds = array<i64: 256, 512>}, {transform_indices = @transform_8, window_bounds = array<i64: 1, 8, 512>}]} {
    %c0 = arith.constant 0 : index
    %c0_0 = arith.constant 0 : index
    %c0_1 = arith.constant 0 : index
    %0 = vector.load %arg2[%c0, %c0_0, %c0_1] : memref<1x8x512xf32, #tpu.memory_space<vmem>>, vector<1x8x512xf32>
    %1 = vector.shape_cast %0 : vector<1x8x512xf32> to vector<8x512xf32>
    %2 = arith.mulf %1, %1 : vector<8x512xf32>
    %cst = arith.constant dense<0.000000e+00> : vector<8xf32>
    %3 = vector.multi_reduction <add>, %2, %cst [1] : vector<8x512xf32> to vector<8xf32>
    %4 = vector.shape_cast %3 : vector<8xf32> to vector<8x1xf32>
    %cst_2 = arith.constant 5.120000e+02 : f32
    %5 = vector.broadcast %cst_2 : f32 to vector<8x1xf32>
    %6 = arith.divf %4, %5 : vector<8x1xf32>
    %cst_3 = arith.constant 9.99999974E-6 : f32
    %7 = vector.broadcast %cst_3 : f32 to vector<8x1xf32>
    %8 = arith.addf %6, %7 : vector<8x1xf32>
    %9 = math.rsqrt %8 : vector<8x1xf32>
    %10 = vector.broadcast %9 : vector<8x1xf32> to vector<8x512xf32>
    %11 = arith.mulf %1, %10 : vector<8x512xf32>
    %c0_4 = arith.constant 0 : index
    %c0_5 = arith.constant 0 : index
    %12 = vector.load %arg3[%c0_4, %c0_5] : memref<1x512xf32, #tpu.memory_space<vmem>>, vector<1x512xf32>
    %13 = vector.broadcast %12 : vector<1x512xf32> to vector<8x512xf32>
    %14 = arith.mulf %11, %13 : vector<8x512xf32>
    %c0_i32 = arith.constant 0 : i32
    %15 = arith.cmpi eq, %arg1, %c0_i32 : i32
    %16 = arith.extui %15 : i1 to i32
    %c0_i32_6 = arith.constant 0 : i32
    %17 = arith.cmpi ne, %16, %c0_i32_6 : i32
    scf.if %17 {
      %c0_42 = arith.constant 0 : index
      %c0_43 = arith.constant 0 : index
      %82 = vector.load %arg11[%c0_42, %c0_43] : memref<8x512xf32, #tpu.memory_space<vmem>>, vector<8x512xf32>
      tpu.vector_store %arg11[%c0_42, %c0_43], %1 {strides = array<i32>} : memref<8x512xf32, #tpu.memory_space<vmem>>, vector<8x512xf32>,
    } else {
    }
    %c0_7 = arith.constant 0 : index
    %c0_8 = arith.constant 0 : index
    %18 = vector.load %arg6[%c0_7, %c0_8] : memref<512x256xf32, #tpu.memory_space<vmem>>, vector<512x256xf32>
    %cst_9 = arith.constant dense<0.000000e+00> : vector<8x256xf32>
    %19 = tpu.matmul %14, %18, %cst_9 {dimension_numbers = #tpu.dot_dimension_numbers<[1], [0], [0], [1], [0, 0, 1, 1], [], []>} : vector<8x512xf32>, vector<512x256xf32>, vector<8x256xf32> -> vector<8x256xf32>
    %c0_10 = arith.constant 0 : index
    %c0_11 = arith.constant 0 : index
    %20 = vector.load %arg7[%c0_10, %c0_11] : memref<512x128xf32, #tpu.memory_space<vmem>>, vector<512x128xf32>
    %cst_12 = arith.constant dense<0.000000e+00> : vector<8x128xf32>
    %21 = tpu.matmul %14, %20, %cst_12 {dimension_numbers = #tpu.dot_dimension_numbers<[1], [0], [0], [1], [0, 0, 1, 1], [], []>} : vector<8x512xf32>, vector<512x128xf32>, vector<8x128xf32> -> vector<8x128xf32>
    %c0_13 = arith.constant 0 : index
    %c0_14 = arith.constant 0 : index
    %22 = vector.load %arg8[%c0_13, %c0_14] : memref<512x128xf32, #tpu.memory_space<vmem>>, vector<512x128xf32>
    %cst_15 = arith.constant dense<0.000000e+00> : vector<8x128xf32>
    %23 = tpu.matmul %14, %22, %cst_15 {dimension_numbers = #tpu.dot_dimension_numbers<[1], [0], [0], [1], [0, 0, 1, 1], [], []>} : vector<8x512xf32>, vector<512x128xf32>, vector<8x128xf32> -> vector<8x128xf32>
    %c0_16 = arith.constant 0 : index
    %c0_17 = arith.constant 0 : index
    %24 = vector.load %arg4[%c0_16, %c0_17] : memref<8x128xf32, #tpu.memory_space<vmem>>, vector<8x128xf32>
    %c0_18 = arith.constant 0 : index
    %c0_19 = arith.constant 0 : index
    %25 = vector.load %arg5[%c0_18, %c0_19] : memref<8x128xf32, #tpu.memory_space<vmem>>, vector<8x128xf32>
    %26 = arith.mulf %21, %24 : vector<8x128xf32>
    %c64_i32 = arith.constant 64 : i32
    %27 = tpu.dynamic_rotate %21 by %c64_i32 dim 1 : vector<8x128xf32>, i32 -> vector<8x128xf32>
    %28 = arith.mulf %27, %25 : vector<8x128xf32>
    %29 = arith.addf %26, %28 : vector<8x128xf32>
    %30 = tpu.iota {dimensions = array<i32: 0>} : vector<8x8xi32>
    %31 = tpu.iota {dimensions = array<i32: 1>} : vector<8x8xi32>
    %32 = arith.cmpi sgt, %31, %30 : vector<8x8xi32>
    %33 = vector.extract_strided_slice %19 {offsets = [0, 0], sizes = [8, 128], strides = [1, 1]} : vector<8x256xf32> to vector<8x128xf32>
    %34 = arith.mulf %33, %24 : vector<8x128xf32>
    %c64_i32_20 = arith.constant 64 : i32
    %35 = tpu.dynamic_rotate %33 by %c64_i32_20 dim 1 : vector<8x128xf32>, i32 -> vector<8x128xf32>
    %36 = arith.mulf %35, %25 : vector<8x128xf32>
    %37 = arith.addf %34, %36 : vector<8x128xf32>
    %cst_21 = arith.constant dense<0.000000e+00> : vector<8x8xf32>
    %38 = tpu.matmul %37, %29, %cst_21 {dimension_numbers = #tpu.dot_dimension_numbers<[1], [1], [0], [0], [0, 0, 1, 0], [], []>} : vector<8x128xf32>, vector<8x128xf32>, vector<8x8xf32> -> vector<8x8xf32>
    %cst_22 = arith.constant -1.000000e+30 : f32
    %39 = vector.broadcast %cst_22 : f32 to vector<8x8xf32>
    %40 = arith.select %32, %39, %38 : vector<8x8xi1>, vector<8x8xf32>
    %cst_23 = arith.constant dense<0xFF800000> : vector<8xf32>
    %41 = vector.multi_reduction <maximumf>, %40, %cst_23 [1] : vector<8x8xf32> to vector<8xf32>
    %42 = vector.shape_cast %41 : vector<8xf32> to vector<8x1xf32>
    %43 = vector.broadcast %42 : vector<8x1xf32> to vector<8x8xf32>
    %44 = arith.subf %40, %43 : vector<8x8xf32>
    %45 = math.exp %44 : vector<8x8xf32>
    %cst_24 = arith.constant dense<0.000000e+00> : vector<8xf32>
    %46 = vector.multi_reduction <add>, %45, %cst_24 [1] : vector<8x8xf32> to vector<8xf32>
    %47 = vector.shape_cast %46 : vector<8xf32> to vector<8x1xf32>
    %cst_25 = arith.constant dense<0.000000e+00> : vector<8x128xf32>
    %48 = tpu.matmul %45, %23, %cst_25 {dimension_numbers = #tpu.dot_dimension_numbers<[1], [0], [0], [1], [0, 0, 1, 1], [], []>} : vector<8x8xf32>, vector<8x128xf32>, vector<8x128xf32> -> vector<8x128xf32>
    %49 = tpu.reciprocal %47 {approx = true} : vector<8x1xf32> -> vector<8x1xf32>
    %50 = vector.broadcast %49 : vector<8x1xf32> to vector<8x128xf32>
    %51 = arith.mulf %48, %50 : vector<8x128xf32>
    %c0_26 = arith.constant 0 : index
    %c0_27 = arith.constant 0 : index
    %52 = vector.load %arg9[%c0_26, %c0_27] : memref<256x512xf32, #tpu.memory_space<vmem>>, vector<128x512xf32>
    %cst_28 = arith.constant dense<0.000000e+00> : vector<8x512xf32>
    %53 = tpu.matmul %51, %52, %cst_28 {dimension_numbers = #tpu.dot_dimension_numbers<[1], [0], [0], [1], [0, 0, 1, 1], [], []>} : vector<8x128xf32>, vector<128x512xf32>, vector<8x512xf32> -> vector<8x512xf32>
    %54 = vector.extract_strided_slice %19 {offsets = [0, 128], sizes = [8, 128], strides = [1, 1]} : vector<8x256xf32> to vector<8x128xf32>
    %55 = arith.mulf %54, %24 : vector<8x128xf32>
    %c64_i32_29 = arith.constant 64 : i32
    %56 = tpu.dynamic_rotate %54 by %c64_i32_29 dim 1 : vector<8x128xf32>, i32 -> vector<8x128xf32>
    %57 = arith.mulf %56, %25 : vector<8x128xf32>
    %58 = arith.addf %55, %57 : vector<8x128xf32>
    %cst_30 = arith.constant dense<0.000000e+00> : vector<8x8xf32>
    %59 = tpu.matmul %58, %29, %cst_30 {dimension_numbers = #tpu.dot_dimension_numbers<[1], [1], [0], [0], [0, 0, 1, 0], [], []>} : vector<8x128xf32>, vector<8x128xf32>, vector<8x8xf32> -> vector<8x8xf32>
    %cst_31 = arith.constant -1.000000e+30 : f32
    %60 = vector.broadcast %cst_31 : f32 to vector<8x8xf32>
    %61 = arith.select %32, %60, %59 : vector<8x8xi1>, vector<8x8xf32>
    %cst_32 = arith.constant dense<0xFF800000> : vector<8xf32>
    %62 = vector.multi_reduction <maximumf>, %61, %cst_32 [1] : vector<8x8xf32> to vector<8xf32>
    %63 = vector.shape_cast %62 : vector<8xf32> to vector<8x1xf32>
    %64 = vector.broadcast %63 : vector<8x1xf32> to vector<8x8xf32>
    %65 = arith.subf %61, %64 : vector<8x8xf32>
    %66 = math.exp %65 : vector<8x8xf32>
    %cst_33 = arith.constant dense<0.000000e+00> : vector<8xf32>
    %67 = vector.multi_reduction <add>, %66, %cst_33 [1] : vector<8x8xf32> to vector<8xf32>
    %68 = vector.shape_cast %67 : vector<8xf32> to vector<8x1xf32>
    %cst_34 = arith.constant dense<0.000000e+00> : vector<8x128xf32>
    %69 = tpu.matmul %66, %23, %cst_34 {dimension_numbers = #tpu.dot_dimension_numbers<[1], [0], [0], [1], [0, 0, 1, 1], [], []>} : vector<8x8xf32>, vector<8x128xf32>, vector<8x128xf32> -> vector<8x128xf32>
    %70 = tpu.reciprocal %68 {approx = true} : vector<8x1xf32> -> vector<8x1xf32>
    %71 = vector.broadcast %70 : vector<8x1xf32> to vector<8x128xf32>
    %72 = arith.mulf %69, %71 : vector<8x128xf32>
    %c128 = arith.constant 128 : index
    %c0_35 = arith.constant 0 : index
    %73 = vector.load %arg9[%c128, %c0_35] : memref<256x512xf32, #tpu.memory_space<vmem>>, vector<128x512xf32>
    %cst_36 = arith.constant dense<0.000000e+00> : vector<8x512xf32>
    %74 = tpu.matmul %72, %73, %cst_36 {dimension_numbers = #tpu.dot_dimension_numbers<[1], [0], [0], [1], [0, 0, 1, 1], [], []>} : vector<8x128xf32>, vector<128x512xf32>, vector<8x512xf32> -> vector<8x512xf32>
    %75 = arith.addf %53, %74 : vector<8x512xf32>
    %c0_37 = arith.constant 0 : index
    %c0_38 = arith.constant 0 : index
    %76 = vector.load %arg11[%c0_37, %c0_38] : memref<8x512xf32, #tpu.memory_space<vmem>>, vector<8x512xf32>
    %77 = arith.addf %76, %75 : vector<8x512xf32>
    %c0_39 = arith.constant 0 : index
    %c0_40 = arith.constant 0 : index
    %78 = vector.load %arg11[%c0_39, %c0_40] : memref<8x512xf32, #tpu.memory_space<vmem>>, vector<8x512xf32>
    tpu.vector_store %arg11[%c0_39, %c0_40], %77 {strides = array<i32>} : memref<8x512xf32, #tpu.memory_space<vmem>>, vector<8x512xf32>,
    %c1_i32 = arith.constant 1 : i32
    %79 = arith.cmpi eq, %arg1, %c1_i32 : i32
    %80 = arith.extui %79 : i1 to i32
    %c0_i32_41 = arith.constant 0 : i32
    %81 = arith.cmpi ne, %80, %c0_i32_41 : i32
    scf.if %81 {
      %c0_42 = arith.constant 0 : index
      %c0_43 = arith.constant 0 : index
      %82 = vector.load %arg11[%c0_42, %c0_43] : memref<8x512xf32, #tpu.memory_space<vmem>>, vector<8x512xf32>
      %c0_44 = arith.constant 0 : index
      %c0_45 = arith.constant 0 : index
      %c0_46 = arith.constant 0 : index
      %83 = vector.load %arg10[%c0_44, %c0_45, %c0_46] : memref<1x8x512xf32, #tpu.memory_space<vmem>>, vector<1x8x512xf32>
      %84 = vector.shape_cast %83 : vector<1x8x512xf32> to vector<8x512xf32>
      %85 = vector.shape_cast %82 : vector<8x512xf32> to vector<1x8x512xf32>
      tpu.vector_store %arg10[%c0_44, %c0_45, %c0_46], %85 {strides = array<i32>} : memref<1x8x512xf32, #tpu.memory_space<vmem>>, vector<1x8x512xf32>,
    } else {
    }
    return
  }
  func.func @transform_0(%arg0: i32, %arg1: i32) -> (i32, i32, i32) {
    %c0_i32 = arith.constant 0 : i32
    %c0_i32_0 = arith.constant 0 : i32
    %c0_i32_1 = arith.constant 0 : i32
    return %arg0, %c0_i32, %c0_i32_0 : i32, i32, i32
  }
  func.func @transform_1(%arg0: i32, %arg1: i32) -> (i32, i32) {
    %c0_i32 = arith.constant 0 : i32
    %c0_i32_0 = arith.constant 0 : i32
    %c0_i32_1 = arith.constant 0 : i32
    return %c0_i32, %c0_i32_0 : i32, i32
  }
  func.func @transform_2(%arg0: i32, %arg1: i32) -> (i32, i32) {
    %c0_i32 = arith.constant 0 : i32
    %c0_i32_0 = arith.constant 0 : i32
    %c0_i32_1 = arith.constant 0 : i32
    return %c0_i32, %c0_i32_0 : i32, i32
  }
  func.func @transform_3(%arg0: i32, %arg1: i32) -> (i32, i32) {
    %c0_i32 = arith.constant 0 : i32
    %c0_i32_0 = arith.constant 0 : i32
    %c0_i32_1 = arith.constant 0 : i32
    return %c0_i32, %c0_i32_0 : i32, i32
  }
  func.func @transform_4(%arg0: i32, %arg1: i32) -> (i32, i32) {
    %c0_i32 = arith.constant 0 : i32
    %c0_i32_0 = arith.constant 0 : i32
    return %c0_i32, %arg1 : i32, i32
  }
  func.func @transform_5(%arg0: i32, %arg1: i32) -> (i32, i32) {
    %c0_i32 = arith.constant 0 : i32
    %c0_i32_0 = arith.constant 0 : i32
    return %c0_i32, %arg1 : i32, i32
  }
  func.func @transform_6(%arg0: i32, %arg1: i32) -> (i32, i32) {
    %c0_i32 = arith.constant 0 : i32
    %c0_i32_0 = arith.constant 0 : i32
    return %c0_i32, %arg1 : i32, i32
  }
  func.func @transform_7(%arg0: i32, %arg1: i32) -> (i32, i32) {
    %c0_i32 = arith.constant 0 : i32
    %c0_i32_0 = arith.constant 0 : i32
    return %arg1, %c0_i32 : i32, i32
  }
  func.func @transform_8(%arg0: i32, %arg1: i32) -> (i32, i32, i32) {
    %c0_i32 = arith.constant 0 : i32
    %c0_i32_0 = arith.constant 0 : i32
    %c0_i32_1 = arith.constant 0 : i32
    return %arg0, %c0_i32, %c0_i32_0 : i32, i32, i32
  }
}

</mosaic_0001>

<llo_original>
// kernel: llm_block_forward.3
$region0: #{llm_block_forward.3}
  #allocation0 [shape = 'u32[]', space=smem, size = 0x4, offset = 0x4, fixed_abs, tag = 'smem constant byte address 0x4 - core index']
  #allocation1 [shape = 'u32[144,128]{1,0:T(1,128)}', space=vmem, size = 0x12000, scoped, tag = 'internal scratch']
  #allocation2 [shape = 'f32[16,512]{1,0:T(8,128)}', space=vmem, size = 0x8000, scoped, tag = 'scratch operand']
  #allocation3 [shape = 'f32[16,512]{1,0:T(8,128)}', space=vmem, size = 0x8000, scoped, tag = 'scratch operand']
  %s0 = inlined_call_operand.hbm [shape: f32[16,512], index: 0, kind: input, shape index: {}]
  %s1 = inlined_call_operand.hbm [shape: f32[1,512], index: 1, kind: input, shape index: {}]
  %s2 = inlined_call_operand.hbm [shape: f32[512,1408], index: 2, kind: input, shape index: {}]
  %s3 = inlined_call_operand.hbm [shape: f32[512,1408], index: 3, kind: input, shape index: {}]
  %s4 = inlined_call_operand.hbm [shape: f32[1408,512], index: 4, kind: input, shape index: {}]
  %s5 = inlined_call_operand.hbm [shape: f32[16,512], index: 5, kind: output, shape index: {}]
  %s6 = sld [smem:[#allocation0]]
  $region81: #{llm_block_forward.3} parent=0
    _
  %s8 = ssub.s32 1, %s6
  %s9 = scalar_select 0, %s8, %s6
  $region1: #{llm_block_forward.3} parent=0
    #allocation4 [shape = 'u8[32768]{0}', space=vmem, size = 0x8000, scoped, tag = 'input window, operand 0, single buffered']
    #allocation5 [shape = 's32[2]{0}', space=sflag, size = 0x8, scoped, tag = 'scoped memory for llm_block_forward.3']
    #allocation6 [shape = 's32[2]{0}', space=sflag, size = 0x8, scoped, tag = 'scoped memory for llm_block_forward.3']
    #allocation7 [shape = 'u8[2048]{0}', space=vmem, size = 0x800, scoped, tag = 'input window, operand 1, single buffered']
    #allocation8 [shape = 's32[1]{0}', space=sflag, size = 0x4, scoped, tag = 'scoped memory for llm_block_forward.3']
    #allocation9 [shape = 'u8[524288]{0}', space=vmem, size = 0x80000, scoped, tag = 'input window, operand 2']
    #allocation10 [shape = 'u8[524288]{0}', space=vmem, size = 0x80000, scoped, tag = 'input window, operand 3']
    #allocation11 [shape = 'u8[524288]{0}', space=vmem, size = 0x80000, scoped, tag = 'input window, operand 4']
    #allocation12 [shape = 'u8[32768]{0}', space=vmem, size = 0x8000, scoped, tag = 'output window, operand 0, single buffered']
    %10 = vsyncpa [#allocation5], 0
    %11 = vsyncpa [#allocation8], 0
    %12 = vsyncpa [#allocation6], 0
    loop: start=0, step=1, limit=13
    $region2: #{llm_block_forward.3} parent=1 // loop_pre_header
      _
    $region3: #{llm_block_forward.3} parent=1 // loop_header
      %s14 = sphi 0, %s18
      %p15 = scmp.ge.s32.totalorder %s14, 13
      %s21 = sphi 0, %s33
      %s22 = sphi 0, %s29
      %s23 = sphi 0, %s21
      %s24 = sphi 0, %s22
      %s25 = sphi 0, %s23
      %s26 = sphi 0, %s24
      %s36 = sphi 0, %s38
      %s39 = sphi 0, %s36
      %s40 = sphi 0, %s39
      %s56 = sphi 0, %s40
      %s60 = sphi 0, %s60
      %s62 = sphi 0, %s60
      %s63 = sphi 0, %s62
      %s77 = sphi 0, %s63
      %s83 = sphi 0, %s85
      %s86 = sphi 0, %s83
      %s87 = sphi 0, %s86
      %s103 = sphi 0, %s87
      %s109 = sphi 0, %s111
      %s112 = sphi 0, %s109
      %s113 = sphi 0, %s112
      %s129 = sphi 0, %s113
      %s135 = sphi 0, %s137
      %s138 = sphi 0, %s135
      %s139 = sphi 0, %s138
      %s155 = sphi 0, %s139
      %s161 = sphi 0, %s163
      %s164 = sphi 0, %s161
      %s165 = sphi 0, %s164
      %s181 = sphi 0, %s165
    $region4: #{llm_block_forward.3} parent=1 // loop_header_branch
      %17 = sbr.rel (%p15) target = $region8
    $region5: #{llm_block_forward.3} parent=1 // loop_body
      %s19 = ssub.s32 %s14, 1
      %s20 = ssub.s32 %s14, 2
      %s27 = sadd.s32 1, %s22
      %p28 = scmp.ge.s32.totalorder %s27, 11
      %s29 = scalar_select %p28, 0, %s27
      %s30 = sadd.s32 1, %s21
      %s31 = scalar_select %p28, %s30, %s21
      %p32 = scmp.ge.s32.totalorder %s31, 1
      %s33 = scalar_select %p32, 0, %s31
      %s34 = ssub.s32 %s21, %s33
      %p35 = scmp.eq.s32.totalorder %s34, 0
      %s37 = sadd.s32 %s36, 1
      %s38 = scalar_select %p35, %s36, %s37
      %p41 = pneg %p35
      %p42 = scmp.eq.s32.totalorder %s14, 10
      %p43 = por %p41, %p42
      %p44 = scmp.ne.s32.totalorder %s36, %s39
      %p45 = scmp.eq.s32.totalorder %s14, 0
      %p46 = por %p44, %p45
      %p47 = scmp.ne.s32.totalorder %s36, %s39
      %p48 = scmp.eq.s32.totalorder %s19, 10
      %p49 = por %p47, %p48
      %p50 = scmp.ne.s32.totalorder %s39, %s40
      %p51 = scmp.eq.s32.totalorder %s19, 0
      %p52 = por %p50, %p51
      %p53 = scmp.ne.s32.totalorder %s39, %s40
      %p54 = scmp.eq.s32.totalorder %s20, 10
      %p55 = por %p53, %p54
      %p57 = scmp.ne.s32.totalorder %s40, %s56
      %p58 = scmp.eq.s32.totalorder %s20, 0
      %p59 = por %p57, %p58
      %s61 = sadd.s32 %s60, 1
      %p64 = scmp.eq.s32.totalorder %s14, 10
      %p65 = scmp.ne.s32.totalorder %s60, %s62
      %p66 = scmp.eq.s32.totalorder %s14, 0
      %p67 = por %p65, %p66
      %p68 = scmp.ne.s32.totalorder %s60, %s62
      %p69 = scmp.eq.s32.totalorder %s19, 10
      %p70 = por %p68, %p69
      %p71 = scmp.ne.s32.totalorder %s62, %s63
      %p72 = scmp.eq.s32.totalorder %s19, 0
      %p73 = por %p71, %p72
      %p74 = scmp.ne.s32.totalorder %s62, %s63
      %p75 = scmp.eq.s32.totalorder %s20, 10
      %p76 = por %p74, %p75
      %p78 = scmp.ne.s32.totalorder %s63, %s77
      %p79 = scmp.eq.s32.totalorder %s20, 0
      %p80 = por %p78, %p79
      %s81 = ssub.s32 %s22, %s29
      %p82 = scmp.eq.s32.totalorder %s81, 0
      %s84 = sadd.s32 %s83, 1
      %s85 = scalar_select %p82, %s83, %s84
      %p88 = pneg %p82
      %p89 = scmp.eq.s32.totalorder %s14, 10
      %p90 = por %p88, %p89
      %p91 = scmp.ne.s32.totalorder %s83, %s86
      %p92 = scmp.eq.s32.totalorder %s14, 0
      %p93 = por %p91, %p92
      %p94 = scmp.ne.s32.totalorder %s83, %s86
      %p95 = scmp.eq.s32.totalorder %s19, 10
      %p96 = por %p94, %p95
      %p97 = scmp.ne.s32.totalorder %s86, %s87
      %p98 = scmp.eq.s32.totalorder %s19, 0
      %p99 = por %p97, %p98
      %p100 = scmp.ne.s32.totalorder %s86, %s87
      %p101 = scmp.eq.s32.totalorder %s20, 10
      %p102 = por %p100, %p101
      %p104 = scmp.ne.s32.totalorder %s87, %s103
      %p105 = scmp.eq.s32.totalorder %s20, 0
      %p106 = por %p104, %p105
      %s107 = ssub.s32 %s22, %s29
      %p108 = scmp.eq.s32.totalorder %s107, 0
      %s110 = sadd.s32 %s109, 1
      %s111 = scalar_select %p108, %s109, %s110
      %p114 = pneg %p108
      %p115 = scmp.eq.s32.totalorder %s14, 10
      %p116 = por %p114, %p115
      %p117 = scmp.ne.s32.totalorder %s109, %s112
      %p118 = scmp.eq.s32.totalorder %s14, 0
      %p119 = por %p117, %p118
      %p120 = scmp.ne.s32.totalorder %s109, %s112
      %p121 = scmp.eq.s32.totalorder %s19, 10
      %p122 = por %p120, %p121
      %p123 = scmp.ne.s32.totalorder %s112, %s113
      %p124 = scmp.eq.s32.totalorder %s19, 0
      %p125 = por %p123, %p124
      %p126 = scmp.ne.s32.totalorder %s112, %s113
      %p127 = scmp.eq.s32.totalorder %s20, 10
      %p128 = por %p126, %p127
      %p130 = scmp.ne.s32.totalorder %s113, %s129
      %p131 = scmp.eq.s32.totalorder %s20, 0
      %p132 = por %p130, %p131
      %s133 = ssub.s32 %s22, %s29
      %p134 = scmp.eq.s32.totalorder %s133, 0
      %s136 = sadd.s32 %s135, 1
      %s137 = scalar_select %p134, %s135, %s136
      %p140 = pneg %p134
      %p141 = scmp.eq.s32.totalorder %s14, 10
      %p142 = por %p140, %p141
      %p143 = scmp.ne.s32.totalorder %s135, %s138
      %p144 = scmp.eq.s32.totalorder %s14, 0
      %p145 = por %p143, %p144
      %p146 = scmp.ne.s32.totalorder %s135, %s138
      %p147 = scmp.eq.s32.totalorder %s19, 10
      %p148 = por %p146, %p147
      %p149 = scmp.ne.s32.totalorder %s138, %s139
      %p150 = scmp.eq.s32.totalorder %s19, 0
      %p151 = por %p149, %p150
      %p152 = scmp.ne.s32.totalorder %s138, %s139
      %p153 = scmp.eq.s32.totalorder %s20, 10
      %p154 = por %p152, %p153
      %p156 = scmp.ne.s32.totalorder %s139, %s155
      %p157 = scmp.eq.s32.totalorder %s20, 0
      %p158 = por %p156, %p157
      %s159 = ssub.s32 %s21, %s33
      %p160 = scmp.eq.s32.totalorder %s159, 0
      %s162 = sadd.s32 %s161, 1
      %s163 = scalar_select %p160, %s161, %s162
      %p166 = pneg %p160
      %p167 = scmp.eq.s32.totalorder %s14, 10
      %p168 = por %p166, %p167
      %p169 = scmp.ne.s32.totalorder %s161, %s164
      %p170 = scmp.eq.s32.totalorder %s14, 0
      %p171 = por %p169, %p170
      %p172 = scmp.ne.s32.totalorder %s161, %s164
      %p173 = scmp.eq.s32.totalorder %s19, 10
      %p174 = por %p172, %p173
      %p175 = scmp.ne.s32.totalorder %s164, %s165
      %p176 = scmp.eq.s32.totalorder %s19, 0
      %p177 = por %p175, %p176
      %p178 = scmp.ne.s32.totalorder %s164, %s165
      %p179 = scmp.eq.s32.totalorder %s20, 10
      %p180 = por %p178, %p179
      %p182 = scmp.ne.s32.totalorder %s165, %s181
      %p183 = scmp.eq.s32.totalorder %s20, 0
      %p184 = por %p182, %p183
      %p185 = scmp.le.s32.totalorder 1, %s14
      %p186 = scmp.lt.s32.totalorder %s14, 12
      %p187 = pnand %p185, %p186
      %p188 = pneg %p187
      // Predicated region
      $region9: #{llm_block_forward.3} parent=5 // pred_check
        _
      $region10: #{llm_block_forward.3} parent=5 // pred_check_branch
        %190 = sbr.rel (%p187) target = $region12
      $region11: #{llm_block_forward.3} parent=5 // pred_region
        %s191 = ssub.s32 %s14, 1
        // Predicated region
        $region13: #{llm_block_forward.3} parent=11 // pred_check
          %p192 = pneg %p52
        $region14: #{llm_block_forward.3} parent=11 // pred_check_branch
          %194 = sbr.rel (%p192) target = $region16
        $region15: #{llm_block_forward.3} parent=11 // pred_region
          %s195 = smul.u32 2, %s23
          %s197 = ssub.s32 1024, 1024
          %198 = vsyncadd [#allocation5], %s197
          %s199 = smul.addr %s195, 4
          %s200 = smul.addr %s199, 128
          %s201 = scalar_lea.hbm %s0, %s200
          %s202 = sshll.u32 [#allocation4], 4
          %s203 = int_to_ptr.vmem [resolvable:$true] %s202
          %208 = dma.hbm_to_vmem [thread:$0]  %s201, 1024, %s203, [#allocation5], 512, 512, 32
        $region16: #{llm_block_forward.3} parent=11 // pred_fallthru
          _
        // Predicated region
        $region17: #{llm_block_forward.3} parent=11 // pred_check
          %p209 = pneg %p73
        $region18: #{llm_block_forward.3} parent=11 // pred_check_branch
          %211 = sbr.rel (%p209) target = $region20
        $region19: #{llm_block_forward.3} parent=11 // pred_region
          %s213 = ssub.s32 64, 64
          %214 = vsyncadd [#allocation8], %s213
          %s216 = sshll.u32 [#allocation7], 4
          %s217 = int_to_ptr.vmem [resolvable:$true] %s216
          %219 = dma.hbm_to_vmem [thread:$0]  %s1, 64, %s217, [#allocation8]
        $region20: #{llm_block_forward.3} parent=11 // pred_fallthru
          _
      $region12: #{llm_block_forward.3} parent=5 // pred_fallthru
        _
      %p220 = scmp.lt.s32.totalorder %s14, 11
      // Predicated region
      $region21: #{llm_block_forward.3} parent=5 // pred_check
        %p221 = pneg %p220
      $region22: #{llm_block_forward.3} parent=5 // pred_check_branch
        %223 = sbr.rel (%p221) target = $region24
      $region23: #{llm_block_forward.3} parent=5 // pred_region
        // Predicated region
        $region25: #{llm_block_forward.3} parent=23 // pred_check
          %p224 = pneg %p93
        $region26: #{llm_block_forward.3} parent=23 // pred_check_branch
          %226 = sbr.rel (%p224) target = $region28
        $region27: #{llm_block_forward.3} parent=23 // pred_region
          %s227 = sand.u32 %s14, 1
          %s228 = scalar_lea.sflag [#allocation5], %s227
          %s229 = sand.u32 %s83, 1
          %s230 = smul.addr %s229, 512
          %s231 = scalar_lea.vmem [#allocation9], %s230
          %s233 = ssub.s32 8192, 8192
          %234 = vsyncadd %s228, %s233
          %s235 = smul.addr %s22, 128
          %s236 = scalar_lea.hbm %s2, %s235
          %s237 = sshll.u32 %s231, 4
          %s238 = int_to_ptr.vmem [resolvable:$true] %s237
          %243 = dma.hbm_to_vmem [thread:$0]  %s236, 8192, %s238, %s228, 1408, 128, 8
        $region28: #{llm_block_forward.3} parent=23 // pred_fallthru
          _
        // Predicated region
        $region29: #{llm_block_forward.3} parent=23 // pred_check
          %p244 = pneg %p119
        $region30: #{llm_block_forward.3} parent=23 // pred_check_branch
          %246 = sbr.rel (%p244) target = $region32
        $region31: #{llm_block_forward.3} parent=23 // pred_region
          %s247 = sand.u32 %s14, 1
          %s248 = scalar_lea.sflag [#allocation5], %s247
          %s249 = sand.u32 %s109, 1
          %s250 = smul.addr %s249, 512
          %s251 = scalar_lea.vmem [#allocation10], %s250
          %s253 = ssub.s32 8192, 8192
          %254 = vsyncadd %s248, %s253
          %s255 = smul.addr %s22, 128
          %s256 = scalar_lea.hbm %s3, %s255
          %s257 = sshll.u32 %s251, 4
          %s258 = int_to_ptr.vmem [resolvable:$true] %s257
          %263 = dma.hbm_to_vmem [thread:$0]  %s256, 8192, %s258, %s248, 1408, 128, 8
        $region32: #{llm_block_forward.3} parent=23 // pred_fallthru
          _
        // Predicated region
        $region33: #{llm_block_forward.3} parent=23 // pred_check
          %p264 = pneg %p145
        $region34: #{llm_block_forward.3} parent=23 // pred_check_branch
          %266 = sbr.rel (%p264) target = $region36
        $region35: #{llm_block_forward.3} parent=23 // pred_region
          %s267 = sand.u32 %s14, 1
          %s268 = scalar_lea.sflag [#allocation5], %s267
          %s269 = sand.u32 %s135, 1
          %s270 = smul.addr %s269, 512
          %s271 = scalar_lea.vmem [#allocation11], %s270
          %s272 = smul.u32 16, %s22
          %s274 = ssub.s32 8192, 8192
          %275 = vsyncadd %s268, %s274
          %s276 = smul.addr %s272, 4
          %s277 = smul.addr %s276, 128
          %s278 = scalar_lea.hbm %s4, %s277
          %s279 = sshll.u32 %s271, 4
          %s280 = int_to_ptr.vmem [resolvable:$true] %s279
          %285 = dma.hbm_to_vmem [thread:$0]  %s278, 8192, %s280, %s268, 512, 512, 32
        $region36: #{llm_block_forward.3} parent=23 // pred_fallthru
          _
      $region24: #{llm_block_forward.3} parent=5 // pred_fallthru
        _
      %p286 = scmp.le.s32.totalorder 1, %s14
      %p287 = scmp.lt.s32.totalorder %s14, 12
      %p288 = pnand %p286, %p287
      %p289 = pneg %p288
      // Predicated region
      $region37: #{llm_block_forward.3} parent=5 // pred_check
        _
      $region38: #{llm_block_forward.3} parent=5 // pred_check_branch
        %291 = sbr.rel (%p288) target = $region40
      $region39: #{llm_block_forward.3} parent=5 // pred_region
        %s292 = ssub.s32 %s14, 1
        // Predicated region
        $region41: #{llm_block_forward.3} parent=39 // pred_check
          %p293 = pneg %p52
        $region42: #{llm_block_forward.3} parent=39 // pred_check_branch
          %295 = sbr.rel (%p293) target = $region44
        $region43: #{llm_block_forward.3} parent=39 // pred_region
          %296 = dma.done [#allocation5], 1024
        $region44: #{llm_block_forward.3} parent=39 // pred_fallthru
          _
        // Predicated region
        $region45: #{llm_block_forward.3} parent=39 // pred_check
          %p297 = pneg %p73
        $region46: #{llm_block_forward.3} parent=39 // pred_check_branch
          %299 = sbr.rel (%p297) target = $region48
        $region47: #{llm_block_forward.3} parent=39 // pred_region
          %300 = dma.done [#allocation8], 64
        $region48: #{llm_block_forward.3} parent=39 // pred_fallthru
          _
        %s301 = sand.u32 %s19, 1
        %s302 = scalar_lea.sflag [#allocation5], %s301
        %s303 = sand.u32 %s86, 1
        %s304 = smul.addr %s303, 512
        %s305 = scalar_lea.vmem [#allocation9], %s304
        // Predicated region
        $region49: #{llm_block_forward.3} parent=39 // pred_check
          %p306 = pneg %p99
        $region50: #{llm_block_forward.3} parent=39 // pred_check_branch
          %308 = sbr.rel (%p306) target = $region52
        $region51: #{llm_block_forward.3} parent=39 // pred_region
          %309 = dma.done %s302, 8192
        $region52: #{llm_block_forward.3} parent=39 // pred_fallthru
          _
        %s310 = sand.u32 %s19, 1
        %s311 = scalar_lea.sflag [#allocation5], %s310
        %s312 = sand.u32 %s112, 1
        %s313 = smul.addr %s312, 512
        %s314 = scalar_lea.vmem [#allocation10], %s313
        // Predicated region
        $region53: #{llm_block_forward.3} parent=39 // pred_check
          %p315 = pneg %p125
        $region54: #{llm_block_forward.3} parent=39 // pred_check_branch
          %317 = sbr.rel (%p315) target = $region56
        $region55: #{llm_block_forward.3} parent=39 // pred_region
          %318 = dma.done %s311, 8192
        $region56: #{llm_block_forward.3} parent=39 // pred_fallthru
          _
        %s319 = sand.u32 %s19, 1
        %s320 = scalar_lea.sflag [#allocation5], %s319
        %s321 = sand.u32 %s138, 1
        %s322 = smul.addr %s321, 512
        %s323 = scalar_lea.vmem [#allocation11], %s322
        // Predicated region
        $region57: #{llm_block_forward.3} parent=39 // pred_check
          %p324 = pneg %p151
        $region58: #{llm_block_forward.3} parent=39 // pred_check_branch
          %326 = sbr.rel (%p324) target = $region60
        $region59: #{llm_block_forward.3} parent=39 // pred_region
          %327 = dma.done %s320, 8192
        $region60: #{llm_block_forward.3} parent=39 // pred_fallthru
          _
        %p328 = pneg %p52
        %p329 = pneg %p49
        %p330 = pneg %p73
        %p331 = pneg %p70
        %s332 = sand.u32 %s19, 1
        %s333 = scalar_lea.sflag [#allocation5], %s332
        %s334 = sand.u32 %s86, 1
        %s335 = smul.addr %s334, 512
        %s336 = scalar_lea.vmem [#allocation9], %s335
        %p337 = pneg %p99
        %p338 = pneg %p96
        %s339 = sand.u32 %s19, 1
        %s340 = scalar_lea.sflag [#allocation5], %s339
        %s341 = sand.u32 %s112, 1
        %s342 = smul.addr %s341, 512
        %s343 = scalar_lea.vmem [#allocation10], %s342
        %p344 = pneg %p125
        %p345 = pneg %p122
        %s346 = sand.u32 %s19, 1
        %s347 = scalar_lea.sflag [#allocation5], %s346
        %s348 = sand.u32 %s138, 1
        %s349 = smul.addr %s348, 512
        %s350 = scalar_lea.vmem [#allocation11], %s349
        %p351 = pneg %p151
        %p352 = pneg %p148
        %p353 = pneg %p177
        %p354 = pneg %p174
        %s355 = smul.u32 2, %s23
        %s356 = smul.u32 16, %s24
        %s357 = smul.u32 2, %s23
        %p358 = scmp.eq.s32.totalorder %s24, 0
        // Predicated region
        $region61: #{llm_block_forward.3} parent=39 // pred_check
          %p359 = pneg %p358
        $region62: #{llm_block_forward.3} parent=39 // pred_check_branch
          %361 = sbr.rel (%p359) target = $region64
        $region63: #{llm_block_forward.3} parent=39 // pred_region
          %v362 = vld [vmem:[#allocation4] sm:$0xff]
          %v363 = vld [vmem:[#allocation4 + $0x8] sm:$0xff]
          %v364 = vld [vmem:[#allocation4 + $0x10] sm:$0xff]
          %v365 = vld [vmem:[#allocation4 + $0x18] sm:$0xff]
          %v366 = vld [vmem:[#allocation4 + $0x20] sm:$0xff]
          %v367 = vld [vmem:[#allocation4 + $0x28] sm:$0xff]
          %v368 = vld [vmem:[#allocation4 + $0x30] sm:$0xff]
          %v369 = vld [vmem:[#allocation4 + $0x38] sm:$0xff]
          %v370 = vmul.f32 %v362, %v362
          %v371 = vmul.f32 %v363, %v363
          %v372 = vmul.f32 %v364, %v364
          %v373 = vmul.f32 %v365, %v365
          %v374 = vmul.f32 %v366, %v366
          %v375 = vmul.f32 %v367, %v367
          %v376 = vmul.f32 %v368, %v368
          %v377 = vmul.f32 %v369, %v369
          %v378 = vadd.f32 %v370, %v371
          %v379 = vadd.f32 %v378, %v372
          %v380 = vadd.f32 %v379, %v373
          %381 = vadd.xlane.f32.xlu0 %v380
          %v382 = vpop.xlane.xlu0 %381
          %v383 = vadd.f32 %v374, %v375
          %v384 = vadd.f32 %v383, %v376
          %v385 = vadd.f32 %v384, %v377
          %386 = vadd.xlane.f32.xlu0 %v385
          %v387 = vpop.xlane.xlu0 %386
          %v388 = vrcp.pop 512.0
          %v389 = vmul.f32 %v382, %v388
          %v390 = vmul.f32 %v387, %v388
          %v391 = vadd.f32 %v389, 1e-05
          %v392 = vadd.f32 %v390, 1e-05
          %v393 = vrsqrt.pop %v391
          %v394 = vrsqrt.pop %v392
          %v395 = vmul.f32 %v362, %v393
          %v396 = vmul.f32 %v363, %v393
          %v397 = vmul.f32 %v364, %v393
          %v398 = vmul.f32 %v365, %v393
          %v399 = vmul.f32 %v366, %v394
          %v400 = vmul.f32 %v367, %v394
          %v401 = vmul.f32 %v368, %v394
          %v402 = vmul.f32 %v369, %v394
          %v403 = vld [vmem:[#allocation7] sm:$0xf]
          %v405 = vlaneseq
          %v406 = vshrl.u32 %v405, 7
          %v407 = vsub.s32 0, %v406
          %v408 = vrot.slane %v403, %v407
          %v409 = vlaneseq
          %v410 = vshrl.u32 %v409, 7
          %v411 = vsub.s32 1, %v410
          %v412 = vrot.slane %v403, %v411
          %v413 = vlaneseq
          %v414 = vshrl.u32 %v413, 7
          %v415 = vsub.s32 2, %v414
          %v416 = vrot.slane %v403, %v415
          %v417 = vlaneseq
          %v418 = vshrl.u32 %v417, 7
          %v419 = vsub.s32 3, %v418
          %v420 = vrot.slane %v403, %v419
          %v425 = vmul.f32 %v395, %v408
          %v426 = vmul.f32 %v396, %v412
          %v427 = vmul.f32 %v397, %v416
          %v428 = vmul.f32 %v398, %v420
          %v429 = vmul.f32 %v399, %v408
          %v430 = vmul.f32 %v400, %v412
          %v431 = vmul.f32 %v401, %v416
          %v432 = vmul.f32 %v402, %v420
          %433 = vst [vmem:[#allocation2] sm:$0xff] %v425
          %434 = vst [vmem:[#allocation2 + $0x8] sm:$0xff] %v426
          %435 = vst [vmem:[#allocation2 + $0x10] sm:$0xff] %v427
          %436 = vst [vmem:[#allocation2 + $0x18] sm:$0xff] %v428
          %437 = vst [vmem:[#allocation2 + $0x20] sm:$0xff] %v429
          %438 = vst [vmem:[#allocation2 + $0x28] sm:$0xff] %v430
          %439 = vst [vmem:[#allocation2 + $0x30] sm:$0xff] %v431
          %440 = vst [vmem:[#allocation2 + $0x38] sm:$0xff] %v432
          %441 = vst [vmem:[#allocation3] sm:$0xff] %v362
          %442 = vst [vmem:[#allocation3 + $0x8] sm:$0xff] %v363
          %443 = vst [vmem:[#allocation3 + $0x10] sm:$0xff] %v364
          %444 = vst [vmem:[#allocation3 + $0x18] sm:$0xff] %v365
          %445 = vst [vmem:[#allocation3 + $0x20] sm:$0xff] %v366
          %446 = vst [vmem:[#allocation3 + $0x28] sm:$0xff] %v367
          %447 = vst [vmem:[#allocation3 + $0x30] sm:$0xff] %v368
          %448 = vst [vmem:[#allocation3 + $0x38] sm:$0xff] %v369
        $region64: #{llm_block_forward.3} parent=39 // pred_fallthru
          _
        %v449 = vld [vmem:[#allocation2] sm:$0xff]
        %v450 = vld [vmem:[#allocation2 + $0x8] sm:$0xff]
        %v451 = vld [vmem:[#allocation2 + $0x10] sm:$0xff]
        %v452 = vld [vmem:[#allocation2 + $0x18] sm:$0xff]
        %v453 = vld [vmem:[#allocation2 + $0x20] sm:$0xff]
        %v454 = vld [vmem:[#allocation2 + $0x28] sm:$0xff]
        %v455 = vld [vmem:[#allocation2 + $0x30] sm:$0xff]
        %v456 = vld [vmem:[#allocation2 + $0x38] sm:$0xff]
        %v457 = vld [vmem:[%s305] sm:$0xff]
        %v458 = vld [vmem:[%s305 + $0x8] sm:$0xff]
        %v459 = vld [vmem:[%s305 + $0x10] sm:$0xff]
        %v460 = vld [vmem:[%s305 + $0x18] sm:$0xff]
        %v461 = vld [vmem:[%s305 + $0x20] sm:$0xff]
        %v462 = vld [vmem:[%s305 + $0x28] sm:$0xff]
        %v463 = vld [vmem:[%s305 + $0x30] sm:$0xff]
        %v464 = vld [vmem:[%s305 + $0x38] sm:$0xff]
        %v465 = vld [vmem:[%s305 + $0x40] sm:$0xff]
        %v466 = vld [vmem:[%s305 + $0x48] sm:$0xff]
        %v467 = vld [vmem:[%s305 + $0x50] sm:$0xff]
        %v468 = vld [vmem:[%s305 + $0x58] sm:$0xff]
        %v469 = vld [vmem:[%s305 + $0x60] sm:$0xff]
        %v470 = vld [vmem:[%s305 + $0x68] sm:$0xff]
        %v471 = vld [vmem:[%s305 + $0x70] sm:$0xff]
        %v472 = vld [vmem:[%s305 + $0x78] sm:$0xff]
        %v473 = vld [vmem:[%s305 + $0x80] sm:$0xff]
        %v474 = vld [vmem:[%s305 + $0x88] sm:$0xff]
        %v475 = vld [vmem:[%s305 + $0x90] sm:$0xff]
        %v476 = vld [vmem:[%s305 + $0x98] sm:$0xff]
        %v477 = vld [vmem:[%s305 + $0xa0] sm:$0xff]
        %v478 = vld [vmem:[%s305 + $0xa8] sm:$0xff]
        %v479 = vld [vmem:[%s305 + $0xb0] sm:$0xff]
        %v480 = vld [vmem:[%s305 + $0xb8] sm:$0xff]
        %v481 = vld [vmem:[%s305 + $0xc0] sm:$0xff]
        %v482 = vld [vmem:[%s305 + $0xc8] sm:$0xff]
        %v483 = vld [vmem:[%s305 + $0xd0] sm:$0xff]
        %v484 = vld [vmem:[%s305 + $0xd8] sm:$0xff]
        %v485 = vld [vmem:[%s305 + $0xe0] sm:$0xff]
        %v486 = vld [vmem:[%s305 + $0xe8] sm:$0xff]
        %v487 = vld [vmem:[%s305 + $0xf0] sm:$0xff]
        %v488 = vld [vmem:[%s305 + $0xf8] sm:$0xff]
        %v489 = vld [vmem:[%s305 + $0x100] sm:$0xff]
        %v490 = vld [vmem:[%s305 + $0x108] sm:$0xff]
        %v491 = vld [vmem:[%s305 + $0x110] sm:$0xff]
        %v492 = vld [vmem:[%s305 + $0x118] sm:$0xff]
        %v493 = vld [vmem:[%s305 + $0x120] sm:$0xff]
        %v494 = vld [vmem:[%s305 + $0x128] sm:$0xff]
        %v495 = vld [vmem:[%s305 + $0x130] sm:$0xff]
        %v496 = vld [vmem:[%s305 + $0x138] sm:$0xff]
        %v497 = vld [vmem:[%s305 + $0x140] sm:$0xff]
        %v498 = vld [vmem:[%s305 + $0x148] sm:$0xff]
        %v499 = vld [vmem:[%s305 + $0x150] sm:$0xff]
        %v500 = vld [vmem:[%s305 + $0x158] sm:$0xff]
        %v501 = vld [vmem:[%s305 + $0x160] sm:$0xff]
        %v502 = vld [vmem:[%s305 + $0x168] sm:$0xff]
        %v503 = vld [vmem:[%s305 + $0x170] sm:$0xff]
        %v504 = vld [vmem:[%s305 + $0x178] sm:$0xff]
        %v505 = vld [vmem:[%s305 + $0x180] sm:$0xff]
        %v506 = vld [vmem:[%s305 + $0x188] sm:$0xff]
        %v507 = vld [vmem:[%s305 + $0x190] sm:$0xff]
        %v508 = vld [vmem:[%s305 + $0x198] sm:$0xff]
        %v509 = vld [vmem:[%s305 + $0x1a0] sm:$0xff]
        %v510 = vld [vmem:[%s305 + $0x1a8] sm:$0xff]
        %v511 = vld [vmem:[%s305 + $0x1b0] sm:$0xff]
        %v512 = vld [vmem:[%s305 + $0x1b8] sm:$0xff]
        %v513 = vld [vmem:[%s305 + $0x1c0] sm:$0xff]
        %v514 = vld [vmem:[%s305 + $0x1c8] sm:$0xff]
        %v515 = vld [vmem:[%s305 + $0x1d0] sm:$0xff]
        %v516 = vld [vmem:[%s305 + $0x1d8] sm:$0xff]
        %v517 = vld [vmem:[%s305 + $0x1e0] sm:$0xff]
        %v518 = vld [vmem:[%s305 + $0x1e8] sm:$0xff]
        %v519 = vld [vmem:[%s305 + $0x1f0] sm:$0xff]
        %v520 = vld [vmem:[%s305 + $0x1f8] sm:$0xff]
        %521 = vmatprep.subr.mxu0 0.0
        %522 = vmatpush1.msra.mxu0 %v457
        %523 = vmatprep.subr.mxu0 0.0
        %524 = vmatpush1.msra.mxu0 %v458
        %525 = vmatprep.subr.mxu0 0.0
        %526 = vmatpush1.msra.mxu0 %v459
        %527 = vmatprep.subr.mxu0 0.0
        %528 = vmatpush1.msra.mxu0 %v460
        %529 = vmatprep.subr.mxu0 0.0
        %530 = vmatpush1.msra.mxu0 %v461
        %531 = vmatprep.subr.mxu0 0.0
        %532 = vmatpush1.msra.mxu0 %v462
        %533 = vmatprep.subr.mxu0 0.0
        %534 = vmatpush1.msra.mxu0 %v463
        %535 = vmatprep.subr.mxu0 0.0
        %536 = vmatpush1.msra.mxu0 %v464
        %537 = vmatprep.subr.mxu0 0.0
        %538 = vmatpush1.msra.mxu0 %v465
        %539 = vmatprep.subr.mxu0 0.0
        %540 = vmatpush1.msra.mxu0 %v466
        %541 = vmatprep.subr.mxu0 0.0
        %542 = vmatpush1.msra.mxu0 %v467
        %543 = vmatprep.subr.mxu0 0.0
        %544 = vmatpush1.msra.mxu0 %v468
        %545 = vmatprep.subr.mxu0 0.0
        %546 = vmatpush1.msra.mxu0 %v469
        %547 = vmatprep.subr.mxu0 0.0
        %548 = vmatpush1.msra.mxu0 %v470
        %549 = vmatprep.subr.mxu0 0.0
        %550 = vmatpush1.msra.mxu0 %v471
        %551 = vmatprep.subr.mxu0 0.0
        %552 = vmatpush1.msra.mxu0 %v472
        %553 = vmatprep.subr.mxu0 0.0
        %554 = vmatpush1.msra.mxu0 %v473
        %555 = vmatprep.subr.mxu0 0.0
        %556 = vmatpush1.msra.mxu0 %v474
        %557 = vmatprep.subr.mxu0 0.0
        %558 = vmatpush1.msra.mxu0 %v475
        %559 = vmatprep.subr.mxu0 0.0
        %560 = vmatpush1.msra.mxu0 %v476
        %561 = vmatprep.subr.mxu0 0.0
        %562 = vmatpush1.msra.mxu0 %v477
        %563 = vmatprep.subr.mxu0 0.0
        %564 = vmatpush1.msra.mxu0 %v478
        %565 = vmatprep.subr.mxu0 0.0
        %566 = vmatpush1.msra.mxu0 %v479
        %567 = vmatprep.subr.mxu0 0.0
        %568 = vmatpush1.msra.mxu0 %v480
        %569 = vmatprep.subr.mxu0 0.0
        %570 = vmatpush1.msra.mxu0 %v481
        %571 = vmatprep.subr.mxu0 0.0
        %572 = vmatpush1.msra.mxu0 %v482
        %573 = vmatprep.subr.mxu0 0.0
        %574 = vmatpush1.msra.mxu0 %v483
        %575 = vmatprep.subr.mxu0 0.0
        %576 = vmatpush1.msra.mxu0 %v484
        %577 = vmatprep.subr.mxu0 0.0
        %578 = vmatpush1.msra.mxu0 %v485
        %579 = vmatprep.subr.mxu0 0.0
        %580 = vmatpush1.msra.mxu0 %v486
        %581 = vmatprep.subr.mxu0 0.0
        %582 = vmatpush1.msra.mxu0 %v487
        %583 = vmatprep.subr.mxu0 0.0
        %584 = vmatpush1.msra.mxu0 %v488
        %585 = vmatprep.mubr.f32.mxu0 %v450
        %586 = vmatmul.mubr.f32.gmra.mrb[0].mxu0 %v449
        %v587 = vpop.f32.mrb[0].mxu0
        %v588 = vadd.f32 0.0, %v587
        %v589 = vpop.f32.mrb[0].mxu0
        %590 = vmatprep.mubr.f32.mxu0 %v454
        %591 = vmatmul.mubr.f32.gmra.mrb[0].mxu0 %v453
        %v592 = vpop.f32.mrb[0].mxu0
        %v593 = vadd.f32 0.0, %v592
        %v594 = vpop.f32.mrb[0].mxu0
        %595 = vdwg.mxu0
        %596 = vmatprep.subr.mxu0 0.0
        %597 = vmatpush1.msra.mxu0 %v489
        %598 = vmatprep.subr.mxu0 0.0
        %599 = vmatpush1.msra.mxu0 %v490
        %600 = vmatprep.subr.mxu0 0.0
        %601 = vmatpush1.msra.mxu0 %v491
        %602 = vmatprep.subr.mxu0 0.0
        %603 = vmatpush1.msra.mxu0 %v492
        %604 = vmatprep.subr.mxu0 0.0
        %605 = vmatpush1.msra.mxu0 %v493
        %606 = vmatprep.subr.mxu0 0.0
        %607 = vmatpush1.msra.mxu0 %v494
        %608 = vmatprep.subr.mxu0 0.0
        %609 = vmatpush1.msra.mxu0 %v495
        %610 = vmatprep.subr.mxu0 0.0
        %611 = vmatpush1.msra.mxu0 %v496
        %612 = vmatprep.subr.mxu0 0.0
        %613 = vmatpush1.msra.mxu0 %v497
        %614 = vmatprep.subr.mxu0 0.0
        %615 = vmatpush1.msra.mxu0 %v498
        %616 = vmatprep.subr.mxu0 0.0
        %617 = vmatpush1.msra.mxu0 %v499
        %618 = vmatprep.subr.mxu0 0.0
        %619 = vmatpush1.msra.mxu0 %v500
        %620 = vmatprep.subr.mxu0 0.0
        %621 = vmatpush1.msra.mxu0 %v501
        %622 = vmatprep.subr.mxu0 0.0
        %623 = vmatpush1.msra.mxu0 %v502
        %624 = vmatprep.subr.mxu0 0.0
        %625 = vmatpush1.msra.mxu0 %v503
        %626 = vmatprep.subr.mxu0 0.0
        %627 = vmatpush1.msra.mxu0 %v504
        %628 = vmatprep.subr.mxu0 0.0
        %629 = vmatpush1.msra.mxu0 %v505
        %630 = vmatprep.subr.mxu0 0.0
        %631 = vmatpush1.msra.mxu0 %v506
        %632 = vmatprep.subr.mxu0 0.0
        %633 = vmatpush1.msra.mxu0 %v507
        %634 = vmatprep.subr.mxu0 0.0
        %635 = vmatpush1.msra.mxu0 %v508
        %636 = vmatprep.subr.mxu0 0.0
        %637 = vmatpush1.msra.mxu0 %v509
        %638 = vmatprep.subr.mxu0 0.0
        %639 = vmatpush1.msra.mxu0 %v510
        %640 = vmatprep.subr.mxu0 0.0
        %641 = vmatpush1.msra.mxu0 %v511
        %642 = vmatprep.subr.mxu0 0.0
        %643 = vmatpush1.msra.mxu0 %v512
        %644 = vmatprep.subr.mxu0 0.0
        %645 = vmatpush1.msra.mxu0 %v513
        %646 = vmatprep.subr.mxu0 0.0
        %647 = vmatpush1.msra.mxu0 %v514
        %648 = vmatprep.subr.mxu0 0.0
        %649 = vmatpush1.msra.mxu0 %v515
        %650 = vmatprep.subr.mxu0 0.0
        %651 = vmatpush1.msra.mxu0 %v516
        %652 = vmatprep.subr.mxu0 0.0
        %653 = vmatpush1.msra.mxu0 %v517
        %654 = vmatprep.subr.mxu0 0.0
        %655 = vmatpush1.msra.mxu0 %v518
        %656 = vmatprep.subr.mxu0 0.0
        %657 = vmatpush1.msra.mxu0 %v519
        %658 = vmatprep.subr.mxu0 0.0
        %659 = vmatpush1.msra.mxu0 %v520
        %660 = vmatprep.mubr.f32.mxu0 %v452
        %661 = vmatmul.mubr.f32.gmra.mrb[0].mxu0 %v451
        %v662 = vpop.f32.mrb[0].mxu0
        %v663 = vadd.f32 %v588, %v662
        %v664 = vpop.f32.mrb[0].mxu0
        %665 = vmatprep.mubr.f32.mxu0 %v456
        %666 = vmatmul.mubr.f32.gmra.mrb[0].mxu0 %v455
        %v667 = vpop.f32.mrb[0].mxu0
        %v668 = vadd.f32 %v593, %v667
        %v669 = vpop.f32.mrb[0].mxu0
        %670 = vdwg.mxu0
        %v671 = vld [vmem:[%s314] sm:$0xff]
        %v672 = vld [vmem:[%s314 + $0x8] sm:$0xff]
        %v673 = vld [vmem:[%s314 + $0x10] sm:$0xff]
        %v674 = vld [vmem:[%s314 + $0x18] sm:$0xff]
        %v675 = vld [vmem:[%s314 + $0x20] sm:$0xff]
        %v676 = vld [vmem:[%s314 + $0x28] sm:$0xff]
        %v677 = vld [vmem:[%s314 + $0x30] sm:$0xff]
        %v678 = vld [vmem:[%s314 + $0x38] sm:$0xff]
        %v679 = vld [vmem:[%s314 + $0x40] sm:$0xff]
        %v680 = vld [vmem:[%s314 + $0x48] sm:$0xff]
        %v681 = vld [vmem:[%s314 + $0x50] sm:$0xff]
        %v682 = vld [vmem:[%s314 + $0x58] sm:$0xff]
        %v683 = vld [vmem:[%s314 + $0x60] sm:$0xff]
        %v684 = vld [vmem:[%s314 + $0x68] sm:$0xff]
        %v685 = vld [vmem:[%s314 + $0x70] sm:$0xff]
        %v686 = vld [vmem:[%s314 + $0x78] sm:$0xff]
        %v687 = vld [vmem:[%s314 + $0x80] sm:$0xff]
        %v688 = vld [vmem:[%s314 + $0x88] sm:$0xff]
        %v689 = vld [vmem:[%s314 + $0x90] sm:$0xff]
        %v690 = vld [vmem:[%s314 + $0x98] sm:$0xff]
        %v691 = vld [vmem:[%s314 + $0xa0] sm:$0xff]
        %v692 = vld [vmem:[%s314 + $0xa8] sm:$0xff]
        %v693 = vld [vmem:[%s314 + $0xb0] sm:$0xff]
        %v694 = vld [vmem:[%s314 + $0xb8] sm:$0xff]
        %v695 = vld [vmem:[%s314 + $0xc0] sm:$0xff]
        %v696 = vld [vmem:[%s314 + $0xc8] sm:$0xff]
        %v697 = vld [vmem:[%s314 + $0xd0] sm:$0xff]
        %v698 = vld [vmem:[%s314 + $0xd8] sm:$0xff]
        %v699 = vld [vmem:[%s314 + $0xe0] sm:$0xff]
        %v700 = vld [vmem:[%s314 + $0xe8] sm:$0xff]
        %v701 = vld [vmem:[%s314 + $0xf0] sm:$0xff]
        %v702 = vld [vmem:[%s314 + $0xf8] sm:$0xff]
        %v703 = vld [vmem:[%s314 + $0x100] sm:$0xff]
        %v704 = vld [vmem:[%s314 + $0x108] sm:$0xff]
        %v705 = vld [vmem:[%s314 + $0x110] sm:$0xff]
        %v706 = vld [vmem:[%s314 + $0x118] sm:$0xff]
        %v707 = vld [vmem:[%s314 + $0x120] sm:$0xff]
        %v708 = vld [vmem:[%s314 + $0x128] sm:$0xff]
        %v709 = vld [vmem:[%s314 + $0x130] sm:$0xff]
        %v710 = vld [vmem:[%s314 + $0x138] sm:$0xff]
        %v711 = vld [vmem:[%s314 + $0x140] sm:$0xff]
        %v712 = vld [vmem:[%s314 + $0x148] sm:$0xff]
        %v713 = vld [vmem:[%s314 + $0x150] sm:$0xff]
        %v714 = vld [vmem:[%s314 + $0x158] sm:$0xff]
        %v715 = vld [vmem:[%s314 + $0x160] sm:$0xff]
        %v716 = vld [vmem:[%s314 + $0x168] sm:$0xff]
        %v717 = vld [vmem:[%s314 + $0x170] sm:$0xff]
        %v718 = vld [vmem:[%s314 + $0x178] sm:$0xff]
        %v719 = vld [vmem:[%s314 + $0x180] sm:$0xff]
        %v720 = vld [vmem:[%s314 + $0x188] sm:$0xff]
        %v721 = vld [vmem:[%s314 + $0x190] sm:$0xff]
        %v722 = vld [vmem:[%s314 + $0x198] sm:$0xff]
        %v723 = vld [vmem:[%s314 + $0x1a0] sm:$0xff]
        %v724 = vld [vmem:[%s314 + $0x1a8] sm:$0xff]
        %v725 = vld [vmem:[%s314 + $0x1b0] sm:$0xff]
        %v726 = vld [vmem:[%s314 + $0x1b8] sm:$0xff]
        %v727 = vld [vmem:[%s314 + $0x1c0] sm:$0xff]
        %v728 = vld [vmem:[%s314 + $0x1c8] sm:$0xff]
        %v729 = vld [vmem:[%s314 + $0x1d0] sm:$0xff]
        %v730 = vld [vmem:[%s314 + $0x1d8] sm:$0xff]
        %v731 = vld [vmem:[%s314 + $0x1e0] sm:$0xff]
        %v732 = vld [vmem:[%s314 + $0x1e8] sm:$0xff]
        %v733 = vld [vmem:[%s314 + $0x1f0] sm:$0xff]
        %v734 = vld [vmem:[%s314 + $0x1f8] sm:$0xff]
        %735 = vmatprep.subr.mxu0 0.0
        %736 = vmatpush1.msra.mxu0 %v671
        %737 = vmatprep.subr.mxu0 0.0
        %738 = vmatpush1.msra.mxu0 %v672
        %739 = vmatprep.subr.mxu0 0.0
        %740 = vmatpush1.msra.mxu0 %v673
        %741 = vmatprep.subr.mxu0 0.0
        %742 = vmatpush1.msra.mxu0 %v674
        %743 = vmatprep.subr.mxu0 0.0
        %744 = vmatpush1.msra.mxu0 %v675
        %745 = vmatprep.subr.mxu0 0.0
        %746 = vmatpush1.msra.mxu0 %v676
        %747 = vmatprep.subr.mxu0 0.0
        %748 = vmatpush1.msra.mxu0 %v677
        %749 = vmatprep.subr.mxu0 0.0
        %750 = vmatpush1.msra.mxu0 %v678
        %751 = vmatprep.subr.mxu0 0.0
        %752 = vmatpush1.msra.mxu0 %v679
        %753 = vmatprep.subr.mxu0 0.0
        %754 = vmatpush1.msra.mxu0 %v680
        %755 = vmatprep.subr.mxu0 0.0
        %756 = vmatpush1.msra.mxu0 %v681
        %757 = vmatprep.subr.mxu0 0.0
        %758 = vmatpush1.msra.mxu0 %v682
        %759 = vmatprep.subr.mxu0 0.0
        %760 = vmatpush1.msra.mxu0 %v683
        %761 = vmatprep.subr.mxu0 0.0
        %762 = vmatpush1.msra.mxu0 %v684
        %763 = vmatprep.subr.mxu0 0.0
        %764 = vmatpush1.msra.mxu0 %v685
        %765 = vmatprep.subr.mxu0 0.0
        %766 = vmatpush1.msra.mxu0 %v686
        %767 = vmatprep.subr.mxu0 0.0
        %768 = vmatpush1.msra.mxu0 %v687
        %769 = vmatprep.subr.mxu0 0.0
        %770 = vmatpush1.msra.mxu0 %v688
        %771 = vmatprep.subr.mxu0 0.0
        %772 = vmatpush1.msra.mxu0 %v689
        %773 = vmatprep.subr.mxu0 0.0
        %774 = vmatpush1.msra.mxu0 %v690
        %775 = vmatprep.subr.mxu0 0.0
        %776 = vmatpush1.msra.mxu0 %v691
        %777 = vmatprep.subr.mxu0 0.0
        %778 = vmatpush1.msra.mxu0 %v692
        %779 = vmatprep.subr.mxu0 0.0
        %780 = vmatpush1.msra.mxu0 %v693
        %781 = vmatprep.subr.mxu0 0.0
        %782 = vmatpush1.msra.mxu0 %v694
        %783 = vmatprep.subr.mxu0 0.0
        %784 = vmatpush1.msra.mxu0 %v695
        %785 = vmatprep.subr.mxu0 0.0
        %786 = vmatpush1.msra.mxu0 %v696
        %787 = vmatprep.subr.mxu0 0.0
        %788 = vmatpush1.msra.mxu0 %v697
        %789 = vmatprep.subr.mxu0 0.0
        %790 = vmatpush1.msra.mxu0 %v698
        %791 = vmatprep.subr.mxu0 0.0
        %792 = vmatpush1.msra.mxu0 %v699
        %793 = vmatprep.subr.mxu0 0.0
        %794 = vmatpush1.msra.mxu0 %v700
        %795 = vmatprep.subr.mxu0 0.0
        %796 = vmatpush1.msra.mxu0 %v701
        %797 = vmatprep.subr.mxu0 0.0
        %798 = vmatpush1.msra.mxu0 %v702
        %799 = vmatprep.mubr.f32.mxu0 %v450
        %800 = vmatmul.mubr.f32.gmra.mrb[0].mxu0 %v449
        %v801 = vpop.f32.mrb[0].mxu0
        %v802 = vadd.f32 0.0, %v801
        %v803 = vpop.f32.mrb[0].mxu0
        %804 = vmatprep.mubr.f32.mxu0 %v454
        %805 = vmatmul.mubr.f32.gmra.mrb[0].mxu0 %v453
        %v806 = vpop.f32.mrb[0].mxu0
        %v807 = vadd.f32 0.0, %v806
        %v808 = vpop.f32.mrb[0].mxu0
        %809 = vdwg.mxu0
        %810 = vmatprep.subr.mxu0 0.0
        %811 = vmatpush1.msra.mxu0 %v703
        %812 = vmatprep.subr.mxu0 0.0
        %813 = vmatpush1.msra.mxu0 %v704
        %814 = vmatprep.subr.mxu0 0.0
        %815 = vmatpush1.msra.mxu0 %v705
        %816 = vmatprep.subr.mxu0 0.0
        %817 = vmatpush1.msra.mxu0 %v706
        %818 = vmatprep.subr.mxu0 0.0
        %819 = vmatpush1.msra.mxu0 %v707
        %820 = vmatprep.subr.mxu0 0.0
        %821 = vmatpush1.msra.mxu0 %v708
        %822 = vmatprep.subr.mxu0 0.0
        %823 = vmatpush1.msra.mxu0 %v709
        %824 = vmatprep.subr.mxu0 0.0
        %825 = vmatpush1.msra.mxu0 %v710
        %826 = vmatprep.subr.mxu0 0.0
        %827 = vmatpush1.msra.mxu0 %v711
        %828 = vmatprep.subr.mxu0 0.0
        %829 = vmatpush1.msra.mxu0 %v712
        %830 = vmatprep.subr.mxu0 0.0
        %831 = vmatpush1.msra.mxu0 %v713
        %832 = vmatprep.subr.mxu0 0.0
        %833 = vmatpush1.msra.mxu0 %v714
        %834 = vmatprep.subr.mxu0 0.0
        %835 = vmatpush1.msra.mxu0 %v715
        %836 = vmatprep.subr.mxu0 0.0
        %837 = vmatpush1.msra.mxu0 %v716
        %838 = vmatprep.subr.mxu0 0.0
        %839 = vmatpush1.msra.mxu0 %v717
        %840 = vmatprep.subr.mxu0 0.0
        %841 = vmatpush1.msra.mxu0 %v718
        %842 = vmatprep.subr.mxu0 0.0
        %843 = vmatpush1.msra.mxu0 %v719
        %844 = vmatprep.subr.mxu0 0.0
        %845 = vmatpush1.msra.mxu0 %v720
        %846 = vmatprep.subr.mxu0 0.0
        %847 = vmatpush1.msra.mxu0 %v721
        %848 = vmatprep.subr.mxu0 0.0
        %849 = vmatpush1.msra.mxu0 %v722
        %850 = vmatprep.subr.mxu0 0.0
        %851 = vmatpush1.msra.mxu0 %v723
        %852 = vmatprep.subr.mxu0 0.0
        %853 = vmatpush1.msra.mxu0 %v724
        %854 = vmatprep.subr.mxu0 0.0
        %855 = vmatpush1.msra.mxu0 %v725
        %856 = vmatprep.subr.mxu0 0.0
        %857 = vmatpush1.msra.mxu0 %v726
        %858 = vmatprep.subr.mxu0 0.0
        %859 = vmatpush1.msra.mxu0 %v727
        %860 = vmatprep.subr.mxu0 0.0
        %861 = vmatpush1.msra.mxu0 %v728
        %862 = vmatprep.subr.mxu0 0.0
        %863 = vmatpush1.msra.mxu0 %v729
        %864 = vmatprep.subr.mxu0 0.0
        %865 = vmatpush1.msra.mxu0 %v730
        %866 = vmatprep.subr.mxu0 0.0
        %867 = vmatpush1.msra.mxu0 %v731
        %868 = vmatprep.subr.mxu0 0.0
        %869 = vmatpush1.msra.mxu0 %v732
        %870 = vmatprep.subr.mxu0 0.0
        %871 = vmatpush1.msra.mxu0 %v733
        %872 = vmatprep.subr.mxu0 0.0
        %873 = vmatpush1.msra.mxu0 %v734
        %874 = vmatprep.mubr.f32.mxu0 %v452
        %875 = vmatmul.mubr.f32.gmra.mrb[0].mxu0 %v451
        %v876 = vpop.f32.mrb[0].mxu0
        %v877 = vadd.f32 %v802, %v876
        %v878 = vpop.f32.mrb[0].mxu0
        %879 = vmatprep.mubr.f32.mxu0 %v456
        %880 = vmatmul.mubr.f32.gmra.mrb[0].mxu0 %v455
        %v881 = vpop.f32.mrb[0].mxu0
        %v882 = vadd.f32 %v807, %v881
        %v883 = vpop.f32.mrb[0].mxu0
        %884 = vdwg.mxu0
        %v885 = vxor.u32 %v663, 2147483648
        %v886 = vxor.u32 %v668, 2147483648
        %v887 = vmul.f32 %v885, 1.442695
        %v888 = vpow.pop %v887
        %v889 = vmul.f32 %v886, 1.442695
        %v890 = vpow.pop %v889
        %v891 = vadd.f32 %v888, 1.0
        %v892 = vadd.f32 %v890, 1.0
        %v893 = vrcp.pop %v891
        %v894 = vmul.f32 1.0, %v893
        %v895 = vrcp.pop %v892
        %v896 = vmul.f32 1.0, %v895
        %v897 = vmul.f32 %v663, %v894
        %v898 = vmul.f32 %v668, %v896
        %v899 = vmul.f32 %v897, %v877
        %v900 = vmul.f32 %v898, %v882
        %v901 = vld [vmem:[#allocation3] sm:$0xff]
        %v902 = vld [vmem:[#allocation3 + $0x8] sm:$0xff]
        %v903 = vld [vmem:[#allocation3 + $0x10] sm:$0xff]
        %v904 = vld [vmem:[#allocation3 + $0x18] sm:$0xff]
        %v905 = vld [vmem:[#allocation3 + $0x20] sm:$0xff]
        %v906 = vld [vmem:[#allocation3 + $0x28] sm:$0xff]
        %v907 = vld [vmem:[#allocation3 + $0x30] sm:$0xff]
        %v908 = vld [vmem:[#allocation3 + $0x38] sm:$0xff]
        %v909 = vld [vmem:[%s323] sm:$0xff]
        %v910 = vld [vmem:[%s323 + $0x8] sm:$0xff]
        %v911 = vld [vmem:[%s323 + $0x10] sm:$0xff]
        %v912 = vld [vmem:[%s323 + $0x18] sm:$0xff]
        %v913 = vld [vmem:[%s323 + $0x20] sm:$0xff]
        %v914 = vld [vmem:[%s323 + $0x28] sm:$0xff]
        %v915 = vld [vmem:[%s323 + $0x30] sm:$0xff]
        %v916 = vld [vmem:[%s323 + $0x38] sm:$0xff]
        %v917 = vld [vmem:[%s323 + $0x40] sm:$0xff]
        %v918 = vld [vmem:[%s323 + $0x48] sm:$0xff]
        %v919 = vld [vmem:[%s323 + $0x50] sm:$0xff]
        %v920 = vld [vmem:[%s323 + $0x58] sm:$0xff]
        %v921 = vld [vmem:[%s323 + $0x60] sm:$0xff]
        %v922 = vld [vmem:[%s323 + $0x68] sm:$0xff]
        %v923 = vld [vmem:[%s323 + $0x70] sm:$0xff]
        %v924 = vld [vmem:[%s323 + $0x78] sm:$0xff]
        %v925 = vld [vmem:[%s323 + $0x80] sm:$0xff]
        %v926 = vld [vmem:[%s323 + $0x88] sm:$0xff]
        %v927 = vld [vmem:[%s323 + $0x90] sm:$0xff]
        %v928 = vld [vmem:[%s323 + $0x98] sm:$0xff]
        %v929 = vld [vmem:[%s323 + $0xa0] sm:$0xff]
        %v930 = vld [vmem:[%s323 + $0xa8] sm:$0xff]
        %v931 = vld [vmem:[%s323 + $0xb0] sm:$0xff]
        %v932 = vld [vmem:[%s323 + $0xb8] sm:$0xff]
        %v933 = vld [vmem:[%s323 + $0xc0] sm:$0xff]
        %v934 = vld [vmem:[%s323 + $0xc8] sm:$0xff]
        %v935 = vld [vmem:[%s323 + $0xd0] sm:$0xff]
        %v936 = vld [vmem:[%s323 + $0xd8] sm:$0xff]
        %v937 = vld [vmem:[%s323 + $0xe0] sm:$0xff]
        %v938 = vld [vmem:[%s323 + $0xe8] sm:$0xff]
        %v939 = vld [vmem:[%s323 + $0xf0] sm:$0xff]
        %v940 = vld [vmem:[%s323 + $0xf8] sm:$0xff]
        %v941 = vld [vmem:[%s323 + $0x100] sm:$0xff]
        %v942 = vld [vmem:[%s323 + $0x108] sm:$0xff]
        %v943 = vld [vmem:[%s323 + $0x110] sm:$0xff]
        %v944 = vld [vmem:[%s323 + $0x118] sm:$0xff]
        %v945 = vld [vmem:[%s323 + $0x120] sm:$0xff]
        %v946 = vld [vmem:[%s323 + $0x128] sm:$0xff]
        %v947 = vld [vmem:[%s323 + $0x130] sm:$0xff]
        %v948 = vld [vmem:[%s323 + $0x138] sm:$0xff]
        %v949 = vld [vmem:[%s323 + $0x140] sm:$0xff]
        %v950 = vld [vmem:[%s323 + $0x148] sm:$0xff]
        %v951 = vld [vmem:[%s323 + $0x150] sm:$0xff]
        %v952 = vld [vmem:[%s323 + $0x158] sm:$0xff]
        %v953 = vld [vmem:[%s323 + $0x160] sm:$0xff]
        %v954 = vld [vmem:[%s323 + $0x168] sm:$0xff]
        %v955 = vld [vmem:[%s323 + $0x170] sm:$0xff]
        %v956 = vld [vmem:[%s323 + $0x178] sm:$0xff]
        %v957 = vld [vmem:[%s323 + $0x180] sm:$0xff]
        %v958 = vld [vmem:[%s323 + $0x188] sm:$0xff]
        %v959 = vld [vmem:[%s323 + $0x190] sm:$0xff]
        %v960 = vld [vmem:[%s323 + $0x198] sm:$0xff]
        %v961 = vld [vmem:[%s323 + $0x1a0] sm:$0xff]
        %v962 = vld [vmem:[%s323 + $0x1a8] sm:$0xff]
        %v963 = vld [vmem:[%s323 + $0x1b0] sm:$0xff]
        %v964 = vld [vmem:[%s323 + $0x1b8] sm:$0xff]
        %v965 = vld [vmem:[%s323 + $0x1c0] sm:$0xff]
        %v966 = vld [vmem:[%s323 + $0x1c8] sm:$0xff]
        %v967 = vld [vmem:[%s323 + $0x1d0] sm:$0xff]
        %v968 = vld [vmem:[%s323 + $0x1d8] sm:$0xff]
        %v969 = vld [vmem:[%s323 + $0x1e0] sm:$0xff]
        %v970 = vld [vmem:[%s323 + $0x1e8] sm:$0xff]
        %v971 = vld [vmem:[%s323 + $0x1f0] sm:$0xff]
        %v972 = vld [vmem:[%s323 + $0x1f8] sm:$0xff]
        %973 = vmatprep.subr.mxu0 %v910
        %974 = vmatpush1.msra.mxu0 %v909
        %975 = vmatprep.subr.mxu0 %v914
        %976 = vmatpush1.msra.mxu0 %v913
        %977 = vmatprep.subr.mxu0 %v918
        %978 = vmatpush1.msra.mxu0 %v917
        %979 = vmatprep.subr.mxu0 %v922
        %980 = vmatpush1.msra.mxu0 %v921
        %981 = vmatprep.subr.mxu0 %v926
        %982 = vmatpush1.msra.mxu0 %v925
        %983 = vmatprep.subr.mxu0 %v930
        %984 = vmatpush1.msra.mxu0 %v929
        %985 = vmatprep.subr.mxu0 %v934
        %986 = vmatpush1.msra.mxu0 %v933
        %987 = vmatprep.subr.mxu0 %v938
        %988 = vmatpush1.msra.mxu0 %v937
        %989 = vmatprep.subr.mxu0 %v942
        %990 = vmatpush1.msra.mxu0 %v941
        %991 = vmatprep.subr.mxu0 %v946
        %992 = vmatpush1.msra.mxu0 %v945
        %993 = vmatprep.subr.mxu0 %v950
        %994 = vmatpush1.msra.mxu0 %v949
        %995 = vmatprep.subr.mxu0 %v954
        %996 = vmatpush1.msra.mxu0 %v953
        %997 = vmatprep.subr.mxu0 %v958
        %998 = vmatpush1.msra.mxu0 %v957
        %999 = vmatprep.subr.mxu0 %v962
        %1000 = vmatpush1.msra.mxu0 %v961
        %1001 = vmatprep.subr.mxu0 %v966
        %1002 = vmatpush1.msra.mxu0 %v965
        %1003 = vmatprep.subr.mxu0 %v970
        %1004 = vmatpush1.msra.mxu0 %v969
        %1005 = vmatprep.subr.mxu0 0.0
        %1006 = vmatpush1.msra.mxu0 0.0
        %1007 = vmatprep.subr.mxu0 0.0
        %1008 = vmatpush1.msra.mxu0 0.0
        %1009 = vmatprep.subr.mxu0 0.0
        %1010 = vmatpush1.msra.mxu0 0.0
        %1011 = vmatprep.subr.mxu0 0.0
        %1012 = vmatpush1.msra.mxu0 0.0
        %1013 = vmatprep.subr.mxu0 0.0
        %1014 = vmatpush1.msra.mxu0 0.0
        %1015 = vmatprep.subr.mxu0 0.0
        %1016 = vmatpush1.msra.mxu0 0.0
        %1017 = vmatprep.subr.mxu0 0.0
        %1018 = vmatpush1.msra.mxu0 0.0
        %1019 = vmatprep.subr.mxu0 0.0
        %1020 = vmatpush1.msra.mxu0 0.0
        %1021 = vmatprep.subr.mxu0 0.0
        %1022 = vmatpush1.msra.mxu0 0.0
        %1023 = vmatprep.subr.mxu0 0.0
        %1024 = vmatpush1.msra.mxu0 0.0
        %1025 = vmatprep.subr.mxu0 0.0
        %1026 = vmatpush1.msra.mxu0 0.0
        %1027 = vmatprep.subr.mxu0 0.0
        %1028 = vmatpush1.msra.mxu0 0.0
        %1029 = vmatprep.subr.mxu0 0.0
        %1030 = vmatpush1.msra.mxu0 0.0
        %1031 = vmatprep.subr.mxu0 0.0
        %1032 = vmatpush1.msra.mxu0 0.0
        %1033 = vmatprep.subr.mxu0 0.0
        %1034 = vmatpush1.msra.mxu0 0.0
        %1035 = vmatprep.subr.mxu0 0.0
        %1036 = vmatpush1.msra.mxu0 0.0
        %1037 = vmatprep.mubr.f32.mxu0 0.0
        %1038 = vmatmul.mubr.f32.gmra.mrb[0].mxu0 %v899
        %v1039 = vpop.f32.mrb[0].mxu0
        %v1040 = vadd.f32 0.0, %v1039
        %v1041 = vpop.f32.mrb[0].mxu0
        %v1042 = vadd.f32 0.0, %v1041
        %1043 = vmatprep.mubr.f32.mxu0 0.0
        %1044 = vmatmul.mubr.f32.gmra.mrb[0].mxu0 %v900
        %v1045 = vpop.f32.mrb[0].mxu0
        %v1046 = vadd.f32 0.0, %v1045
        %v1047 = vpop.f32.mrb[0].mxu0
        %v1048 = vadd.f32 0.0, %v1047
        %1049 = vdwg.mxu0
        %1050 = vmatprep.subr.mxu0 %v912
        %1051 = vmatpush1.msra.mxu0 %v911
        %1052 = vmatprep.subr.mxu0 %v916
        %1053 = vmatpush1.msra.mxu0 %v915
        %1054 = vmatprep.subr.mxu0 %v920
        %1055 = vmatpush1.msra.mxu0 %v919
        %1056 = vmatprep.subr.mxu0 %v924
        %1057 = vmatpush1.msra.mxu0 %v923
        %1058 = vmatprep.subr.mxu0 %v928
        %1059 = vmatpush1.msra.mxu0 %v927
        %1060 = vmatprep.subr.mxu0 %v932
        %1061 = vmatpush1.msra.mxu0 %v931
        %1062 = vmatprep.subr.mxu0 %v936
        %1063 = vmatpush1.msra.mxu0 %v935
        %1064 = vmatprep.subr.mxu0 %v940
        %1065 = vmatpush1.msra.mxu0 %v939
        %1066 = vmatprep.subr.mxu0 %v944
        %1067 = vmatpush1.msra.mxu0 %v943
        %1068 = vmatprep.subr.mxu0 %v948
        %1069 = vmatpush1.msra.mxu0 %v947
        %1070 = vmatprep.subr.mxu0 %v952
        %1071 = vmatpush1.msra.mxu0 %v951
        %1072 = vmatprep.subr.mxu0 %v956
        %1073 = vmatpush1.msra.mxu0 %v955
        %1074 = vmatprep.subr.mxu0 %v960
        %1075 = vmatpush1.msra.mxu0 %v959
        %1076 = vmatprep.subr.mxu0 %v964
        %1077 = vmatpush1.msra.mxu0 %v963
        %1078 = vmatprep.subr.mxu0 %v968
        %1079 = vmatpush1.msra.mxu0 %v967
        %1080 = vmatprep.subr.mxu0 %v972
        %1081 = vmatpush1.msra.mxu0 %v971
        %1082 = vmatprep.subr.mxu0 0.0
        %1083 = vmatpush1.msra.mxu0 0.0
        %1084 = vmatprep.subr.mxu0 0.0
        %1085 = vmatpush1.msra.mxu0 0.0
        %1086 = vmatprep.subr.mxu0 0.0
        %1087 = vmatpush1.msra.mxu0 0.0
        %1088 = vmatprep.subr.mxu0 0.0
        %1089 = vmatpush1.msra.mxu0 0.0
        %1090 = vmatprep.subr.mxu0 0.0
        %1091 = vmatpush1.msra.mxu0 0.0
        %1092 = vmatprep.subr.mxu0 0.0
        %1093 = vmatpush1.msra.mxu0 0.0
        %1094 = vmatprep.subr.mxu0 0.0
        %1095 = vmatpush1.msra.mxu0 0.0
        %1096 = vmatprep.subr.mxu0 0.0
        %1097 = vmatpush1.msra.mxu0 0.0
        %1098 = vmatprep.subr.mxu0 0.0
        %1099 = vmatpush1.msra.mxu0 0.0
        %1100 = vmatprep.subr.mxu0 0.0
        %1101 = vmatpush1.msra.mxu0 0.0
        %1102 = vmatprep.subr.mxu0 0.0
        %1103 = vmatpush1.msra.mxu0 0.0
        %1104 = vmatprep.subr.mxu0 0.0
        %1105 = vmatpush1.msra.mxu0 0.0
        %1106 = vmatprep.subr.mxu0 0.0
        %1107 = vmatpush1.msra.mxu0 0.0
        %1108 = vmatprep.subr.mxu0 0.0
        %1109 = vmatpush1.msra.mxu0 0.0
        %1110 = vmatprep.subr.mxu0 0.0
        %1111 = vmatpush1.msra.mxu0 0.0
        %1112 = vmatprep.subr.mxu0 0.0
        %1113 = vmatpush1.msra.mxu0 0.0
        %1114 = vmatprep.mubr.f32.mxu0 0.0
        %1115 = vmatmul.mubr.f32.gmra.mrb[0].mxu0 %v899
        %v1116 = vpop.f32.mrb[0].mxu0
        %v1117 = vadd.f32 0.0, %v1116
        %v1118 = vpop.f32.mrb[0].mxu0
        %v1119 = vadd.f32 0.0, %v1118
        %1120 = vmatprep.mubr.f32.mxu0 0.0
        %1121 = vmatmul.mubr.f32.gmra.mrb[0].mxu0 %v900
        %v1122 = vpop.f32.mrb[0].mxu0
        %v1123 = vadd.f32 0.0, %v1122
        %v1124 = vpop.f32.mrb[0].mxu0
        %v1125 = vadd.f32 0.0, %v1124
        %1126 = vdwg.mxu0
        %v1127 = vadd.f32 %v901, %v1040
        %v1128 = vadd.f32 %v902, %v1042
        %v1129 = vadd.f32 %v903, %v1117
        %v1130 = vadd.f32 %v904, %v1119
        %v1131 = vadd.f32 %v905, %v1046
        %v1132 = vadd.f32 %v906, %v1048
        %v1133 = vadd.f32 %v907, %v1123
        %v1134 = vadd.f32 %v908, %v1125
        %1135 = vst [vmem:[#allocation3] sm:$0xff] %v1127
        %1136 = vst [vmem:[#allocation3 + $0x8] sm:$0xff] %v1128
        %1137 = vst [vmem:[#allocation3 + $0x10] sm:$0xff] %v1129
        %1138 = vst [vmem:[#allocation3 + $0x18] sm:$0xff] %v1130
        %1139 = vst [vmem:[#allocation3 + $0x20] sm:$0xff] %v1131
        %1140 = vst [vmem:[#allocation3 + $0x28] sm:$0xff] %v1132
        %1141 = vst [vmem:[#allocation3 + $0x30] sm:$0xff] %v1133
        %1142 = vst [vmem:[#allocation3 + $0x38] sm:$0xff] %v1134
        %p1143 = scmp.eq.s32.totalorder %s24, 10
        // Predicated region
        $region65: #{llm_block_forward.3} parent=39 // pred_check
          %p1144 = pneg %p1143
        $region66: #{llm_block_forward.3} parent=39 // pred_check_branch
          %1146 = sbr.rel (%p1144) target = $region68
        $region67: #{llm_block_forward.3} parent=39 // pred_region
          %v1147 = vld [vmem:[#allocation3] sm:$0xff]
          %v1148 = vld [vmem:[#allocation3 + $0x8] sm:$0xff]
          %v1149 = vld [vmem:[#allocation3 + $0x10] sm:$0xff]
          %v1150 = vld [vmem:[#allocation3 + $0x18] sm:$0xff]
          %v1151 = vld [vmem:[#allocation3 + $0x20] sm:$0xff]
          %v1152 = vld [vmem:[#allocation3 + $0x28] sm:$0xff]
          %v1153 = vld [vmem:[#allocation3 + $0x30] sm:$0xff]
          %v1154 = vld [vmem:[#allocation3 + $0x38] sm:$0xff]
          %1155 = vst [vmem:[#allocation12] sm:$0xff] %v1147
          %1156 = vst [vmem:[#allocation12 + $0x8] sm:$0xff] %v1148
          %1157 = vst [vmem:[#allocation12 + $0x10] sm:$0xff] %v1149
          %1158 = vst [vmem:[#allocation12 + $0x18] sm:$0xff] %v1150
          %1159 = vst [vmem:[#allocation12 + $0x20] sm:$0xff] %v1151
          %1160 = vst [vmem:[#allocation12 + $0x28] sm:$0xff] %v1152
          %1161 = vst [vmem:[#allocation12 + $0x30] sm:$0xff] %v1153
          %1162 = vst [vmem:[#allocation12 + $0x38] sm:$0xff] %v1154
        $region68: #{llm_block_forward.3} parent=39 // pred_fallthru
          _
        // Predicated region
        $region69: #{llm_block_forward.3} parent=39 // pred_check
          %p1163 = pneg %p174
        $region70: #{llm_block_forward.3} parent=39 // pred_check_branch
          %1165 = sbr.rel (%p1163) target = $region72
        $region71: #{llm_block_forward.3} parent=39 // pred_region
          %s1166 = smul.u32 2, %s23
          %s1168 = ssub.s32 1024, 1024
          %1169 = vsyncadd [#allocation6], %s1168
          %s1170 = smul.addr %s1166, 4
          %s1171 = smul.addr %s1170, 128
          %s1172 = scalar_lea.hbm %s5, %s1171
          %s1173 = sshll.u32 [#allocation12], 4
          %s1174 = int_to_ptr.vmem [resolvable:$true] %s1173
          %1179 = dma.vmem_to_hbm [thread:$0]  %s1174, 1024, %s1172, [#allocation6], 512, 512, 32
        $region72: #{llm_block_forward.3} parent=39 // pred_fallthru
          _
        // Predicated region
        $region73: #{llm_block_forward.3} parent=39 // pred_check
          %p1180 = pneg %p174
        $region74: #{llm_block_forward.3} parent=39 // pred_check_branch
          %1182 = sbr.rel (%p1180) target = $region76
        $region75: #{llm_block_forward.3} parent=39 // pred_region
          %1183 = dma.done [#allocation6], 1024
        $region76: #{llm_block_forward.3} parent=39 // pred_fallthru
          _
      $region40: #{llm_block_forward.3} parent=5 // pred_fallthru
        _
      %p1184 = scmp.le.s32.totalorder 2, %s14
      // Predicated region
      $region77: #{llm_block_forward.3} parent=5 // pred_check
        %p1185 = pneg %p1184
      $region78: #{llm_block_forward.3} parent=5 // pred_check_branch
        %1187 = sbr.rel (%p1185) target = $region80
      $region79: #{llm_block_forward.3} parent=5 // pred_region
        %s1188 = ssub.s32 %s14, 2
      $region80: #{llm_block_forward.3} parent=5 // pred_fallthru
        _
    $region6: #{llm_block_forward.3} parent=1 // loop_footer
      %s18 = sadd.s32 1, %s14
    $region7: #{llm_block_forward.3} parent=1 // loop_footer_branch
      %13 = sbr.rel target = $region3
    $region8: #{llm_block_forward.3} parent=1 // loop_exit
      _
    %1189 = vsyncpa [#allocation5], 1
    %s1190 = scalar_lea.sflag [#allocation5], 1
    %1191 = vsyncpa %s1190, 1
    %1192 = vsyncpa [#allocation8], 1
    %1193 = vsyncpa [#allocation6], 1
    %s1194 = scalar_lea.sflag [#allocation6], 1
    %1195 = vsyncpa %s1194, 1

// kernel: llm_block_forward.2
$region0: #{llm_block_forward.2}
  #allocation0 [shape = 'u32[]', space=smem, size = 0x4, offset = 0x4, fixed_abs, tag = 'smem constant byte address 0x4 - core index']
  #allocation1 [shape = 'u32[144,128]{1,0:T(1,128)}', space=vmem, size = 0x12000, scoped, tag = 'internal scratch']
  #allocation2 [shape = 'f32[8,512]{1,0:T(8,128)}', space=vmem, size = 0x4000, scoped, tag = 'scratch operand']
  %s0 = inlined_call_operand.hbm [shape: f32[2,8,512], index: 0, kind: input, shape index: {}]
  %s1 = inlined_call_operand.hbm [shape: f32[1,512], index: 1, kind: input, shape index: {}]
  %s2 = inlined_call_operand.hbm [shape: f32[8,128], index: 2, kind: input, shape index: {}]
  %s3 = inlined_call_operand.hbm [shape: f32[8,128], index: 3, kind: input, shape index: {}]
  %s4 = inlined_call_operand.hbm [shape: f32[512,512], index: 4, kind: input, shape index: {}]
  %s5 = inlined_call_operand.hbm [shape: f32[512,256], index: 5, kind: input, shape index: {}]
  %s6 = inlined_call_operand.hbm [shape: f32[512,256], index: 6, kind: input, shape index: {}]
  %s7 = inlined_call_operand.hbm [shape: f32[512,512], index: 7, kind: input, shape index: {}]
  %s8 = inlined_call_operand.hbm [shape: f32[2,8,512], index: 8, kind: output, shape index: {}]
  %s9 = sld [smem:[#allocation0]]
  $region105: #{llm_block_forward.2} parent=0
    _
  %s11 = ssub.s32 1, %s9
  %s12 = scalar_select 0, %s11, %s9
  $region1: #{llm_block_forward.2} parent=0
    #allocation3 [shape = 'u8[32768]{0}', space=vmem, size = 0x8000, scoped, tag = 'input window, operand 0']
    #allocation4 [shape = 's32[2]{0}', space=sflag, size = 0x8, scoped, tag = 'scoped memory for llm_block_forward.2']
    #allocation5 [shape = 's32[2]{0}', space=sflag, size = 0x8, scoped, tag = 'scoped memory for llm_block_forward.2']
    #allocation6 [shape = 'u8[2048]{0}', space=vmem, size = 0x800, scoped, tag = 'input window, operand 1, single buffered']
    #allocation7 [shape = 's32[1]{0}', space=sflag, size = 0x4, scoped, tag = 'scoped memory for llm_block_forward.2']
    #allocation8 [shape = 'u8[4096]{0}', space=vmem, size = 0x1000, scoped, tag = 'input window, operand 2, single buffered']
    #allocation9 [shape = 'u8[4096]{0}', space=vmem, size = 0x1000, scoped, tag = 'input window, operand 3, single buffered']
    #allocation10 [shape = 's32[1]{0}', space=sflag, size = 0x4, scoped, tag = 'scoped memory for llm_block_forward.2']
    #allocation11 [shape = 'u8[1048576]{0}', space=vmem, size = 0x100000, scoped, tag = 'input window, operand 4']
    #allocation12 [shape = 'u8[524288]{0}', space=vmem, size = 0x80000, scoped, tag = 'input window, operand 5']
    #allocation13 [shape = 'u8[524288]{0}', space=vmem, size = 0x80000, scoped, tag = 'input window, operand 6']
    #allocation14 [shape = 'u8[1048576]{0}', space=vmem, size = 0x100000, scoped, tag = 'input window, operand 7']
    #allocation15 [shape = 'u8[32768]{0}', space=vmem, size = 0x8000, scoped, tag = 'output window, operand 0']
    %13 = vsyncpa [#allocation4], 0
    %s14 = scalar_lea.sflag [#allocation4], 1
    %15 = vsyncpa %s14, 0
    %16 = vsyncpa [#allocation7], 0
    %17 = vsyncpa [#allocation10], 0
    %18 = vsyncpa [#allocation5], 0
    %s19 = scalar_lea.sflag [#allocation5], 1
    %20 = vsyncpa %s19, 0
    loop: start=0, step=1, limit=6
    $region2: #{llm_block_forward.2} parent=1 // loop_pre_header
      _
    $region3: #{llm_block_forward.2} parent=1 // loop_header
      %s22 = sphi 0, %s26
      %p23 = scmp.ge.s32.totalorder %s22, 6
      %s29 = sphi 0, %s41
      %s30 = sphi 0, %s37
      %s31 = sphi 0, %s29
      %s32 = sphi 0, %s30
      %s33 = sphi 0, %s31
      %s34 = sphi 0, %s32
      %s44 = sphi 0, %s46
      %s47 = sphi 0, %s44
      %s48 = sphi 0, %s47
      %s64 = sphi 0, %s48
      %s68 = sphi 0, %s68
      %s70 = sphi 0, %s68
      %s71 = sphi 0, %s70
      %s85 = sphi 0, %s71
      %s89 = sphi 0, %s89
      %s91 = sphi 0, %s89
      %s92 = sphi 0, %s91
      %s106 = sphi 0, %s92
      %s110 = sphi 0, %s110
      %s112 = sphi 0, %s110
      %s113 = sphi 0, %s112
      %s127 = sphi 0, %s113
      %s133 = sphi 0, %s135
      %s136 = sphi 0, %s133
      %s137 = sphi 0, %s136
      %s153 = sphi 0, %s137
      %s159 = sphi 0, %s161
      %s162 = sphi 0, %s159
      %s163 = sphi 0, %s162
      %s179 = sphi 0, %s163
      %s185 = sphi 0, %s187
      %s188 = sphi 0, %s185
      %s189 = sphi 0, %s188
      %s205 = sphi 0, %s189
      %s211 = sphi 0, %s213
      %s214 = sphi 0, %s211
      %s215 = sphi 0, %s214
      %s231 = sphi 0, %s215
      %s237 = sphi 0, %s239
      %s240 = sphi 0, %s237
      %s241 = sphi 0, %s240
      %s257 = sphi 0, %s241
    $region4: #{llm_block_forward.2} parent=1 // loop_header_branch
      %25 = sbr.rel (%p23) target = $region8
    $region5: #{llm_block_forward.2} parent=1 // loop_body
      %s27 = ssub.s32 %s22, 1
      %s28 = ssub.s32 %s22, 2
      %s35 = sadd.s32 1, %s30
      %p36 = scmp.ge.s32.totalorder %s35, 2
      %s37 = scalar_select %p36, 0, %s35
      %s38 = sadd.s32 1, %s29
      %s39 = scalar_select %p36, %s38, %s29
      %p40 = scmp.ge.s32.totalorder %s39, 2
      %s41 = scalar_select %p40, 0, %s39
      %s42 = ssub.s32 %s29, %s41
      %p43 = scmp.eq.s32.totalorder %s42, 0
      %s45 = sadd.s32 %s44, 1
      %s46 = scalar_select %p43, %s44, %s45
      %p49 = pneg %p43
      %p50 = scmp.eq.s32.totalorder %s22, 3
      %p51 = por %p49, %p50
      %p52 = scmp.ne.s32.totalorder %s44, %s47
      %p53 = scmp.eq.s32.totalorder %s22, 0
      %p54 = por %p52, %p53
      %p55 = scmp.ne.s32.totalorder %s44, %s47
      %p56 = scmp.eq.s32.totalorder %s27, 3
      %p57 = por %p55, %p56
      %p58 = scmp.ne.s32.totalorder %s47, %s48
      %p59 = scmp.eq.s32.totalorder %s27, 0
      %p60 = por %p58, %p59
      %p61 = scmp.ne.s32.totalorder %s47, %s48
      %p62 = scmp.eq.s32.totalorder %s28, 3
      %p63 = por %p61, %p62
      %p65 = scmp.ne.s32.totalorder %s48, %s64
      %p66 = scmp.eq.s32.totalorder %s28, 0
      %p67 = por %p65, %p66
      %s69 = sadd.s32 %s68, 1
      %p72 = scmp.eq.s32.totalorder %s22, 3
      %p73 = scmp.ne.s32.totalorder %s68, %s70
      %p74 = scmp.eq.s32.totalorder %s22, 0
      %p75 = por %p73, %p74
      %p76 = scmp.ne.s32.totalorder %s68, %s70
      %p77 = scmp.eq.s32.totalorder %s27, 3
      %p78 = por %p76, %p77
      %p79 = scmp.ne.s32.totalorder %s70, %s71
      %p80 = scmp.eq.s32.totalorder %s27, 0
      %p81 = por %p79, %p80
      %p82 = scmp.ne.s32.totalorder %s70, %s71
      %p83 = scmp.eq.s32.totalorder %s28, 3
      %p84 = por %p82, %p83
      %p86 = scmp.ne.s32.totalorder %s71, %s85
      %p87 = scmp.eq.s32.totalorder %s28, 0
      %p88 = por %p86, %p87
      %s90 = sadd.s32 %s89, 1
      %p93 = scmp.eq.s32.totalorder %s22, 3
      %p94 = scmp.ne.s32.totalorder %s89, %s91
      %p95 = scmp.eq.s32.totalorder %s22, 0
      %p96 = por %p94, %p95
      %p97 = scmp.ne.s32.totalorder %s89, %s91
      %p98 = scmp.eq.s32.totalorder %s27, 3
      %p99 = por %p97, %p98
      %p100 = scmp.ne.s32.totalorder %s91, %s92
      %p101 = scmp.eq.s32.totalorder %s27, 0
      %p102 = por %p100, %p101
      %p103 = scmp.ne.s32.totalorder %s91, %s92
      %p104 = scmp.eq.s32.totalorder %s28, 3
      %p105 = por %p103, %p104
      %p107 = scmp.ne.s32.totalorder %s92, %s106
      %p108 = scmp.eq.s32.totalorder %s28, 0
      %p109 = por %p107, %p108
      %s111 = sadd.s32 %s110, 1
      %p114 = scmp.eq.s32.totalorder %s22, 3
      %p115 = scmp.ne.s32.totalorder %s110, %s112
      %p116 = scmp.eq.s32.totalorder %s22, 0
      %p117 = por %p115, %p116
      %p118 = scmp.ne.s32.totalorder %s110, %s112
      %p119 = scmp.eq.s32.totalorder %s27, 3
      %p120 = por %p118, %p119
      %p121 = scmp.ne.s32.totalorder %s112, %s113
      %p122 = scmp.eq.s32.totalorder %s27, 0
      %p123 = por %p121, %p122
      %p124 = scmp.ne.s32.totalorder %s112, %s113
      %p125 = scmp.eq.s32.totalorder %s28, 3
      %p126 = por %p124, %p125
      %p128 = scmp.ne.s32.totalorder %s113, %s127
      %p129 = scmp.eq.s32.totalorder %s28, 0
      %p130 = por %p128, %p129
      %s131 = ssub.s32 %s30, %s37
      %p132 = scmp.eq.s32.totalorder %s131, 0
      %s134 = sadd.s32 %s133, 1
      %s135 = scalar_select %p132, %s133, %s134
      %p138 = pneg %p132
      %p139 = scmp.eq.s32.totalorder %s22, 3
      %p140 = por %p138, %p139
      %p141 = scmp.ne.s32.totalorder %s133, %s136
      %p142 = scmp.eq.s32.totalorder %s22, 0
      %p143 = por %p141, %p142
      %p144 = scmp.ne.s32.totalorder %s133, %s136
      %p145 = scmp.eq.s32.totalorder %s27, 3
      %p146 = por %p144, %p145
      %p147 = scmp.ne.s32.totalorder %s136, %s137
      %p148 = scmp.eq.s32.totalorder %s27, 0
      %p149 = por %p147, %p148
      %p150 = scmp.ne.s32.totalorder %s136, %s137
      %p151 = scmp.eq.s32.totalorder %s28, 3
      %p152 = por %p150, %p151
      %p154 = scmp.ne.s32.totalorder %s137, %s153
      %p155 = scmp.eq.s32.totalorder %s28, 0
      %p156 = por %p154, %p155
      %s157 = ssub.s32 %s30, %s37
      %p158 = scmp.eq.s32.totalorder %s157, 0
      %s160 = sadd.s32 %s159, 1
      %s161 = scalar_select %p158, %s159, %s160
      %p164 = pneg %p158
      %p165 = scmp.eq.s32.totalorder %s22, 3
      %p166 = por %p164, %p165
      %p167 = scmp.ne.s32.totalorder %s159, %s162
      %p168 = scmp.eq.s32.totalorder %s22, 0
      %p169 = por %p167, %p168
      %p170 = scmp.ne.s32.totalorder %s159, %s162
      %p171 = scmp.eq.s32.totalorder %s27, 3
      %p172 = por %p170, %p171
      %p173 = scmp.ne.s32.totalorder %s162, %s163
      %p174 = scmp.eq.s32.totalorder %s27, 0
      %p175 = por %p173, %p174
      %p176 = scmp.ne.s32.totalorder %s162, %s163
      %p177 = scmp.eq.s32.totalorder %s28, 3
      %p178 = por %p176, %p177
      %p180 = scmp.ne.s32.totalorder %s163, %s179
      %p181 = scmp.eq.s32.totalorder %s28, 0
      %p182 = por %p180, %p181
      %s183 = ssub.s32 %s30, %s37
      %p184 = scmp.eq.s32.totalorder %s183, 0
      %s186 = sadd.s32 %s185, 1
      %s187 = scalar_select %p184, %s185, %s186
      %p190 = pneg %p184
      %p191 = scmp.eq.s32.totalorder %s22, 3
      %p192 = por %p190, %p191
      %p193 = scmp.ne.s32.totalorder %s185, %s188
      %p194 = scmp.eq.s32.totalorder %s22, 0
      %p195 = por %p193, %p194
      %p196 = scmp.ne.s32.totalorder %s185, %s188
      %p197 = scmp.eq.s32.totalorder %s27, 3
      %p198 = por %p196, %p197
      %p199 = scmp.ne.s32.totalorder %s188, %s189
      %p200 = scmp.eq.s32.totalorder %s27, 0
      %p201 = por %p199, %p200
      %p202 = scmp.ne.s32.totalorder %s188, %s189
      %p203 = scmp.eq.s32.totalorder %s28, 3
      %p204 = por %p202, %p203
      %p206 = scmp.ne.s32.totalorder %s189, %s205
      %p207 = scmp.eq.s32.totalorder %s28, 0
      %p208 = por %p206, %p207
      %s209 = ssub.s32 %s30, %s37
      %p210 = scmp.eq.s32.totalorder %s209, 0
      %s212 = sadd.s32 %s211, 1
      %s213 = scalar_select %p210, %s211, %s212
      %p216 = pneg %p210
      %p217 = scmp.eq.s32.totalorder %s22, 3
      %p218 = por %p216, %p217
      %p219 = scmp.ne.s32.totalorder %s211, %s214
      %p220 = scmp.eq.s32.totalorder %s22, 0
      %p221 = por %p219, %p220
      %p222 = scmp.ne.s32.totalorder %s211, %s214
      %p223 = scmp.eq.s32.totalorder %s27, 3
      %p224 = por %p222, %p223
      %p225 = scmp.ne.s32.totalorder %s214, %s215
      %p226 = scmp.eq.s32.totalorder %s27, 0
      %p227 = por %p225, %p226
      %p228 = scmp.ne.s32.totalorder %s214, %s215
      %p229 = scmp.eq.s32.totalorder %s28, 3
      %p230 = por %p228, %p229
      %p232 = scmp.ne.s32.totalorder %s215, %s231
      %p233 = scmp.eq.s32.totalorder %s28, 0
      %p234 = por %p232, %p233
      %s235 = ssub.s32 %s29, %s41
      %p236 = scmp.eq.s32.totalorder %s235, 0
      %s238 = sadd.s32 %s237, 1
      %s239 = scalar_select %p236, %s237, %s238
      %p242 = pneg %p236
      %p243 = scmp.eq.s32.totalorder %s22, 3
      %p244 = por %p242, %p243
      %p245 = scmp.ne.s32.totalorder %s237, %s240
      %p246 = scmp.eq.s32.totalorder %s22, 0
      %p247 = por %p245, %p246
      %p248 = scmp.ne.s32.totalorder %s237, %s240
      %p249 = scmp.eq.s32.totalorder %s27, 3
      %p250 = por %p248, %p249
      %p251 = scmp.ne.s32.totalorder %s240, %s241
      %p252 = scmp.eq.s32.totalorder %s27, 0
      %p253 = por %p251, %p252
      %p254 = scmp.ne.s32.totalorder %s240, %s241
      %p255 = scmp.eq.s32.totalorder %s28, 3
      %p256 = por %p254, %p255
      %p258 = scmp.ne.s32.totalorder %s241, %s257
      %p259 = scmp.eq.s32.totalorder %s28, 0
      %p260 = por %p258, %p259
      %p261 = scmp.le.s32.totalorder 1, %s22
      %p262 = scmp.lt.s32.totalorder %s22, 5
      %p263 = pnand %p261, %p262
      %p264 = pneg %p263
      // Predicated region
      $region9: #{llm_block_forward.2} parent=5 // pred_check
        _
      $region10: #{llm_block_forward.2} parent=5 // pred_check_branch
        %266 = sbr.rel (%p263) target = $region12
      $region11: #{llm_block_forward.2} parent=5 // pred_region
        %s267 = ssub.s32 %s22, 1
        // Predicated region
        $region13: #{llm_block_forward.2} parent=11 // pred_check
          %p268 = pneg %p81
        $region14: #{llm_block_forward.2} parent=11 // pred_check_branch
          %270 = sbr.rel (%p268) target = $region16
        $region15: #{llm_block_forward.2} parent=11 // pred_region
          %s272 = ssub.s32 64, 64
          %273 = vsyncadd [#allocation7], %s272
          %s275 = sshll.u32 [#allocation6], 4
          %s276 = int_to_ptr.vmem [resolvable:$true] %s275
          %278 = dma.hbm_to_vmem [thread:$0]  %s1, 64, %s276, [#allocation7]
        $region16: #{llm_block_forward.2} parent=11 // pred_fallthru
          _
        // Predicated region
        $region17: #{llm_block_forward.2} parent=11 // pred_check
          %p279 = pneg %p102
        $region18: #{llm_block_forward.2} parent=11 // pred_check_branch
          %281 = sbr.rel (%p279) target = $region20
        $region19: #{llm_block_forward.2} parent=11 // pred_region
          %s283 = ssub.s32 128, 128
          %284 = vsyncadd [#allocation7], %s283
          %s286 = sshll.u32 [#allocation8], 4
          %s287 = int_to_ptr.vmem [resolvable:$true] %s286
          %289 = dma.hbm_to_vmem [thread:$0]  %s2, 128, %s287, [#allocation7]
        $region20: #{llm_block_forward.2} parent=11 // pred_fallthru
          _
        // Predicated region
        $region21: #{llm_block_forward.2} parent=11 // pred_check
          %p290 = pneg %p123
        $region22: #{llm_block_forward.2} parent=11 // pred_check_branch
          %292 = sbr.rel (%p290) target = $region24
        $region23: #{llm_block_forward.2} parent=11 // pred_region
          %s294 = ssub.s32 128, 128
          %295 = vsyncadd [#allocation10], %s294
          %s297 = sshll.u32 [#allocation9], 4
          %s298 = int_to_ptr.vmem [resolvable:$true] %s297
          %300 = dma.hbm_to_vmem [thread:$0]  %s3, 128, %s298, [#allocation10]
        $region24: #{llm_block_forward.2} parent=11 // pred_fallthru
          _
      $region12: #{llm_block_forward.2} parent=5 // pred_fallthru
        _
      %p301 = scmp.lt.s32.totalorder %s22, 4
      // Predicated region
      $region25: #{llm_block_forward.2} parent=5 // pred_check
        %p302 = pneg %p301
      $region26: #{llm_block_forward.2} parent=5 // pred_check_branch
        %304 = sbr.rel (%p302) target = $region28
      $region27: #{llm_block_forward.2} parent=5 // pred_region
        // Predicated region
        $region29: #{llm_block_forward.2} parent=27 // pred_check
          %p305 = pneg %p54
        $region30: #{llm_block_forward.2} parent=27 // pred_check_branch
          %307 = sbr.rel (%p305) target = $region32
        $region31: #{llm_block_forward.2} parent=27 // pred_region
          %s308 = sand.u32 %s22, 1
          %s309 = scalar_lea.sflag [#allocation4], %s308
          %s310 = sand.u32 %s44, 1
          %s311 = smul.addr %s310, 32
          %s312 = scalar_lea.vmem [#allocation3], %s311
          %s314 = ssub.s32 512, 512
          %315 = vsyncadd %s309, %s314
          %s316 = smul.addr %s29, 4
          %s317 = smul.addr %s316, 128
          %s318 = scalar_lea.hbm %s0, %s317
          %s320 = sshll.u32 %s312, 4
          %s321 = int_to_ptr.vmem [resolvable:$true] %s320
          %323 = dma.hbm_to_vmem [thread:$0]  %s318, 512, %s321, %s309
        $region32: #{llm_block_forward.2} parent=27 // pred_fallthru
          _
        // Predicated region
        $region33: #{llm_block_forward.2} parent=27 // pred_check
          %p324 = pneg %p143
        $region34: #{llm_block_forward.2} parent=27 // pred_check_branch
          %326 = sbr.rel (%p324) target = $region36
        $region35: #{llm_block_forward.2} parent=27 // pred_region
          %s327 = sand.u32 %s22, 1
          %s328 = scalar_lea.sflag [#allocation4], %s327
          %s329 = sand.u32 %s133, 1
          %s330 = smul.addr %s329, 1024
          %s331 = scalar_lea.vmem [#allocation11], %s330
          %s332 = smul.u32 2, %s30
          %s334 = ssub.s32 16384, 16384
          %335 = vsyncadd %s328, %s334
          %s336 = smul.addr %s332, 128
          %s337 = scalar_lea.hbm %s4, %s336
          %s338 = sshll.u32 %s331, 4
          %s339 = int_to_ptr.vmem [resolvable:$true] %s338
          %344 = dma.hbm_to_vmem [thread:$0]  %s337, 16384, %s339, %s328, 512, 256, 16
        $region36: #{llm_block_forward.2} parent=27 // pred_fallthru
          _
        // Predicated region
        $region37: #{llm_block_forward.2} parent=27 // pred_check
          %p345 = pneg %p169
        $region38: #{llm_block_forward.2} parent=27 // pred_check_branch
          %347 = sbr.rel (%p345) target = $region40
        $region39: #{llm_block_forward.2} parent=27 // pred_region
          %s348 = sand.u32 %s22, 1
          %s349 = scalar_lea.sflag [#allocation4], %s348
          %s350 = sand.u32 %s159, 1
          %s351 = smul.addr %s350, 512
          %s352 = scalar_lea.vmem [#allocation12], %s351
          %s354 = ssub.s32 8192, 8192
          %355 = vsyncadd %s349, %s354
          %s356 = smul.addr %s30, 128
          %s357 = scalar_lea.hbm %s5, %s356
          %s358 = sshll.u32 %s352, 4
          %s359 = int_to_ptr.vmem [resolvable:$true] %s358
          %364 = dma.hbm_to_vmem [thread:$0]  %s357, 8192, %s359, %s349, 256, 128, 8
        $region40: #{llm_block_forward.2} parent=27 // pred_fallthru
          _
        // Predicated region
        $region41: #{llm_block_forward.2} parent=27 // pred_check
          %p365 = pneg %p195
        $region42: #{llm_block_forward.2} parent=27 // pred_check_branch
          %367 = sbr.rel (%p365) target = $region44
        $region43: #{llm_block_forward.2} parent=27 // pred_region
          %s368 = sand.u32 %s22, 1
          %s369 = scalar_lea.sflag [#allocation4], %s368
          %s370 = sand.u32 %s185, 1
          %s371 = smul.addr %s370, 512
          %s372 = scalar_lea.vmem [#allocation13], %s371
          %s374 = ssub.s32 8192, 8192
          %375 = vsyncadd %s369, %s374
          %s376 = smul.addr %s30, 128
          %s377 = scalar_lea.hbm %s6, %s376
          %s378 = sshll.u32 %s372, 4
          %s379 = int_to_ptr.vmem [resolvable:$true] %s378
          %384 = dma.hbm_to_vmem [thread:$0]  %s377, 8192, %s379, %s369, 256, 128, 8
        $region44: #{llm_block_forward.2} parent=27 // pred_fallthru
          _
        // Predicated region
        $region45: #{llm_block_forward.2} parent=27 // pred_check
          %p385 = pneg %p221
        $region46: #{llm_block_forward.2} parent=27 // pred_check_branch
          %387 = sbr.rel (%p385) target = $region48
        $region47: #{llm_block_forward.2} parent=27 // pred_region
          %s388 = sand.u32 %s22, 1
          %s389 = scalar_lea.sflag [#allocation4], %s388
          %s390 = sand.u32 %s211, 1
          %s391 = smul.addr %s390, 1024
          %s392 = scalar_lea.vmem [#allocation14], %s391
          %s393 = smul.u32 32, %s30
          %s395 = ssub.s32 16384, 16384
          %396 = vsyncadd %s389, %s395
          %s397 = smul.addr %s393, 4
          %s398 = smul.addr %s397, 128
          %s399 = scalar_lea.hbm %s7, %s398
          %s400 = sshll.u32 %s392, 4
          %s401 = int_to_ptr.vmem [resolvable:$true] %s400
          %406 = dma.hbm_to_vmem [thread:$0]  %s399, 16384, %s401, %s389, 512, 512, 32
        $region48: #{llm_block_forward.2} parent=27 // pred_fallthru
          _
      $region28: #{llm_block_forward.2} parent=5 // pred_fallthru
        _
      %p407 = scmp.le.s32.totalorder 1, %s22
      %p408 = scmp.lt.s32.totalorder %s22, 5
      %p409 = pnand %p407, %p408
      %p410 = pneg %p409
      // Predicated region
      $region49: #{llm_block_forward.2} parent=5 // pred_check
        _
      $region50: #{llm_block_forward.2} parent=5 // pred_check_branch
        %412 = sbr.rel (%p409) target = $region52
      $region51: #{llm_block_forward.2} parent=5 // pred_region
        %s413 = ssub.s32 %s22, 1
        %s414 = sand.u32 %s27, 1
        %s415 = scalar_lea.sflag [#allocation4], %s414
        %s416 = sand.u32 %s47, 1
        %s417 = smul.addr %s416, 32
        %s418 = scalar_lea.vmem [#allocation3], %s417
        // Predicated region
        $region53: #{llm_block_forward.2} parent=51 // pred_check
          %p419 = pneg %p60
        $region54: #{llm_block_forward.2} parent=51 // pred_check_branch
          %421 = sbr.rel (%p419) target = $region56
        $region55: #{llm_block_forward.2} parent=51 // pred_region
          %422 = dma.done %s415, 512
        $region56: #{llm_block_forward.2} parent=51 // pred_fallthru
          _
        // Predicated region
        $region57: #{llm_block_forward.2} parent=51 // pred_check
          %p423 = pneg %p81
        $region58: #{llm_block_forward.2} parent=51 // pred_check_branch
          %425 = sbr.rel (%p423) target = $region60
        $region59: #{llm_block_forward.2} parent=51 // pred_region
          %426 = dma.done [#allocation7], 64
        $region60: #{llm_block_forward.2} parent=51 // pred_fallthru
          _
        // Predicated region
        $region61: #{llm_block_forward.2} parent=51 // pred_check
          %p427 = pneg %p102
        $region62: #{llm_block_forward.2} parent=51 // pred_check_branch
          %429 = sbr.rel (%p427) target = $region64
        $region63: #{llm_block_forward.2} parent=51 // pred_region
          %430 = dma.done [#allocation7], 128
        $region64: #{llm_block_forward.2} parent=51 // pred_fallthru
          _
        // Predicated region
        $region65: #{llm_block_forward.2} parent=51 // pred_check
          %p431 = pneg %p123
        $region66: #{llm_block_forward.2} parent=51 // pred_check_branch
          %433 = sbr.rel (%p431) target = $region68
        $region67: #{llm_block_forward.2} parent=51 // pred_region
          %434 = dma.done [#allocation10], 128
        $region68: #{llm_block_forward.2} parent=51 // pred_fallthru
          _
        %s435 = sand.u32 %s27, 1
        %s436 = scalar_lea.sflag [#allocation4], %s435
        %s437 = sand.u32 %s136, 1
        %s438 = smul.addr %s437, 1024
        %s439 = scalar_lea.vmem [#allocation11], %s438
        // Predicated region
        $region69: #{llm_block_forward.2} parent=51 // pred_check
          %p440 = pneg %p149
        $region70: #{llm_block_forward.2} parent=51 // pred_check_branch
          %442 = sbr.rel (%p440) target = $region72
        $region71: #{llm_block_forward.2} parent=51 // pred_region
          %443 = dma.done %s436, 16384
        $region72: #{llm_block_forward.2} parent=51 // pred_fallthru
          _
        %s444 = sand.u32 %s27, 1
        %s445 = scalar_lea.sflag [#allocation4], %s444
        %s446 = sand.u32 %s162, 1
        %s447 = smul.addr %s446, 512
        %s448 = scalar_lea.vmem [#allocation12], %s447
        // Predicated region
        $region73: #{llm_block_forward.2} parent=51 // pred_check
          %p449 = pneg %p175
        $region74: #{llm_block_forward.2} parent=51 // pred_check_branch
          %451 = sbr.rel (%p449) target = $region76
        $region75: #{llm_block_forward.2} parent=51 // pred_region
          %452 = dma.done %s445, 8192
        $region76: #{llm_block_forward.2} parent=51 // pred_fallthru
          _
        %s453 = sand.u32 %s27, 1
        %s454 = scalar_lea.sflag [#allocation4], %s453
        %s455 = sand.u32 %s188, 1
        %s456 = smul.addr %s455, 512
        %s457 = scalar_lea.vmem [#allocation13], %s456
        // Predicated region
        $region77: #{llm_block_forward.2} parent=51 // pred_check
          %p458 = pneg %p201
        $region78: #{llm_block_forward.2} parent=51 // pred_check_branch
          %460 = sbr.rel (%p458) target = $region80
        $region79: #{llm_block_forward.2} parent=51 // pred_region
          %461 = dma.done %s454, 8192
        $region80: #{llm_block_forward.2} parent=51 // pred_fallthru
          _
        %s462 = sand.u32 %s27, 1
        %s463 = scalar_lea.sflag [#allocation4], %s462
        %s464 = sand.u32 %s214, 1
        %s465 = smul.addr %s464, 1024
        %s466 = scalar_lea.vmem [#allocation14], %s465
        // Predicated region
        $region81: #{llm_block_forward.2} parent=51 // pred_check
          %p467 = pneg %p227
        $region82: #{llm_block_forward.2} parent=51 // pred_check_branch
          %469 = sbr.rel (%p467) target = $region84
        $region83: #{llm_block_forward.2} parent=51 // pred_region
          %470 = dma.done %s463, 16384
        $region84: #{llm_block_forward.2} parent=51 // pred_fallthru
          _
        %s471 = sand.u32 %s27, 1
        %s472 = scalar_lea.sflag [#allocation4], %s471
        %s473 = sand.u32 %s47, 1
        %s474 = smul.addr %s473, 32
        %s475 = scalar_lea.vmem [#allocation3], %s474
        %p476 = pneg %p60
        %p477 = pneg %p57
        %p478 = pneg %p81
        %p479 = pneg %p78
        %p480 = pneg %p102
        %p481 = pneg %p99
        %p482 = pneg %p123
        %p483 = pneg %p120
        %s484 = sand.u32 %s27, 1
        %s485 = scalar_lea.sflag [#allocation4], %s484
        %s486 = sand.u32 %s136, 1
        %s487 = smul.addr %s486, 1024
        %s488 = scalar_lea.vmem [#allocation11], %s487
        %p489 = pneg %p149
        %p490 = pneg %p146
        %s491 = sand.u32 %s27, 1
        %s492 = scalar_lea.sflag [#allocation4], %s491
        %s493 = sand.u32 %s162, 1
        %s494 = smul.addr %s493, 512
        %s495 = scalar_lea.vmem [#allocation12], %s494
        %p496 = pneg %p175
        %p497 = pneg %p172
        %s498 = sand.u32 %s27, 1
        %s499 = scalar_lea.sflag [#allocation4], %s498
        %s500 = sand.u32 %s188, 1
        %s501 = smul.addr %s500, 512
        %s502 = scalar_lea.vmem [#allocation13], %s501
        %p503 = pneg %p201
        %p504 = pneg %p198
        %s505 = sand.u32 %s27, 1
        %s506 = scalar_lea.sflag [#allocation4], %s505
        %s507 = sand.u32 %s214, 1
        %s508 = smul.addr %s507, 1024
        %s509 = scalar_lea.vmem [#allocation14], %s508
        %p510 = pneg %p227
        %p511 = pneg %p224
        %p512 = pneg %p253
        %p513 = pneg %p250
        %s514 = sand.u32 %s240, 1
        %s515 = scalar_lea.sflag [#allocation5], %s514
        %s516 = sand.u32 %s240, 1
        %s517 = smul.addr %s516, 32
        %s518 = scalar_lea.vmem [#allocation15], %s517
        %s519 = smul.u32 2, %s32
        %s520 = smul.u32 32, %s32
        %v521 = vld [vmem:[%s418] sm:$0xff]
        %v522 = vld [vmem:[%s418 + $0x8] sm:$0xff]
        %v523 = vld [vmem:[%s418 + $0x10] sm:$0xff]
        %v524 = vld [vmem:[%s418 + $0x18] sm:$0xff]
        %v525 = vmul.f32 %v521, %v521
        %v526 = vmul.f32 %v522, %v522
        %v527 = vmul.f32 %v523, %v523
        %v528 = vmul.f32 %v524, %v524
        %v529 = vadd.f32 %v525, %v526
        %v530 = vadd.f32 %v529, %v527
        %v531 = vadd.f32 %v530, %v528
        %532 = vadd.xlane.f32.xlu0 %v531
        %v533 = vpop.xlane.xlu0 %532
        %v534 = vrcp.pop 512.0
        %v535 = vmul.f32 %v533, %v534
        %v536 = vadd.f32 %v535, 1e-05
        %v537 = vrsqrt.pop %v536
        %v538 = vmul.f32 %v521, %v537
        %v539 = vmul.f32 %v522, %v537
        %v540 = vmul.f32 %v523, %v537
        %v541 = vmul.f32 %v524, %v537
        %v542 = vld [vmem:[#allocation6] sm:$0xf]
        %v544 = vlaneseq
        %v545 = vshrl.u32 %v544, 7
        %v546 = vsub.s32 0, %v545
        %v547 = vrot.slane %v542, %v546
        %v548 = vlaneseq
        %v549 = vshrl.u32 %v548, 7
        %v550 = vsub.s32 1, %v549
        %v551 = vrot.slane %v542, %v550
        %v552 = vlaneseq
        %v553 = vshrl.u32 %v552, 7
        %v554 = vsub.s32 2, %v553
        %v555 = vrot.slane %v542, %v554
        %v556 = vlaneseq
        %v557 = vshrl.u32 %v556, 7
        %v558 = vsub.s32 3, %v557
        %v559 = vrot.slane %v542, %v558
        %v564 = vmul.f32 %v538, %v547
        %v565 = vmul.f32 %v539, %v551
        %v566 = vmul.f32 %v540, %v555
        %v567 = vmul.f32 %v541, %v559
        %p568 = scmp.eq.s32.totalorder %s32, 0
        // Predicated region
        $region85: #{llm_block_forward.2} parent=51 // pred_check
          %p569 = pneg %p568
        $region86: #{llm_block_forward.2} parent=51 // pred_check_branch
          %571 = sbr.rel (%p569) target = $region88
        $region87: #{llm_block_forward.2} parent=51 // pred_region
          %572 = vst [vmem:[#allocation2] sm:$0xff] %v521
          %573 = vst [vmem:[#allocation2 + $0x8] sm:$0xff] %v522
          %574 = vst [vmem:[#allocation2 + $0x10] sm:$0xff] %v523
          %575 = vst [vmem:[#allocation2 + $0x18] sm:$0xff] %v524
        $region88: #{llm_block_forward.2} parent=51 // pred_fallthru
          _
        %v576 = vld [vmem:[%s439] sm:$0xff]
        %v577 = vld [vmem:[%s439 + $0x8] sm:$0xff]
        %v578 = vld [vmem:[%s439 + $0x10] sm:$0xff]
        %v579 = vld [vmem:[%s439 + $0x18] sm:$0xff]
        %v580 = vld [vmem:[%s439 + $0x20] sm:$0xff]
        %v581 = vld [vmem:[%s439 + $0x28] sm:$0xff]
        %v582 = vld [vmem:[%s439 + $0x30] sm:$0xff]
        %v583 = vld [vmem:[%s439 + $0x38] sm:$0xff]
        %v584 = vld [vmem:[%s439 + $0x40] sm:$0xff]
        %v585 = vld [vmem:[%s439 + $0x48] sm:$0xff]
        %v586 = vld [vmem:[%s439 + $0x50] sm:$0xff]
        %v587 = vld [vmem:[%s439 + $0x58] sm:$0xff]
        %v588 = vld [vmem:[%s439 + $0x60] sm:$0xff]
        %v589 = vld [vmem:[%s439 + $0x68] sm:$0xff]
        %v590 = vld [vmem:[%s439 + $0x70] sm:$0xff]
        %v591 = vld [vmem:[%s439 + $0x78] sm:$0xff]
        %v592 = vld [vmem:[%s439 + $0x80] sm:$0xff]
        %v593 = vld [vmem:[%s439 + $0x88] sm:$0xff]
        %v594 = vld [vmem:[%s439 + $0x90] sm:$0xff]
        %v595 = vld [vmem:[%s439 + $0x98] sm:$0xff]
        %v596 = vld [vmem:[%s439 + $0xa0] sm:$0xff]
        %v597 = vld [vmem:[%s439 + $0xa8] sm:$0xff]
        %v598 = vld [vmem:[%s439 + $0xb0] sm:$0xff]
        %v599 = vld [vmem:[%s439 + $0xb8] sm:$0xff]
        %v600 = vld [vmem:[%s439 + $0xc0] sm:$0xff]
        %v601 = vld [vmem:[%s439 + $0xc8] sm:$0xff]
        %v602 = vld [vmem:[%s439 + $0xd0] sm:$0xff]
        %v603 = vld [vmem:[%s439 + $0xd8] sm:$0xff]
        %v604 = vld [vmem:[%s439 + $0xe0] sm:$0xff]
        %v605 = vld [vmem:[%s439 + $0xe8] sm:$0xff]
        %v606 = vld [vmem:[%s439 + $0xf0] sm:$0xff]
        %v607 = vld [vmem:[%s439 + $0xf8] sm:$0xff]
        %v608 = vld [vmem:[%s439 + $0x100] sm:$0xff]
        %v609 = vld [vmem:[%s439 + $0x108] sm:$0xff]
        %v610 = vld [vmem:[%s439 + $0x110] sm:$0xff]
        %v611 = vld [vmem:[%s439 + $0x118] sm:$0xff]
        %v612 = vld [vmem:[%s439 + $0x120] sm:$0xff]
        %v613 = vld [vmem:[%s439 + $0x128] sm:$0xff]
        %v614 = vld [vmem:[%s439 + $0x130] sm:$0xff]
        %v615 = vld [vmem:[%s439 + $0x138] sm:$0xff]
        %v616 = vld [vmem:[%s439 + $0x140] sm:$0xff]
        %v617 = vld [vmem:[%s439 + $0x148] sm:$0xff]
        %v618 = vld [vmem:[%s439 + $0x150] sm:$0xff]
        %v619 = vld [vmem:[%s439 + $0x158] sm:$0xff]
        %v620 = vld [vmem:[%s439 + $0x160] sm:$0xff]
        %v621 = vld [vmem:[%s439 + $0x168] sm:$0xff]
        %v622 = vld [vmem:[%s439 + $0x170] sm:$0xff]
        %v623 = vld [vmem:[%s439 + $0x178] sm:$0xff]
        %v624 = vld [vmem:[%s439 + $0x180] sm:$0xff]
        %v625 = vld [vmem:[%s439 + $0x188] sm:$0xff]
        %v626 = vld [vmem:[%s439 + $0x190] sm:$0xff]
        %v627 = vld [vmem:[%s439 + $0x198] sm:$0xff]
        %v628 = vld [vmem:[%s439 + $0x1a0] sm:$0xff]
        %v629 = vld [vmem:[%s439 + $0x1a8] sm:$0xff]
        %v630 = vld [vmem:[%s439 + $0x1b0] sm:$0xff]
        %v631 = vld [vmem:[%s439 + $0x1b8] sm:$0xff]
        %v632 = vld [vmem:[%s439 + $0x1c0] sm:$0xff]
        %v633 = vld [vmem:[%s439 + $0x1c8] sm:$0xff]
        %v634 = vld [vmem:[%s439 + $0x1d0] sm:$0xff]
        %v635 = vld [vmem:[%s439 + $0x1d8] sm:$0xff]
        %v636 = vld [vmem:[%s439 + $0x1e0] sm:$0xff]
        %v637 = vld [vmem:[%s439 + $0x1e8] sm:$0xff]
        %v638 = vld [vmem:[%s439 + $0x1f0] sm:$0xff]
        %v639 = vld [vmem:[%s439 + $0x1f8] sm:$0xff]
        %v640 = vld [vmem:[%s439 + $0x200] sm:$0xff]
        %v641 = vld [vmem:[%s439 + $0x208] sm:$0xff]
        %v642 = vld [vmem:[%s439 + $0x210] sm:$0xff]
        %v643 = vld [vmem:[%s439 + $0x218] sm:$0xff]
        %v644 = vld [vmem:[%s439 + $0x220] sm:$0xff]
        %v645 = vld [vmem:[%s439 + $0x228] sm:$0xff]
        %v646 = vld [vmem:[%s439 + $0x230] sm:$0xff]
        %v647 = vld [vmem:[%s439 + $0x238] sm:$0xff]
        %v648 = vld [vmem:[%s439 + $0x240] sm:$0xff]
        %v649 = vld [vmem:[%s439 + $0x248] sm:$0xff]
        %v650 = vld [vmem:[%s439 + $0x250] sm:$0xff]
        %v651 = vld [vmem:[%s439 + $0x258] sm:$0xff]
        %v652 = vld [vmem:[%s439 + $0x260] sm:$0xff]
        %v653 = vld [vmem:[%s439 + $0x268] sm:$0xff]
        %v654 = vld [vmem:[%s439 + $0x270] sm:$0xff]
        %v655 = vld [vmem:[%s439 + $0x278] sm:$0xff]
        %v656 = vld [vmem:[%s439 + $0x280] sm:$0xff]
        %v657 = vld [vmem:[%s439 + $0x288] sm:$0xff]
        %v658 = vld [vmem:[%s439 + $0x290] sm:$0xff]
        %v659 = vld [vmem:[%s439 + $0x298] sm:$0xff]
        %v660 = vld [vmem:[%s439 + $0x2a0] sm:$0xff]
        %v661 = vld [vmem:[%s439 + $0x2a8] sm:$0xff]
        %v662 = vld [vmem:[%s439 + $0x2b0] sm:$0xff]
        %v663 = vld [vmem:[%s439 + $0x2b8] sm:$0xff]
        %v664 = vld [vmem:[%s439 + $0x2c0] sm:$0xff]
        %v665 = vld [vmem:[%s439 + $0x2c8] sm:$0xff]
        %v666 = vld [vmem:[%s439 + $0x2d0] sm:$0xff]
        %v667 = vld [vmem:[%s439 + $0x2d8] sm:$0xff]
        %v668 = vld [vmem:[%s439 + $0x2e0] sm:$0xff]
        %v669 = vld [vmem:[%s439 + $0x2e8] sm:$0xff]
        %v670 = vld [vmem:[%s439 + $0x2f0] sm:$0xff]
        %v671 = vld [vmem:[%s439 + $0x2f8] sm:$0xff]
        %v672 = vld [vmem:[%s439 + $0x300] sm:$0xff]
        %v673 = vld [vmem:[%s439 + $0x308] sm:$0xff]
        %v674 = vld [vmem:[%s439 + $0x310] sm:$0xff]
        %v675 = vld [vmem:[%s439 + $0x318] sm:$0xff]
        %v676 = vld [vmem:[%s439 + $0x320] sm:$0xff]
        %v677 = vld [vmem:[%s439 + $0x328] sm:$0xff]
        %v678 = vld [vmem:[%s439 + $0x330] sm:$0xff]
        %v679 = vld [vmem:[%s439 + $0x338] sm:$0xff]
        %v680 = vld [vmem:[%s439 + $0x340] sm:$0xff]
        %v681 = vld [vmem:[%s439 + $0x348] sm:$0xff]
        %v682 = vld [vmem:[%s439 + $0x350] sm:$0xff]
        %v683 = vld [vmem:[%s439 + $0x358] sm:$0xff]
        %v684 = vld [vmem:[%s439 + $0x360] sm:$0xff]
        %v685 = vld [vmem:[%s439 + $0x368] sm:$0xff]
        %v686 = vld [vmem:[%s439 + $0x370] sm:$0xff]
        %v687 = vld [vmem:[%s439 + $0x378] sm:$0xff]
        %v688 = vld [vmem:[%s439 + $0x380] sm:$0xff]
        %v689 = vld [vmem:[%s439 + $0x388] sm:$0xff]
        %v690 = vld [vmem:[%s439 + $0x390] sm:$0xff]
        %v691 = vld [vmem:[%s439 + $0x398] sm:$0xff]
        %v692 = vld [vmem:[%s439 + $0x3a0] sm:$0xff]
        %v693 = vld [vmem:[%s439 + $0x3a8] sm:$0xff]
        %v694 = vld [vmem:[%s439 + $0x3b0] sm:$0xff]
        %v695 = vld [vmem:[%s439 + $0x3b8] sm:$0xff]
        %v696 = vld [vmem:[%s439 + $0x3c0] sm:$0xff]
        %v697 = vld [vmem:[%s439 + $0x3c8] sm:$0xff]
        %v698 = vld [vmem:[%s439 + $0x3d0] sm:$0xff]
        %v699 = vld [vmem:[%s439 + $0x3d8] sm:$0xff]
        %v700 = vld [vmem:[%s439 + $0x3e0] sm:$0xff]
        %v701 = vld [vmem:[%s439 + $0x3e8] sm:$0xff]
        %v702 = vld [vmem:[%s439 + $0x3f0] sm:$0xff]
        %v703 = vld [vmem:[%s439 + $0x3f8] sm:$0xff]
        %704 = vmatprep.subr.mxu0 %v577
        %705 = vmatpush1.msra.mxu0 %v576
        %706 = vmatprep.subr.mxu0 %v579
        %707 = vmatpush1.msra.mxu0 %v578
        %708 = vmatprep.subr.mxu0 %v581
        %709 = vmatpush1.msra.mxu0 %v580
        %710 = vmatprep.subr.mxu0 %v583
        %711 = vmatpush1.msra.mxu0 %v582
        %712 = vmatprep.subr.mxu0 %v585
        %713 = vmatpush1.msra.mxu0 %v584
        %714 = vmatprep.subr.mxu0 %v587
        %715 = vmatpush1.msra.mxu0 %v586
        %716 = vmatprep.subr.mxu0 %v589
        %717 = vmatpush1.msra.mxu0 %v588
        %718 = vmatprep.subr.mxu0 %v591
        %719 = vmatpush1.msra.mxu0 %v590
        %720 = vmatprep.subr.mxu0 %v593
        %721 = vmatpush1.msra.mxu0 %v592
        %722 = vmatprep.subr.mxu0 %v595
        %723 = vmatpush1.msra.mxu0 %v594
        %724 = vmatprep.subr.mxu0 %v597
        %725 = vmatpush1.msra.mxu0 %v596
        %726 = vmatprep.subr.mxu0 %v599
        %727 = vmatpush1.msra.mxu0 %v598
        %728 = vmatprep.subr.mxu0 %v601
        %729 = vmatpush1.msra.mxu0 %v600
        %730 = vmatprep.subr.mxu0 %v603
        %731 = vmatpush1.msra.mxu0 %v602
        %732 = vmatprep.subr.mxu0 %v605
        %733 = vmatpush1.msra.mxu0 %v604
        %734 = vmatprep.subr.mxu0 %v607
        %735 = vmatpush1.msra.mxu0 %v606
        %736 = vmatprep.subr.mxu0 %v609
        %737 = vmatpush1.msra.mxu0 %v608
        %738 = vmatprep.subr.mxu0 %v611
        %739 = vmatpush1.msra.mxu0 %v610
        %740 = vmatprep.subr.mxu0 %v613
        %741 = vmatpush1.msra.mxu0 %v612
        %742 = vmatprep.subr.mxu0 %v615
        %743 = vmatpush1.msra.mxu0 %v614
        %744 = vmatprep.subr.mxu0 %v617
        %745 = vmatpush1.msra.mxu0 %v616
        %746 = vmatprep.subr.mxu0 %v619
        %747 = vmatpush1.msra.mxu0 %v618
        %748 = vmatprep.subr.mxu0 %v621
        %749 = vmatpush1.msra.mxu0 %v620
        %750 = vmatprep.subr.mxu0 %v623
        %751 = vmatpush1.msra.mxu0 %v622
        %752 = vmatprep.subr.mxu0 %v625
        %753 = vmatpush1.msra.mxu0 %v624
        %754 = vmatprep.subr.mxu0 %v627
        %755 = vmatpush1.msra.mxu0 %v626
        %756 = vmatprep.subr.mxu0 %v629
        %757 = vmatpush1.msra.mxu0 %v628
        %758 = vmatprep.subr.mxu0 %v631
        %759 = vmatpush1.msra.mxu0 %v630
        %760 = vmatprep.subr.mxu0 %v633
        %761 = vmatpush1.msra.mxu0 %v632
        %762 = vmatprep.subr.mxu0 %v635
        %763 = vmatpush1.msra.mxu0 %v634
        %764 = vmatprep.subr.mxu0 %v637
        %765 = vmatpush1.msra.mxu0 %v636
        %766 = vmatprep.subr.mxu0 %v639
        %767 = vmatpush1.msra.mxu0 %v638
        %768 = vmatprep.mubr.f32.mxu0 %v565
        %769 = vmatmul.mubr.f32.gmra.mrb[0].mxu0 %v564
        %v770 = vpop.f32.mrb[0].mxu0
        %v771 = vadd.f32 0.0, %v770
        %v772 = vpop.f32.mrb[0].mxu0
        %v773 = vadd.f32 0.0, %v772
        %774 = vdwg.mxu0
        %775 = vmatprep.subr.mxu0 %v641
        %776 = vmatpush1.msra.mxu0 %v640
        %777 = vmatprep.subr.mxu0 %v643
        %778 = vmatpush1.msra.mxu0 %v642
        %779 = vmatprep.subr.mxu0 %v645
        %780 = vmatpush1.msra.mxu0 %v644
        %781 = vmatprep.subr.mxu0 %v647
        %782 = vmatpush1.msra.mxu0 %v646
        %783 = vmatprep.subr.mxu0 %v649
        %784 = vmatpush1.msra.mxu0 %v648
        %785 = vmatprep.subr.mxu0 %v651
        %786 = vmatpush1.msra.mxu0 %v650
        %787 = vmatprep.subr.mxu0 %v653
        %788 = vmatpush1.msra.mxu0 %v652
        %789 = vmatprep.subr.mxu0 %v655
        %790 = vmatpush1.msra.mxu0 %v654
        %791 = vmatprep.subr.mxu0 %v657
        %792 = vmatpush1.msra.mxu0 %v656
        %793 = vmatprep.subr.mxu0 %v659
        %794 = vmatpush1.msra.mxu0 %v658
        %795 = vmatprep.subr.mxu0 %v661
        %796 = vmatpush1.msra.mxu0 %v660
        %797 = vmatprep.subr.mxu0 %v663
        %798 = vmatpush1.msra.mxu0 %v662
        %799 = vmatprep.subr.mxu0 %v665
        %800 = vmatpush1.msra.mxu0 %v664
        %801 = vmatprep.subr.mxu0 %v667
        %802 = vmatpush1.msra.mxu0 %v666
        %803 = vmatprep.subr.mxu0 %v669
        %804 = vmatpush1.msra.mxu0 %v668
        %805 = vmatprep.subr.mxu0 %v671
        %806 = vmatpush1.msra.mxu0 %v670
        %807 = vmatprep.subr.mxu0 %v673
        %808 = vmatpush1.msra.mxu0 %v672
        %809 = vmatprep.subr.mxu0 %v675
        %810 = vmatpush1.msra.mxu0 %v674
        %811 = vmatprep.subr.mxu0 %v677
        %812 = vmatpush1.msra.mxu0 %v676
        %813 = vmatprep.subr.mxu0 %v679
        %814 = vmatpush1.msra.mxu0 %v678
        %815 = vmatprep.subr.mxu0 %v681
        %816 = vmatpush1.msra.mxu0 %v680
        %817 = vmatprep.subr.mxu0 %v683
        %818 = vmatpush1.msra.mxu0 %v682
        %819 = vmatprep.subr.mxu0 %v685
        %820 = vmatpush1.msra.mxu0 %v684
        %821 = vmatprep.subr.mxu0 %v687
        %822 = vmatpush1.msra.mxu0 %v686
        %823 = vmatprep.subr.mxu0 %v689
        %824 = vmatpush1.msra.mxu0 %v688
        %825 = vmatprep.subr.mxu0 %v691
        %826 = vmatpush1.msra.mxu0 %v690
        %827 = vmatprep.subr.mxu0 %v693
        %828 = vmatpush1.msra.mxu0 %v692
        %829 = vmatprep.subr.mxu0 %v695
        %830 = vmatpush1.msra.mxu0 %v694
        %831 = vmatprep.subr.mxu0 %v697
        %832 = vmatpush1.msra.mxu0 %v696
        %833 = vmatprep.subr.mxu0 %v699
        %834 = vmatpush1.msra.mxu0 %v698
        %835 = vmatprep.subr.mxu0 %v701
        %836 = vmatpush1.msra.mxu0 %v700
        %837 = vmatprep.subr.mxu0 %v703
        %838 = vmatpush1.msra.mxu0 %v702
        %839 = vmatprep.mubr.f32.mxu0 %v567
        %840 = vmatmul.mubr.f32.gmra.mrb[0].mxu0 %v566
        %v841 = vpop.f32.mrb[0].mxu0
        %v842 = vadd.f32 %v771, %v841
        %v843 = vpop.f32.mrb[0].mxu0
        %v844 = vadd.f32 %v773, %v843
        %845 = vdwg.mxu0
        %v846 = vld [vmem:[%s448] sm:$0xff]
        %v847 = vld [vmem:[%s448 + $0x8] sm:$0xff]
        %v848 = vld [vmem:[%s448 + $0x10] sm:$0xff]
        %v849 = vld [vmem:[%s448 + $0x18] sm:$0xff]
        %v850 = vld [vmem:[%s448 + $0x20] sm:$0xff]
        %v851 = vld [vmem:[%s448 + $0x28] sm:$0xff]
        %v852 = vld [vmem:[%s448 + $0x30] sm:$0xff]
        %v853 = vld [vmem:[%s448 + $0x38] sm:$0xff]
        %v854 = vld [vmem:[%s448 + $0x40] sm:$0xff]
        %v855 = vld [vmem:[%s448 + $0x48] sm:$0xff]
        %v856 = vld [vmem:[%s448 + $0x50] sm:$0xff]
        %v857 = vld [vmem:[%s448 + $0x58] sm:$0xff]
        %v858 = vld [vmem:[%s448 + $0x60] sm:$0xff]
        %v859 = vld [vmem:[%s448 + $0x68] sm:$0xff]
        %v860 = vld [vmem:[%s448 + $0x70] sm:$0xff]
        %v861 = vld [vmem:[%s448 + $0x78] sm:$0xff]
        %v862 = vld [vmem:[%s448 + $0x80] sm:$0xff]
        %v863 = vld [vmem:[%s448 + $0x88] sm:$0xff]
        %v864 = vld [vmem:[%s448 + $0x90] sm:$0xff]
        %v865 = vld [vmem:[%s448 + $0x98] sm:$0xff]
        %v866 = vld [vmem:[%s448 + $0xa0] sm:$0xff]
        %v867 = vld [vmem:[%s448 + $0xa8] sm:$0xff]
        %v868 = vld [vmem:[%s448 + $0xb0] sm:$0xff]
        %v869 = vld [vmem:[%s448 + $0xb8] sm:$0xff]
        %v870 = vld [vmem:[%s448 + $0xc0] sm:$0xff]
        %v871 = vld [vmem:[%s448 + $0xc8] sm:$0xff]
        %v872 = vld [vmem:[%s448 + $0xd0] sm:$0xff]
        %v873 = vld [vmem:[%s448 + $0xd8] sm:$0xff]
        %v874 = vld [vmem:[%s448 + $0xe0] sm:$0xff]
        %v875 = vld [vmem:[%s448 + $0xe8] sm:$0xff]
        %v876 = vld [vmem:[%s448 + $0xf0] sm:$0xff]
        %v877 = vld [vmem:[%s448 + $0xf8] sm:$0xff]
        %v878 = vld [vmem:[%s448 + $0x100] sm:$0xff]
        %v879 = vld [vmem:[%s448 + $0x108] sm:$0xff]
        %v880 = vld [vmem:[%s448 + $0x110] sm:$0xff]
        %v881 = vld [vmem:[%s448 + $0x118] sm:$0xff]
        %v882 = vld [vmem:[%s448 + $0x120] sm:$0xff]
        %v883 = vld [vmem:[%s448 + $0x128] sm:$0xff]
        %v884 = vld [vmem:[%s448 + $0x130] sm:$0xff]
        %v885 = vld [vmem:[%s448 + $0x138] sm:$0xff]
        %v886 = vld [vmem:[%s448 + $0x140] sm:$0xff]
        %v887 = vld [vmem:[%s448 + $0x148] sm:$0xff]
        %v888 = vld [vmem:[%s448 + $0x150] sm:$0xff]
        %v889 = vld [vmem:[%s448 + $0x158] sm:$0xff]
        %v890 = vld [vmem:[%s448 + $0x160] sm:$0xff]
        %v891 = vld [vmem:[%s448 + $0x168] sm:$0xff]
        %v892 = vld [vmem:[%s448 + $0x170] sm:$0xff]
        %v893 = vld [vmem:[%s448 + $0x178] sm:$0xff]
        %v894 = vld [vmem:[%s448 + $0x180] sm:$0xff]
        %v895 = vld [vmem:[%s448 + $0x188] sm:$0xff]
        %v896 = vld [vmem:[%s448 + $0x190] sm:$0xff]
        %v897 = vld [vmem:[%s448 + $0x198] sm:$0xff]
        %v898 = vld [vmem:[%s448 + $0x1a0] sm:$0xff]
        %v899 = vld [vmem:[%s448 + $0x1a8] sm:$0xff]
        %v900 = vld [vmem:[%s448 + $0x1b0] sm:$0xff]
        %v901 = vld [vmem:[%s448 + $0x1b8] sm:$0xff]
        %v902 = vld [vmem:[%s448 + $0x1c0] sm:$0xff]
        %v903 = vld [vmem:[%s448 + $0x1c8] sm:$0xff]
        %v904 = vld [vmem:[%s448 + $0x1d0] sm:$0xff]
        %v905 = vld [vmem:[%s448 + $0x1d8] sm:$0xff]
        %v906 = vld [vmem:[%s448 + $0x1e0] sm:$0xff]
        %v907 = vld [vmem:[%s448 + $0x1e8] sm:$0xff]
        %v908 = vld [vmem:[%s448 + $0x1f0] sm:$0xff]
        %v909 = vld [vmem:[%s448 + $0x1f8] sm:$0xff]
        %910 = vmatprep.subr.mxu0 0.0
        %911 = vmatpush1.msra.mxu0 %v846
        %912 = vmatprep.subr.mxu0 0.0
        %913 = vmatpush1.msra.mxu0 %v847
        %914 = vmatprep.subr.mxu0 0.0
        %915 = vmatpush1.msra.mxu0 %v848
        %916 = vmatprep.subr.mxu0 0.0
        %917 = vmatpush1.msra.mxu0 %v849
        %918 = vmatprep.subr.mxu0 0.0
        %919 = vmatpush1.msra.mxu0 %v850
        %920 = vmatprep.subr.mxu0 0.0
        %921 = vmatpush1.msra.mxu0 %v851
        %922 = vmatprep.subr.mxu0 0.0
        %923 = vmatpush1.msra.mxu0 %v852
        %924 = vmatprep.subr.mxu0 0.0
        %925 = vmatpush1.msra.mxu0 %v853
        %926 = vmatprep.subr.mxu0 0.0
        %927 = vmatpush1.msra.mxu0 %v854
        %928 = vmatprep.subr.mxu0 0.0
        %929 = vmatpush1.msra.mxu0 %v855
        %930 = vmatprep.subr.mxu0 0.0
        %931 = vmatpush1.msra.mxu0 %v856
        %932 = vmatprep.subr.mxu0 0.0
        %933 = vmatpush1.msra.mxu0 %v857
        %934 = vmatprep.subr.mxu0 0.0
        %935 = vmatpush1.msra.mxu0 %v858
        %936 = vmatprep.subr.mxu0 0.0
        %937 = vmatpush1.msra.mxu0 %v859
        %938 = vmatprep.subr.mxu0 0.0
        %939 = vmatpush1.msra.mxu0 %v860
        %940 = vmatprep.subr.mxu0 0.0
        %941 = vmatpush1.msra.mxu0 %v861
        %942 = vmatprep.subr.mxu0 0.0
        %943 = vmatpush1.msra.mxu0 %v862
        %944 = vmatprep.subr.mxu0 0.0
        %945 = vmatpush1.msra.mxu0 %v863
        %946 = vmatprep.subr.mxu0 0.0
        %947 = vmatpush1.msra.mxu0 %v864
        %948 = vmatprep.subr.mxu0 0.0
        %949 = vmatpush1.msra.mxu0 %v865
        %950 = vmatprep.subr.mxu0 0.0
        %951 = vmatpush1.msra.mxu0 %v866
        %952 = vmatprep.subr.mxu0 0.0
        %953 = vmatpush1.msra.mxu0 %v867
        %954 = vmatprep.subr.mxu0 0.0
        %955 = vmatpush1.msra.mxu0 %v868
        %956 = vmatprep.subr.mxu0 0.0
        %957 = vmatpush1.msra.mxu0 %v869
        %958 = vmatprep.subr.mxu0 0.0
        %959 = vmatpush1.msra.mxu0 %v870
        %960 = vmatprep.subr.mxu0 0.0
        %961 = vmatpush1.msra.mxu0 %v871
        %962 = vmatprep.subr.mxu0 0.0
        %963 = vmatpush1.msra.mxu0 %v872
        %964 = vmatprep.subr.mxu0 0.0
        %965 = vmatpush1.msra.mxu0 %v873
        %966 = vmatprep.subr.mxu0 0.0
        %967 = vmatpush1.msra.mxu0 %v874
        %968 = vmatprep.subr.mxu0 0.0
        %969 = vmatpush1.msra.mxu0 %v875
        %970 = vmatprep.subr.mxu0 0.0
        %971 = vmatpush1.msra.mxu0 %v876
        %972 = vmatprep.subr.mxu0 0.0
        %973 = vmatpush1.msra.mxu0 %v877
        %974 = vmatprep.mubr.f32.mxu0 %v565
        %975 = vmatmul.mubr.f32.gmra.mrb[0].mxu0 %v564
        %v976 = vpop.f32.mrb[0].mxu0
        %v977 = vadd.f32 0.0, %v976
        %v978 = vpop.f32.mrb[0].mxu0
        %979 = vdwg.mxu0
        %980 = vmatprep.subr.mxu0 0.0
        %981 = vmatpush1.msra.mxu0 %v878
        %982 = vmatprep.subr.mxu0 0.0
        %983 = vmatpush1.msra.mxu0 %v879
        %984 = vmatprep.subr.mxu0 0.0
        %985 = vmatpush1.msra.mxu0 %v880
        %986 = vmatprep.subr.mxu0 0.0
        %987 = vmatpush1.msra.mxu0 %v881
        %988 = vmatprep.subr.mxu0 0.0
        %989 = vmatpush1.msra.mxu0 %v882
        %990 = vmatprep.subr.mxu0 0.0
        %991 = vmatpush1.msra.mxu0 %v883
        %992 = vmatprep.subr.mxu0 0.0
        %993 = vmatpush1.msra.mxu0 %v884
        %994 = vmatprep.subr.mxu0 0.0
        %995 = vmatpush1.msra.mxu0 %v885
        %996 = vmatprep.subr.mxu0 0.0
        %997 = vmatpush1.msra.mxu0 %v886
        %998 = vmatprep.subr.mxu0 0.0
        %999 = vmatpush1.msra.mxu0 %v887
        %1000 = vmatprep.subr.mxu0 0.0
        %1001 = vmatpush1.msra.mxu0 %v888
        %1002 = vmatprep.subr.mxu0 0.0
        %1003 = vmatpush1.msra.mxu0 %v889
        %1004 = vmatprep.subr.mxu0 0.0
        %1005 = vmatpush1.msra.mxu0 %v890
        %1006 = vmatprep.subr.mxu0 0.0
        %1007 = vmatpush1.msra.mxu0 %v891
        %1008 = vmatprep.subr.mxu0 0.0
        %1009 = vmatpush1.msra.mxu0 %v892
        %1010 = vmatprep.subr.mxu0 0.0
        %1011 = vmatpush1.msra.mxu0 %v893
        %1012 = vmatprep.subr.mxu0 0.0
        %1013 = vmatpush1.msra.mxu0 %v894
        %1014 = vmatprep.subr.mxu0 0.0
        %1015 = vmatpush1.msra.mxu0 %v895
        %1016 = vmatprep.subr.mxu0 0.0
        %1017 = vmatpush1.msra.mxu0 %v896
        %1018 = vmatprep.subr.mxu0 0.0
        %1019 = vmatpush1.msra.mxu0 %v897
        %1020 = vmatprep.subr.mxu0 0.0
        %1021 = vmatpush1.msra.mxu0 %v898
        %1022 = vmatprep.subr.mxu0 0.0
        %1023 = vmatpush1.msra.mxu0 %v899
        %1024 = vmatprep.subr.mxu0 0.0
        %1025 = vmatpush1.msra.mxu0 %v900
        %1026 = vmatprep.subr.mxu0 0.0
        %1027 = vmatpush1.msra.mxu0 %v901
        %1028 = vmatprep.subr.mxu0 0.0
        %1029 = vmatpush1.msra.mxu0 %v902
        %1030 = vmatprep.subr.mxu0 0.0
        %1031 = vmatpush1.msra.mxu0 %v903
        %1032 = vmatprep.subr.mxu0 0.0
        %1033 = vmatpush1.msra.mxu0 %v904
        %1034 = vmatprep.subr.mxu0 0.0
        %1035 = vmatpush1.msra.mxu0 %v905
        %1036 = vmatprep.subr.mxu0 0.0
        %1037 = vmatpush1.msra.mxu0 %v906
        %1038 = vmatprep.subr.mxu0 0.0
        %1039 = vmatpush1.msra.mxu0 %v907
        %1040 = vmatprep.subr.mxu0 0.0
        %1041 = vmatpush1.msra.mxu0 %v908
        %1042 = vmatprep.subr.mxu0 0.0
        %1043 = vmatpush1.msra.mxu0 %v909
        %1044 = vmatprep.mubr.f32.mxu0 %v567
        %1045 = vmatmul.mubr.f32.gmra.mrb[0].mxu0 %v566
        %v1046 = vpop.f32.mrb[0].mxu0
        %v1047 = vadd.f32 %v977, %v1046
        %v1048 = vpop.f32.mrb[0].mxu0
        %1049 = vdwg.mxu0
        %v1050 = vld [vmem:[%s457] sm:$0xff]
        %v1051 = vld [vmem:[%s457 + $0x8] sm:$0xff]
        %v1052 = vld [vmem:[%s457 + $0x10] sm:$0xff]
        %v1053 = vld [vmem:[%s457 + $0x18] sm:$0xff]
        %v1054 = vld [vmem:[%s457 + $0x20] sm:$0xff]
        %v1055 = vld [vmem:[%s457 + $0x28] sm:$0xff]
        %v1056 = vld [vmem:[%s457 + $0x30] sm:$0xff]
        %v1057 = vld [vmem:[%s457 + $0x38] sm:$0xff]
        %v1058 = vld [vmem:[%s457 + $0x40] sm:$0xff]
        %v1059 = vld [vmem:[%s457 + $0x48] sm:$0xff]
        %v1060 = vld [vmem:[%s457 + $0x50] sm:$0xff]
        %v1061 = vld [vmem:[%s457 + $0x58] sm:$0xff]
        %v1062 = vld [vmem:[%s457 + $0x60] sm:$0xff]
        %v1063 = vld [vmem:[%s457 + $0x68] sm:$0xff]
        %v1064 = vld [vmem:[%s457 + $0x70] sm:$0xff]
        %v1065 = vld [vmem:[%s457 + $0x78] sm:$0xff]
        %v1066 = vld [vmem:[%s457 + $0x80] sm:$0xff]
        %v1067 = vld [vmem:[%s457 + $0x88] sm:$0xff]
        %v1068 = vld [vmem:[%s457 + $0x90] sm:$0xff]
        %v1069 = vld [vmem:[%s457 + $0x98] sm:$0xff]
        %v1070 = vld [vmem:[%s457 + $0xa0] sm:$0xff]
        %v1071 = vld [vmem:[%s457 + $0xa8] sm:$0xff]
        %v1072 = vld [vmem:[%s457 + $0xb0] sm:$0xff]
        %v1073 = vld [vmem:[%s457 + $0xb8] sm:$0xff]
        %v1074 = vld [vmem:[%s457 + $0xc0] sm:$0xff]
        %v1075 = vld [vmem:[%s457 + $0xc8] sm:$0xff]
        %v1076 = vld [vmem:[%s457 + $0xd0] sm:$0xff]
        %v1077 = vld [vmem:[%s457 + $0xd8] sm:$0xff]
        %v1078 = vld [vmem:[%s457 + $0xe0] sm:$0xff]
        %v1079 = vld [vmem:[%s457 + $0xe8] sm:$0xff]
        %v1080 = vld [vmem:[%s457 + $0xf0] sm:$0xff]
        %v1081 = vld [vmem:[%s457 + $0xf8] sm:$0xff]
        %v1082 = vld [vmem:[%s457 + $0x100] sm:$0xff]
        %v1083 = vld [vmem:[%s457 + $0x108] sm:$0xff]
        %v1084 = vld [vmem:[%s457 + $0x110] sm:$0xff]
        %v1085 = vld [vmem:[%s457 + $0x118] sm:$0xff]
        %v1086 = vld [vmem:[%s457 + $0x120] sm:$0xff]
        %v1087 = vld [vmem:[%s457 + $0x128] sm:$0xff]
        %v1088 = vld [vmem:[%s457 + $0x130] sm:$0xff]
        %v1089 = vld [vmem:[%s457 + $0x138] sm:$0xff]
        %v1090 = vld [vmem:[%s457 + $0x140] sm:$0xff]
        %v1091 = vld [vmem:[%s457 + $0x148] sm:$0xff]
        %v1092 = vld [vmem:[%s457 + $0x150] sm:$0xff]
        %v1093 = vld [vmem:[%s457 + $0x158] sm:$0xff]
        %v1094 = vld [vmem:[%s457 + $0x160] sm:$0xff]
        %v1095 = vld [vmem:[%s457 + $0x168] sm:$0xff]
        %v1096 = vld [vmem:[%s457 + $0x170] sm:$0xff]
        %v1097 = vld [vmem:[%s457 + $0x178] sm:$0xff]
        %v1098 = vld [vmem:[%s457 + $0x180] sm:$0xff]
        %v1099 = vld [vmem:[%s457 + $0x188] sm:$0xff]
        %v1100 = vld [vmem:[%s457 + $0x190] sm:$0xff]
        %v1101 = vld [vmem:[%s457 + $0x198] sm:$0xff]
        %v1102 = vld [vmem:[%s457 + $0x1a0] sm:$0xff]
        %v1103 = vld [vmem:[%s457 + $0x1a8] sm:$0xff]
        %v1104 = vld [vmem:[%s457 + $0x1b0] sm:$0xff]
        %v1105 = vld [vmem:[%s457 + $0x1b8] sm:$0xff]
        %v1106 = vld [vmem:[%s457 + $0x1c0] sm:$0xff]
        %v1107 = vld [vmem:[%s457 + $0x1c8] sm:$0xff]
        %v1108 = vld [vmem:[%s457 + $0x1d0] sm:$0xff]
        %v1109 = vld [vmem:[%s457 + $0x1d8] sm:$0xff]
        %v1110 = vld [vmem:[%s457 + $0x1e0] sm:$0xff]
        %v1111 = vld [vmem:[%s457 + $0x1e8] sm:$0xff]
        %v1112 = vld [vmem:[%s457 + $0x1f0] sm:$0xff]
        %v1113 = vld [vmem:[%s457 + $0x1f8] sm:$0xff]
        %1114 = vmatprep.subr.mxu0 0.0
        %1115 = vmatpush1.msra.mxu0 %v1050
        %1116 = vmatprep.subr.mxu0 0.0
        %1117 = vmatpush1.msra.mxu0 %v1051
        %1118 = vmatprep.subr.mxu0 0.0
        %1119 = vmatpush1.msra.mxu0 %v1052
        %1120 = vmatprep.subr.mxu0 0.0
        %1121 = vmatpush1.msra.mxu0 %v1053
        %1122 = vmatprep.subr.mxu0 0.0
        %1123 = vmatpush1.msra.mxu0 %v1054
        %1124 = vmatprep.subr.mxu0 0.0
        %1125 = vmatpush1.msra.mxu0 %v1055
        %1126 = vmatprep.subr.mxu0 0.0
        %1127 = vmatpush1.msra.mxu0 %v1056
        %1128 = vmatprep.subr.mxu0 0.0
        %1129 = vmatpush1.msra.mxu0 %v1057
        %1130 = vmatprep.subr.mxu0 0.0
        %1131 = vmatpush1.msra.mxu0 %v1058
        %1132 = vmatprep.subr.mxu0 0.0
        %1133 = vmatpush1.msra.mxu0 %v1059
        %1134 = vmatprep.subr.mxu0 0.0
        %1135 = vmatpush1.msra.mxu0 %v1060
        %1136 = vmatprep.subr.mxu0 0.0
        %1137 = vmatpush1.msra.mxu0 %v1061
        %1138 = vmatprep.subr.mxu0 0.0
        %1139 = vmatpush1.msra.mxu0 %v1062
        %1140 = vmatprep.subr.mxu0 0.0
        %1141 = vmatpush1.msra.mxu0 %v1063
        %1142 = vmatprep.subr.mxu0 0.0
        %1143 = vmatpush1.msra.mxu0 %v1064
        %1144 = vmatprep.subr.mxu0 0.0
        %1145 = vmatpush1.msra.mxu0 %v1065
        %1146 = vmatprep.subr.mxu0 0.0
        %1147 = vmatpush1.msra.mxu0 %v1066
        %1148 = vmatprep.subr.mxu0 0.0
        %1149 = vmatpush1.msra.mxu0 %v1067
        %1150 = vmatprep.subr.mxu0 0.0
        %1151 = vmatpush1.msra.mxu0 %v1068
        %1152 = vmatprep.subr.mxu0 0.0
        %1153 = vmatpush1.msra.mxu0 %v1069
        %1154 = vmatprep.subr.mxu0 0.0
        %1155 = vmatpush1.msra.mxu0 %v1070
        %1156 = vmatprep.subr.mxu0 0.0
        %1157 = vmatpush1.msra.mxu0 %v1071
        %1158 = vmatprep.subr.mxu0 0.0
        %1159 = vmatpush1.msra.mxu0 %v1072
        %1160 = vmatprep.subr.mxu0 0.0
        %1161 = vmatpush1.msra.mxu0 %v1073
        %1162 = vmatprep.subr.mxu0 0.0
        %1163 = vmatpush1.msra.mxu0 %v1074
        %1164 = vmatprep.subr.mxu0 0.0
        %1165 = vmatpush1.msra.mxu0 %v1075
        %1166 = vmatprep.subr.mxu0 0.0
        %1167 = vmatpush1.msra.mxu0 %v1076
        %1168 = vmatprep.subr.mxu0 0.0
        %1169 = vmatpush1.msra.mxu0 %v1077
        %1170 = vmatprep.subr.mxu0 0.0
        %1171 = vmatpush1.msra.mxu0 %v1078
        %1172 = vmatprep.subr.mxu0 0.0
        %1173 = vmatpush1.msra.mxu0 %v1079
        %1174 = vmatprep.subr.mxu0 0.0
        %1175 = vmatpush1.msra.mxu0 %v1080
        %1176 = vmatprep.subr.mxu0 0.0
        %1177 = vmatpush1.msra.mxu0 %v1081
        %1178 = vmatprep.mubr.f32.mxu0 %v565
        %1179 = vmatmul.mubr.f32.gmra.mrb[0].mxu0 %v564
        %v1180 = vpop.f32.mrb[0].mxu0
        %v1181 = vadd.f32 0.0, %v1180
        %v1182 = vpop.f32.mrb[0].mxu0
        %1183 = vdwg.mxu0
        %1184 = vmatprep.subr.mxu0 0.0
        %1185 = vmatpush1.msra.mxu0 %v1082
        %1186 = vmatprep.subr.mxu0 0.0
        %1187 = vmatpush1.msra.mxu0 %v1083
        %1188 = vmatprep.subr.mxu0 0.0
        %1189 = vmatpush1.msra.mxu0 %v1084
        %1190 = vmatprep.subr.mxu0 0.0
        %1191 = vmatpush1.msra.mxu0 %v1085
        %1192 = vmatprep.subr.mxu0 0.0
        %1193 = vmatpush1.msra.mxu0 %v1086
        %1194 = vmatprep.subr.mxu0 0.0
        %1195 = vmatpush1.msra.mxu0 %v1087
        %1196 = vmatprep.subr.mxu0 0.0
        %1197 = vmatpush1.msra.mxu0 %v1088
        %1198 = vmatprep.subr.mxu0 0.0
        %1199 = vmatpush1.msra.mxu0 %v1089
        %1200 = vmatprep.subr.mxu0 0.0
        %1201 = vmatpush1.msra.mxu0 %v1090
        %1202 = vmatprep.subr.mxu0 0.0
        %1203 = vmatpush1.msra.mxu0 %v1091
        %1204 = vmatprep.subr.mxu0 0.0
        %1205 = vmatpush1.msra.mxu0 %v1092
        %1206 = vmatprep.subr.mxu0 0.0
        %1207 = vmatpush1.msra.mxu0 %v1093
        %1208 = vmatprep.subr.mxu0 0.0
        %1209 = vmatpush1.msra.mxu0 %v1094
        %1210 = vmatprep.subr.mxu0 0.0
        %1211 = vmatpush1.msra.mxu0 %v1095
        %1212 = vmatprep.subr.mxu0 0.0
        %1213 = vmatpush1.msra.mxu0 %v1096
        %1214 = vmatprep.subr.mxu0 0.0
        %1215 = vmatpush1.msra.mxu0 %v1097
        %1216 = vmatprep.subr.mxu0 0.0
        %1217 = vmatpush1.msra.mxu0 %v1098
        %1218 = vmatprep.subr.mxu0 0.0
        %1219 = vmatpush1.msra.mxu0 %v1099
        %1220 = vmatprep.subr.mxu0 0.0
        %1221 = vmatpush1.msra.mxu0 %v1100
        %1222 = vmatprep.subr.mxu0 0.0
        %1223 = vmatpush1.msra.mxu0 %v1101
        %1224 = vmatprep.subr.mxu0 0.0
        %1225 = vmatpush1.msra.mxu0 %v1102
        %1226 = vmatprep.subr.mxu0 0.0
        %1227 = vmatpush1.msra.mxu0 %v1103
        %1228 = vmatprep.subr.mxu0 0.0
        %1229 = vmatpush1.msra.mxu0 %v1104
        %1230 = vmatprep.subr.mxu0 0.0
        %1231 = vmatpush1.msra.mxu0 %v1105
        %1232 = vmatprep.subr.mxu0 0.0
        %1233 = vmatpush1.msra.mxu0 %v1106
        %1234 = vmatprep.subr.mxu0 0.0
        %1235 = vmatpush1.msra.mxu0 %v1107
        %1236 = vmatprep.subr.mxu0 0.0
        %1237 = vmatpush1.msra.mxu0 %v1108
        %1238 = vmatprep.subr.mxu0 0.0
        %1239 = vmatpush1.msra.mxu0 %v1109
        %1240 = vmatprep.subr.mxu0 0.0
        %1241 = vmatpush1.msra.mxu0 %v1110
        %1242 = vmatprep.subr.mxu0 0.0
        %1243 = vmatpush1.msra.mxu0 %v1111
        %1244 = vmatprep.subr.mxu0 0.0
        %1245 = vmatpush1.msra.mxu0 %v1112
        %1246 = vmatprep.subr.mxu0 0.0
        %1247 = vmatpush1.msra.mxu0 %v1113
        %1248 = vmatprep.mubr.f32.mxu0 %v567
        %1249 = vmatmul.mubr.f32.gmra.mrb[0].mxu0 %v566
        %v1250 = vpop.f32.mrb[0].mxu0
        %v1251 = vadd.f32 %v1181, %v1250
        %v1252 = vpop.f32.mrb[0].mxu0
        %1253 = vdwg.mxu0
        %v1254 = vld [vmem:[#allocation8] sm:$0xff]
        %v1255 = vld [vmem:[#allocation9] sm:$0xff]
        %v1256 = vmul.f32 %v1047, %v1254
        %1257 = vrot.lane.b32.xlu0 %v1047, 64
        %v1258 = vpop.permute.xlu0 %1257
        %v1259 = vmul.f32 %v1258, %v1255
        %v1260 = vadd.f32 %v1256, %v1259
        %v1261 = vlaneseq
        %v1262 = vshrl.u32 %v1261, 7
        %v1263 = vlaneseq
        %v1264 = vand.u32 %v1263, 127
        %vm1265 = vcmp.gt.s32.totalorder %v1264, %v1262
        %v1266 = vmul.f32 %v842, %v1254
        %1267 = vrot.lane.b32.xlu0 %v842, 64
        %v1268 = vpop.permute.xlu0 %1267
        %v1269 = vmul.f32 %v1268, %v1255
        %v1270 = vadd.f32 %v1266, %v1269
        %1271 = vmatprep.subr.mxu0 0.0
        %1272 = vmatpush1.xpose.msra.mxu0 %v1260
        %1273 = vmatprep.subr.mxu0 0.0
        %1274 = vmatpush1.xpose.msra.mxu0 0.0
        %1275 = vmatprep.subr.mxu0 0.0
        %1276 = vmatpush1.xpose.msra.mxu0 0.0
        %1277 = vmatprep.subr.mxu0 0.0
        %1278 = vmatpush1.xpose.msra.mxu0 0.0
        %1279 = vmatprep.subr.mxu0 0.0
        %1280 = vmatpush1.xpose.msra.mxu0 0.0
        %1281 = vmatprep.subr.mxu0 0.0
        %1282 = vmatpush1.xpose.msra.mxu0 0.0
        %1283 = vmatprep.subr.mxu0 0.0
        %1284 = vmatpush1.xpose.msra.mxu0 0.0
        %1285 = vmatprep.subr.mxu0 0.0
        %1286 = vmatpush1.xpose.msra.mxu0 0.0
        %1287 = vmatprep.subr.mxu0 0.0
        %1288 = vmatpush1.xpose.msra.mxu0 0.0
        %1289 = vmatprep.subr.mxu0 0.0
        %1290 = vmatpush1.xpose.msra.mxu0 0.0
        %1291 = vmatprep.subr.mxu0 0.0
        %1292 = vmatpush1.xpose.msra.mxu0 0.0
        %1293 = vmatprep.subr.mxu0 0.0
        %1294 = vmatpush1.xpose.msra.mxu0 0.0
        %1295 = vmatprep.subr.mxu0 0.0
        %1296 = vmatpush1.xpose.msra.mxu0 0.0
        %1297 = vmatprep.subr.mxu0 0.0
        %1298 = vmatpush1.xpose.msra.mxu0 0.0
        %1299 = vmatprep.subr.mxu0 0.0
        %1300 = vmatpush1.xpose.msra.mxu0 0.0
        %1301 = vmatprep.subr.mxu0 0.0
        %1302 = vmatpush1.xpose.msra.mxu0 0.0
        %1303 = vmatprep.subr.mxu0 0.0
        %1304 = vmatpush1.xpose.msra.mxu0 0.0
        %1305 = vmatprep.subr.mxu0 0.0
        %1306 = vmatpush1.xpose.msra.mxu0 0.0
        %1307 = vmatprep.subr.mxu0 0.0
        %1308 = vmatpush1.xpose.msra.mxu0 0.0
        %1309 = vmatprep.subr.mxu0 0.0
        %1310 = vmatpush1.xpose.msra.mxu0 0.0
        %1311 = vmatprep.subr.mxu0 0.0
        %1312 = vmatpush1.xpose.msra.mxu0 0.0
        %1313 = vmatprep.subr.mxu0 0.0
        %1314 = vmatpush1.xpose.msra.mxu0 0.0
        %1315 = vmatprep.subr.mxu0 0.0
        %1316 = vmatpush1.xpose.msra.mxu0 0.0
        %1317 = vmatprep.subr.mxu0 0.0
        %1318 = vmatpush1.xpose.msra.mxu0 0.0
        %1319 = vmatprep.subr.mxu0 0.0
        %1320 = vmatpush1.xpose.msra.mxu0 0.0
        %1321 = vmatprep.subr.mxu0 0.0
        %1322 = vmatpush1.xpose.msra.mxu0 0.0
        %1323 = vmatprep.subr.mxu0 0.0
        %1324 = vmatpush1.xpose.msra.mxu0 0.0
        %1325 = vmatprep.subr.mxu0 0.0
        %1326 = vmatpush1.xpose.msra.mxu0 0.0
        %1327 = vmatprep.subr.mxu0 0.0
        %1328 = vmatpush1.xpose.msra.mxu0 0.0
        %1329 = vmatprep.subr.mxu0 0.0
        %1330 = vmatpush1.xpose.msra.mxu0 0.0
        %1331 = vmatprep.subr.mxu0 0.0
        %1332 = vmatpush1.xpose.msra.mxu0 0.0
        %1333 = vmatprep.subr.mxu0 0.0
        %1334 = vmatpush1.xpose.msra.mxu0 0.0
        %1335 = vmatprep.mubr.f32.mxu0 0.0
        %1336 = vmatmul.mubr.f32.gmra.mrb[0].mxu0 %v1270
        %v1337 = vpop.f32.mrb[0].mxu0
        %v1338 = vadd.f32 0.0, %v1337
        %v1339 = vpop.f32.mrb[0].mxu0
        %1340 = vdwg.mxu0
        %v1341 = vsel %vm1265, -1e+30, %v1338
        %vm1342 = vcmask 64512
        %v1343 = vsel %vm1342, %v1341, -inf
        %1344 = vmax.xlane.f32.xlu0 %v1343
        %v1345 = vpop.xlane.xlu0 %1344
        %v1346 = vsub.f32 %v1341, %v1345
        %v1347 = vmul.f32 %v1346, 1.442695
        %v1348 = vpow.pop %v1347
        %v1349 = vsel %vm1342, %v1348, 0.0
        %1350 = vadd.xlane.f32.xlu0 %v1349
        %v1351 = vpop.xlane.xlu0 %1350
        %v1353 = vsel %vm1342, %v1348, 0
        %1355 = vmatprep.subr.mxu0 0.0
        %1356 = vmatpush1.msra.mxu0 %v1251
        %1357 = vmatprep.subr.mxu0 0.0
        %1358 = vmatpush1.msra.mxu0 0.0
        %1359 = vmatprep.subr.mxu0 0.0
        %1360 = vmatpush1.msra.mxu0 0.0
        %1361 = vmatprep.subr.mxu0 0.0
        %1362 = vmatpush1.msra.mxu0 0.0
        %1363 = vmatprep.subr.mxu0 0.0
        %1364 = vmatpush1.msra.mxu0 0.0
        %1365 = vmatprep.subr.mxu0 0.0
        %1366 = vmatpush1.msra.mxu0 0.0
        %1367 = vmatprep.subr.mxu0 0.0
        %1368 = vmatpush1.msra.mxu0 0.0
        %1369 = vmatprep.subr.mxu0 0.0
        %1370 = vmatpush1.msra.mxu0 0.0
        %1371 = vmatprep.subr.mxu0 0.0
        %1372 = vmatpush1.msra.mxu0 0.0
        %1373 = vmatprep.subr.mxu0 0.0
        %1374 = vmatpush1.msra.mxu0 0.0
        %1375 = vmatprep.subr.mxu0 0.0
        %1376 = vmatpush1.msra.mxu0 0.0
        %1377 = vmatprep.subr.mxu0 0.0
        %1378 = vmatpush1.msra.mxu0 0.0
        %1379 = vmatprep.subr.mxu0 0.0
        %1380 = vmatpush1.msra.mxu0 0.0
        %1381 = vmatprep.subr.mxu0 0.0
        %1382 = vmatpush1.msra.mxu0 0.0
        %1383 = vmatprep.subr.mxu0 0.0
        %1384 = vmatpush1.msra.mxu0 0.0
        %1385 = vmatprep.subr.mxu0 0.0
        %1386 = vmatpush1.msra.mxu0 0.0
        %1387 = vmatprep.subr.mxu0 0.0
        %1388 = vmatpush1.msra.mxu0 0.0
        %1389 = vmatprep.subr.mxu0 0.0
        %1390 = vmatpush1.msra.mxu0 0.0
        %1391 = vmatprep.subr.mxu0 0.0
        %1392 = vmatpush1.msra.mxu0 0.0
        %1393 = vmatprep.subr.mxu0 0.0
        %1394 = vmatpush1.msra.mxu0 0.0
        %1395 = vmatprep.subr.mxu0 0.0
        %1396 = vmatpush1.msra.mxu0 0.0
        %1397 = vmatprep.subr.mxu0 0.0
        %1398 = vmatpush1.msra.mxu0 0.0
        %1399 = vmatprep.subr.mxu0 0.0
        %1400 = vmatpush1.msra.mxu0 0.0
        %1401 = vmatprep.subr.mxu0 0.0
        %1402 = vmatpush1.msra.mxu0 0.0
        %1403 = vmatprep.subr.mxu0 0.0
        %1404 = vmatpush1.msra.mxu0 0.0
        %1405 = vmatprep.subr.mxu0 0.0
        %1406 = vmatpush1.msra.mxu0 0.0
        %1407 = vmatprep.subr.mxu0 0.0
        %1408 = vmatpush1.msra.mxu0 0.0
        %1409 = vmatprep.subr.mxu0 0.0
        %1410 = vmatpush1.msra.mxu0 0.0
        %1411 = vmatprep.subr.mxu0 0.0
        %1412 = vmatpush1.msra.mxu0 0.0
        %1413 = vmatprep.subr.mxu0 0.0
        %1414 = vmatpush1.msra.mxu0 0.0
        %1415 = vmatprep.subr.mxu0 0.0
        %1416 = vmatpush1.msra.mxu0 0.0
        %1417 = vmatprep.subr.mxu0 0.0
        %1418 = vmatpush1.msra.mxu0 0.0
        %1419 = vmatprep.mubr.f32.mxu0 0.0
        %1420 = vmatmul.mubr.f32.gmra.mrb[0].mxu0 %v1353
        %v1421 = vpop.f32.mrb[0].mxu0
        %v1422 = vadd.f32 0.0, %v1421
        %v1423 = vpop.f32.mrb[0].mxu0
        %1424 = vdwg.mxu0
        %v1425 = vrcp.pop %v1351
        %v1426 = vmul.f32 %v1422, %v1425
        %v1427 = vld [vmem:[%s466] sm:$0xff]
        %v1428 = vld [vmem:[%s466 + $0x8] sm:$0xff]
        %v1429 = vld [vmem:[%s466 + $0x10] sm:$0xff]
        %v1430 = vld [vmem:[%s466 + $0x18] sm:$0xff]
        %v1431 = vld [vmem:[%s466 + $0x20] sm:$0xff]
        %v1432 = vld [vmem:[%s466 + $0x28] sm:$0xff]
        %v1433 = vld [vmem:[%s466 + $0x30] sm:$0xff]
        %v1434 = vld [vmem:[%s466 + $0x38] sm:$0xff]
        %v1435 = vld [vmem:[%s466 + $0x40] sm:$0xff]
        %v1436 = vld [vmem:[%s466 + $0x48] sm:$0xff]
        %v1437 = vld [vmem:[%s466 + $0x50] sm:$0xff]
        %v1438 = vld [vmem:[%s466 + $0x58] sm:$0xff]
        %v1439 = vld [vmem:[%s466 + $0x60] sm:$0xff]
        %v1440 = vld [vmem:[%s466 + $0x68] sm:$0xff]
        %v1441 = vld [vmem:[%s466 + $0x70] sm:$0xff]
        %v1442 = vld [vmem:[%s466 + $0x78] sm:$0xff]
        %v1443 = vld [vmem:[%s466 + $0x80] sm:$0xff]
        %v1444 = vld [vmem:[%s466 + $0x88] sm:$0xff]
        %v1445 = vld [vmem:[%s466 + $0x90] sm:$0xff]
        %v1446 = vld [vmem:[%s466 + $0x98] sm:$0xff]
        %v1447 = vld [vmem:[%s466 + $0xa0] sm:$0xff]
        %v1448 = vld [vmem:[%s466 + $0xa8] sm:$0xff]
        %v1449 = vld [vmem:[%s466 + $0xb0] sm:$0xff]
        %v1450 = vld [vmem:[%s466 + $0xb8] sm:$0xff]
        %v1451 = vld [vmem:[%s466 + $0xc0] sm:$0xff]
        %v1452 = vld [vmem:[%s466 + $0xc8] sm:$0xff]
        %v1453 = vld [vmem:[%s466 + $0xd0] sm:$0xff]
        %v1454 = vld [vmem:[%s466 + $0xd8] sm:$0xff]
        %v1455 = vld [vmem:[%s466 + $0xe0] sm:$0xff]
        %v1456 = vld [vmem:[%s466 + $0xe8] sm:$0xff]
        %v1457 = vld [vmem:[%s466 + $0xf0] sm:$0xff]
        %v1458 = vld [vmem:[%s466 + $0xf8] sm:$0xff]
        %v1459 = vld [vmem:[%s466 + $0x100] sm:$0xff]
        %v1460 = vld [vmem:[%s466 + $0x108] sm:$0xff]
        %v1461 = vld [vmem:[%s466 + $0x110] sm:$0xff]
        %v1462 = vld [vmem:[%s466 + $0x118] sm:$0xff]
        %v1463 = vld [vmem:[%s466 + $0x120] sm:$0xff]
        %v1464 = vld [vmem:[%s466 + $0x128] sm:$0xff]
        %v1465 = vld [vmem:[%s466 + $0x130] sm:$0xff]
        %v1466 = vld [vmem:[%s466 + $0x138] sm:$0xff]
        %v1467 = vld [vmem:[%s466 + $0x140] sm:$0xff]
        %v1468 = vld [vmem:[%s466 + $0x148] sm:$0xff]
        %v1469 = vld [vmem:[%s466 + $0x150] sm:$0xff]
        %v1470 = vld [vmem:[%s466 + $0x158] sm:$0xff]
        %v1471 = vld [vmem:[%s466 + $0x160] sm:$0xff]
        %v1472 = vld [vmem:[%s466 + $0x168] sm:$0xff]
        %v1473 = vld [vmem:[%s466 + $0x170] sm:$0xff]
        %v1474 = vld [vmem:[%s466 + $0x178] sm:$0xff]
        %v1475 = vld [vmem:[%s466 + $0x180] sm:$0xff]
        %v1476 = vld [vmem:[%s466 + $0x188] sm:$0xff]
        %v1477 = vld [vmem:[%s466 + $0x190] sm:$0xff]
        %v1478 = vld [vmem:[%s466 + $0x198] sm:$0xff]
        %v1479 = vld [vmem:[%s466 + $0x1a0] sm:$0xff]
        %v1480 = vld [vmem:[%s466 + $0x1a8] sm:$0xff]
        %v1481 = vld [vmem:[%s466 + $0x1b0] sm:$0xff]
        %v1482 = vld [vmem:[%s466 + $0x1b8] sm:$0xff]
        %v1483 = vld [vmem:[%s466 + $0x1c0] sm:$0xff]
        %v1484 = vld [vmem:[%s466 + $0x1c8] sm:$0xff]
        %v1485 = vld [vmem:[%s466 + $0x1d0] sm:$0xff]
        %v1486 = vld [vmem:[%s466 + $0x1d8] sm:$0xff]
        %v1487 = vld [vmem:[%s466 + $0x1e0] sm:$0xff]
        %v1488 = vld [vmem:[%s466 + $0x1e8] sm:$0xff]
        %v1489 = vld [vmem:[%s466 + $0x1f0] sm:$0xff]
        %v1490 = vld [vmem:[%s466 + $0x1f8] sm:$0xff]
        %v1491 = vmul.f32 %v844, %v1254
        %1492 = vrot.lane.b32.xlu0 %v844, 64
        %v1493 = vpop.permute.xlu0 %1492
        %v1494 = vmul.f32 %v1493, %v1255
        %v1495 = vadd.f32 %v1491, %v1494
        %1496 = vmatprep.subr.mxu0 0.0
        %1497 = vmatpush1.xpose.msra.mxu0 %v1260
        %1498 = vmatprep.subr.mxu0 0.0
        %1499 = vmatpush1.xpose.msra.mxu0 0.0
        %1500 = vmatprep.subr.mxu0 0.0
        %1501 = vmatpush1.xpose.msra.mxu0 0.0
        %1502 = vmatprep.subr.mxu0 0.0
        %1503 = vmatpush1.xpose.msra.mxu0 0.0
        %1504 = vmatprep.subr.mxu0 0.0
        %1505 = vmatpush1.xpose.msra.mxu0 0.0
        %1506 = vmatprep.subr.mxu0 0.0
        %1507 = vmatpush1.xpose.msra.mxu0 0.0
        %1508 = vmatprep.subr.mxu0 0.0
        %1509 = vmatpush1.xpose.msra.mxu0 0.0
        %1510 = vmatprep.subr.mxu0 0.0
        %1511 = vmatpush1.xpose.msra.mxu0 0.0
        %1512 = vmatprep.subr.mxu0 0.0
        %1513 = vmatpush1.xpose.msra.mxu0 0.0
        %1514 = vmatprep.subr.mxu0 0.0
        %1515 = vmatpush1.xpose.msra.mxu0 0.0
        %1516 = vmatprep.subr.mxu0 0.0
        %1517 = vmatpush1.xpose.msra.mxu0 0.0
        %1518 = vmatprep.subr.mxu0 0.0
        %1519 = vmatpush1.xpose.msra.mxu0 0.0
        %1520 = vmatprep.subr.mxu0 0.0
        %1521 = vmatpush1.xpose.msra.mxu0 0.0
        %1522 = vmatprep.subr.mxu0 0.0
        %1523 = vmatpush1.xpose.msra.mxu0 0.0
        %1524 = vmatprep.subr.mxu0 0.0
        %1525 = vmatpush1.xpose.msra.mxu0 0.0
        %1526 = vmatprep.subr.mxu0 0.0
        %1527 = vmatpush1.xpose.msra.mxu0 0.0
        %1528 = vmatprep.subr.mxu0 0.0
        %1529 = vmatpush1.xpose.msra.mxu0 0.0
        %1530 = vmatprep.subr.mxu0 0.0
        %1531 = vmatpush1.xpose.msra.mxu0 0.0
        %1532 = vmatprep.subr.mxu0 0.0
        %1533 = vmatpush1.xpose.msra.mxu0 0.0
        %1534 = vmatprep.subr.mxu0 0.0
        %1535 = vmatpush1.xpose.msra.mxu0 0.0
        %1536 = vmatprep.subr.mxu0 0.0
        %1537 = vmatpush1.xpose.msra.mxu0 0.0
        %1538 = vmatprep.subr.mxu0 0.0
        %1539 = vmatpush1.xpose.msra.mxu0 0.0
        %1540 = vmatprep.subr.mxu0 0.0
        %1541 = vmatpush1.xpose.msra.mxu0 0.0
        %1542 = vmatprep.subr.mxu0 0.0
        %1543 = vmatpush1.xpose.msra.mxu0 0.0
        %1544 = vmatprep.subr.mxu0 0.0
        %1545 = vmatpush1.xpose.msra.mxu0 0.0
        %1546 = vmatprep.subr.mxu0 0.0
        %1547 = vmatpush1.xpose.msra.mxu0 0.0
        %1548 = vmatprep.subr.mxu0 0.0
        %1549 = vmatpush1.xpose.msra.mxu0 0.0
        %1550 = vmatprep.subr.mxu0 0.0
        %1551 = vmatpush1.xpose.msra.mxu0 0.0
        %1552 = vmatprep.subr.mxu0 0.0
        %1553 = vmatpush1.xpose.msra.mxu0 0.0
        %1554 = vmatprep.subr.mxu0 0.0
        %1555 = vmatpush1.xpose.msra.mxu0 0.0
        %1556 = vmatprep.subr.mxu0 0.0
        %1557 = vmatpush1.xpose.msra.mxu0 0.0
        %1558 = vmatprep.subr.mxu0 0.0
        %1559 = vmatpush1.xpose.msra.mxu0 0.0
        %1560 = vmatprep.mubr.f32.mxu0 0.0
        %1561 = vmatmul.mubr.f32.gmra.mrb[0].mxu0 %v1495
        %v1562 = vpop.f32.mrb[0].mxu0
        %v1563 = vadd.f32 0.0, %v1562
        %v1564 = vpop.f32.mrb[0].mxu0
        %1565 = vdwg.mxu0
        %v1566 = vsel %vm1265, -1e+30, %v1563
        %v1567 = vsel %vm1342, %v1566, -inf
        %1568 = vmax.xlane.f32.xlu0 %v1567
        %v1569 = vpop.xlane.xlu0 %1568
        %v1570 = vsub.f32 %v1566, %v1569
        %v1571 = vmul.f32 %v1570, 1.442695
        %v1572 = vpow.pop %v1571
        %v1573 = vsel %vm1342, %v1572, 0.0
        %1574 = vadd.xlane.f32.xlu0 %v1573
        %v1575 = vpop.xlane.xlu0 %1574
        %v1577 = vsel %vm1342, %v1572, 0
        %1579 = vmatprep.subr.mxu0 0.0
        %1580 = vmatpush1.msra.mxu0 %v1251
        %1581 = vmatprep.subr.mxu0 0.0
        %1582 = vmatpush1.msra.mxu0 0.0
        %1583 = vmatprep.subr.mxu0 0.0
        %1584 = vmatpush1.msra.mxu0 0.0
        %1585 = vmatprep.subr.mxu0 0.0
        %1586 = vmatpush1.msra.mxu0 0.0
        %1587 = vmatprep.subr.mxu0 0.0
        %1588 = vmatpush1.msra.mxu0 0.0
        %1589 = vmatprep.subr.mxu0 0.0
        %1590 = vmatpush1.msra.mxu0 0.0
        %1591 = vmatprep.subr.mxu0 0.0
        %1592 = vmatpush1.msra.mxu0 0.0
        %1593 = vmatprep.subr.mxu0 0.0
        %1594 = vmatpush1.msra.mxu0 0.0
        %1595 = vmatprep.subr.mxu0 0.0
        %1596 = vmatpush1.msra.mxu0 0.0
        %1597 = vmatprep.subr.mxu0 0.0
        %1598 = vmatpush1.msra.mxu0 0.0
        %1599 = vmatprep.subr.mxu0 0.0
        %1600 = vmatpush1.msra.mxu0 0.0
        %1601 = vmatprep.subr.mxu0 0.0
        %1602 = vmatpush1.msra.mxu0 0.0
        %1603 = vmatprep.subr.mxu0 0.0
        %1604 = vmatpush1.msra.mxu0 0.0
        %1605 = vmatprep.subr.mxu0 0.0
        %1606 = vmatpush1.msra.mxu0 0.0
        %1607 = vmatprep.subr.mxu0 0.0
        %1608 = vmatpush1.msra.mxu0 0.0
        %1609 = vmatprep.subr.mxu0 0.0
        %1610 = vmatpush1.msra.mxu0 0.0
        %1611 = vmatprep.subr.mxu0 0.0
        %1612 = vmatpush1.msra.mxu0 0.0
        %1613 = vmatprep.subr.mxu0 0.0
        %1614 = vmatpush1.msra.mxu0 0.0
        %1615 = vmatprep.subr.mxu0 0.0
        %1616 = vmatpush1.msra.mxu0 0.0
        %1617 = vmatprep.subr.mxu0 0.0
        %1618 = vmatpush1.msra.mxu0 0.0
        %1619 = vmatprep.subr.mxu0 0.0
        %1620 = vmatpush1.msra.mxu0 0.0
        %1621 = vmatprep.subr.mxu0 0.0
        %1622 = vmatpush1.msra.mxu0 0.0
        %1623 = vmatprep.subr.mxu0 0.0
        %1624 = vmatpush1.msra.mxu0 0.0
        %1625 = vmatprep.subr.mxu0 0.0
        %1626 = vmatpush1.msra.mxu0 0.0
        %1627 = vmatprep.subr.mxu0 0.0
        %1628 = vmatpush1.msra.mxu0 0.0
        %1629 = vmatprep.subr.mxu0 0.0
        %1630 = vmatpush1.msra.mxu0 0.0
        %1631 = vmatprep.subr.mxu0 0.0
        %1632 = vmatpush1.msra.mxu0 0.0
        %1633 = vmatprep.subr.mxu0 0.0
        %1634 = vmatpush1.msra.mxu0 0.0
        %1635 = vmatprep.subr.mxu0 0.0
        %1636 = vmatpush1.msra.mxu0 0.0
        %1637 = vmatprep.subr.mxu0 0.0
        %1638 = vmatpush1.msra.mxu0 0.0
        %1639 = vmatprep.subr.mxu0 0.0
        %1640 = vmatpush1.msra.mxu0 0.0
        %1641 = vmatprep.subr.mxu0 0.0
        %1642 = vmatpush1.msra.mxu0 0.0
        %1643 = vmatprep.mubr.f32.mxu0 0.0
        %1644 = vmatmul.mubr.f32.gmra.mrb[0].mxu0 %v1577
        %v1645 = vpop.f32.mrb[0].mxu0
        %v1646 = vadd.f32 0.0, %v1645
        %v1647 = vpop.f32.mrb[0].mxu0
        %1648 = vdwg.mxu0
        %v1649 = vrcp.pop %v1575
        %v1650 = vmul.f32 %v1646, %v1649
        %v1651 = vld [vmem:[%s466 + $0x200] sm:$0xff]
        %v1652 = vld [vmem:[%s466 + $0x208] sm:$0xff]
        %v1653 = vld [vmem:[%s466 + $0x210] sm:$0xff]
        %v1654 = vld [vmem:[%s466 + $0x218] sm:$0xff]
        %v1655 = vld [vmem:[%s466 + $0x220] sm:$0xff]
        %v1656 = vld [vmem:[%s466 + $0x228] sm:$0xff]
        %v1657 = vld [vmem:[%s466 + $0x230] sm:$0xff]
        %v1658 = vld [vmem:[%s466 + $0x238] sm:$0xff]
        %v1659 = vld [vmem:[%s466 + $0x240] sm:$0xff]
        %v1660 = vld [vmem:[%s466 + $0x248] sm:$0xff]
        %v1661 = vld [vmem:[%s466 + $0x250] sm:$0xff]
        %v1662 = vld [vmem:[%s466 + $0x258] sm:$0xff]
        %v1663 = vld [vmem:[%s466 + $0x260] sm:$0xff]
        %v1664 = vld [vmem:[%s466 + $0x268] sm:$0xff]
        %v1665 = vld [vmem:[%s466 + $0x270] sm:$0xff]
        %v1666 = vld [vmem:[%s466 + $0x278] sm:$0xff]
        %v1667 = vld [vmem:[%s466 + $0x280] sm:$0xff]
        %v1668 = vld [vmem:[%s466 + $0x288] sm:$0xff]
        %v1669 = vld [vmem:[%s466 + $0x290] sm:$0xff]
        %v1670 = vld [vmem:[%s466 + $0x298] sm:$0xff]
        %v1671 = vld [vmem:[%s466 + $0x2a0] sm:$0xff]
        %v1672 = vld [vmem:[%s466 + $0x2a8] sm:$0xff]
        %v1673 = vld [vmem:[%s466 + $0x2b0] sm:$0xff]
        %v1674 = vld [vmem:[%s466 + $0x2b8] sm:$0xff]
        %v1675 = vld [vmem:[%s466 + $0x2c0] sm:$0xff]
        %v1676 = vld [vmem:[%s466 + $0x2c8] sm:$0xff]
        %v1677 = vld [vmem:[%s466 + $0x2d0] sm:$0xff]
        %v1678 = vld [vmem:[%s466 + $0x2d8] sm:$0xff]
        %v1679 = vld [vmem:[%s466 + $0x2e0] sm:$0xff]
        %v1680 = vld [vmem:[%s466 + $0x2e8] sm:$0xff]
        %v1681 = vld [vmem:[%s466 + $0x2f0] sm:$0xff]
        %v1682 = vld [vmem:[%s466 + $0x2f8] sm:$0xff]
        %v1683 = vld [vmem:[%s466 + $0x300] sm:$0xff]
        %v1684 = vld [vmem:[%s466 + $0x308] sm:$0xff]
        %v1685 = vld [vmem:[%s466 + $0x310] sm:$0xff]
        %v1686 = vld [vmem:[%s466 + $0x318] sm:$0xff]
        %v1687 = vld [vmem:[%s466 + $0x320] sm:$0xff]
        %v1688 = vld [vmem:[%s466 + $0x328] sm:$0xff]
        %v1689 = vld [vmem:[%s466 + $0x330] sm:$0xff]
        %v1690 = vld [vmem:[%s466 + $0x338] sm:$0xff]
        %v1691 = vld [vmem:[%s466 + $0x340] sm:$0xff]
        %v1692 = vld [vmem:[%s466 + $0x348] sm:$0xff]
        %v1693 = vld [vmem:[%s466 + $0x350] sm:$0xff]
        %v1694 = vld [vmem:[%s466 + $0x358] sm:$0xff]
        %v1695 = vld [vmem:[%s466 + $0x360] sm:$0xff]
        %v1696 = vld [vmem:[%s466 + $0x368] sm:$0xff]
        %v1697 = vld [vmem:[%s466 + $0x370] sm:$0xff]
        %v1698 = vld [vmem:[%s466 + $0x378] sm:$0xff]
        %v1699 = vld [vmem:[%s466 + $0x380] sm:$0xff]
        %v1700 = vld [vmem:[%s466 + $0x388] sm:$0xff]
        %v1701 = vld [vmem:[%s466 + $0x390] sm:$0xff]
        %v1702 = vld [vmem:[%s466 + $0x398] sm:$0xff]
        %v1703 = vld [vmem:[%s466 + $0x3a0] sm:$0xff]
        %v1704 = vld [vmem:[%s466 + $0x3a8] sm:$0xff]
        %v1705 = vld [vmem:[%s466 + $0x3b0] sm:$0xff]
        %v1706 = vld [vmem:[%s466 + $0x3b8] sm:$0xff]
        %v1707 = vld [vmem:[%s466 + $0x3c0] sm:$0xff]
        %v1708 = vld [vmem:[%s466 + $0x3c8] sm:$0xff]
        %v1709 = vld [vmem:[%s466 + $0x3d0] sm:$0xff]
        %v1710 = vld [vmem:[%s466 + $0x3d8] sm:$0xff]
        %v1711 = vld [vmem:[%s466 + $0x3e0] sm:$0xff]
        %v1712 = vld [vmem:[%s466 + $0x3e8] sm:$0xff]
        %v1713 = vld [vmem:[%s466 + $0x3f0] sm:$0xff]
        %v1714 = vld [vmem:[%s466 + $0x3f8] sm:$0xff]
        %1715 = vmatprep.subr.mxu0 %v1652
        %1716 = vmatpush1.msra.mxu0 %v1651
        %1717 = vmatprep.subr.mxu0 %v1656
        %1718 = vmatpush1.msra.mxu0 %v1655
        %1719 = vmatprep.subr.mxu0 %v1660
        %1720 = vmatpush1.msra.mxu0 %v1659
        %1721 = vmatprep.subr.mxu0 %v1664
        %1722 = vmatpush1.msra.mxu0 %v1663
        %1723 = vmatprep.subr.mxu0 %v1668
        %1724 = vmatpush1.msra.mxu0 %v1667
        %1725 = vmatprep.subr.mxu0 %v1672
        %1726 = vmatpush1.msra.mxu0 %v1671
        %1727 = vmatprep.subr.mxu0 %v1676
        %1728 = vmatpush1.msra.mxu0 %v1675
        %1729 = vmatprep.subr.mxu0 %v1680
        %1730 = vmatpush1.msra.mxu0 %v1679
        %1731 = vmatprep.subr.mxu0 %v1684
        %1732 = vmatpush1.msra.mxu0 %v1683
        %1733 = vmatprep.subr.mxu0 %v1688
        %1734 = vmatpush1.msra.mxu0 %v1687
        %1735 = vmatprep.subr.mxu0 %v1692
        %1736 = vmatpush1.msra.mxu0 %v1691
        %1737 = vmatprep.subr.mxu0 %v1696
        %1738 = vmatpush1.msra.mxu0 %v1695
        %1739 = vmatprep.subr.mxu0 %v1700
        %1740 = vmatpush1.msra.mxu0 %v1699
        %1741 = vmatprep.subr.mxu0 %v1704
        %1742 = vmatpush1.msra.mxu0 %v1703
        %1743 = vmatprep.subr.mxu0 %v1708
        %1744 = vmatpush1.msra.mxu0 %v1707
        %1745 = vmatprep.subr.mxu0 %v1712
        %1746 = vmatpush1.msra.mxu0 %v1711
        %1747 = vmatprep.subr.mxu0 0.0
        %1748 = vmatpush1.msra.mxu0 0.0
        %1749 = vmatprep.subr.mxu0 0.0
        %1750 = vmatpush1.msra.mxu0 0.0
        %1751 = vmatprep.subr.mxu0 0.0
        %1752 = vmatpush1.msra.mxu0 0.0
        %1753 = vmatprep.subr.mxu0 0.0
        %1754 = vmatpush1.msra.mxu0 0.0
        %1755 = vmatprep.subr.mxu0 0.0
        %1756 = vmatpush1.msra.mxu0 0.0
        %1757 = vmatprep.subr.mxu0 0.0
        %1758 = vmatpush1.msra.mxu0 0.0
        %1759 = vmatprep.subr.mxu0 0.0
        %1760 = vmatpush1.msra.mxu0 0.0
        %1761 = vmatprep.subr.mxu0 0.0
        %1762 = vmatpush1.msra.mxu0 0.0
        %1763 = vmatprep.subr.mxu0 0.0
        %1764 = vmatpush1.msra.mxu0 0.0
        %1765 = vmatprep.subr.mxu0 0.0
        %1766 = vmatpush1.msra.mxu0 0.0
        %1767 = vmatprep.subr.mxu0 0.0
        %1768 = vmatpush1.msra.mxu0 0.0
        %1769 = vmatprep.subr.mxu0 0.0
        %1770 = vmatpush1.msra.mxu0 0.0
        %1771 = vmatprep.subr.mxu0 0.0
        %1772 = vmatpush1.msra.mxu0 0.0
        %1773 = vmatprep.subr.mxu0 0.0
        %1774 = vmatpush1.msra.mxu0 0.0
        %1775 = vmatprep.subr.mxu0 0.0
        %1776 = vmatpush1.msra.mxu0 0.0
        %1777 = vmatprep.subr.mxu0 0.0
        %1778 = vmatpush1.msra.mxu0 0.0
        %1779 = vmatprep.mubr.f32.mxu0 0.0
        %1780 = vmatmul.mubr.f32.gmra.mrb[0].mxu0 %v1650
        %v1781 = vpop.f32.mrb[0].mxu0
        %v1782 = vadd.f32 0.0, %v1781
        %v1783 = vpop.f32.mrb[0].mxu0
        %v1784 = vadd.f32 0.0, %v1783
        %1785 = vdwg.mxu0
        %1786 = vmatprep.subr.mxu0 %v1654
        %1787 = vmatpush1.msra.mxu0 %v1653
        %1788 = vmatprep.subr.mxu0 %v1658
        %1789 = vmatpush1.msra.mxu0 %v1657
        %1790 = vmatprep.subr.mxu0 %v1662
        %1791 = vmatpush1.msra.mxu0 %v1661
        %1792 = vmatprep.subr.mxu0 %v1666
        %1793 = vmatpush1.msra.mxu0 %v1665
        %1794 = vmatprep.subr.mxu0 %v1670
        %1795 = vmatpush1.msra.mxu0 %v1669
        %1796 = vmatprep.subr.mxu0 %v1674
        %1797 = vmatpush1.msra.mxu0 %v1673
        %1798 = vmatprep.subr.mxu0 %v1678
        %1799 = vmatpush1.msra.mxu0 %v1677
        %1800 = vmatprep.subr.mxu0 %v1682
        %1801 = vmatpush1.msra.mxu0 %v1681
        %1802 = vmatprep.subr.mxu0 %v1686
        %1803 = vmatpush1.msra.mxu0 %v1685
        %1804 = vmatprep.subr.mxu0 %v1690
        %1805 = vmatpush1.msra.mxu0 %v1689
        %1806 = vmatprep.subr.mxu0 %v1694
        %1807 = vmatpush1.msra.mxu0 %v1693
        %1808 = vmatprep.subr.mxu0 %v1698
        %1809 = vmatpush1.msra.mxu0 %v1697
        %1810 = vmatprep.subr.mxu0 %v1702
        %1811 = vmatpush1.msra.mxu0 %v1701
        %1812 = vmatprep.subr.mxu0 %v1706
        %1813 = vmatpush1.msra.mxu0 %v1705
        %1814 = vmatprep.subr.mxu0 %v1710
        %1815 = vmatpush1.msra.mxu0 %v1709
        %1816 = vmatprep.subr.mxu0 %v1714
        %1817 = vmatpush1.msra.mxu0 %v1713
        %1818 = vmatprep.subr.mxu0 0.0
        %1819 = vmatpush1.msra.mxu0 0.0
        %1820 = vmatprep.subr.mxu0 0.0
        %1821 = vmatpush1.msra.mxu0 0.0
        %1822 = vmatprep.subr.mxu0 0.0
        %1823 = vmatpush1.msra.mxu0 0.0
        %1824 = vmatprep.subr.mxu0 0.0
        %1825 = vmatpush1.msra.mxu0 0.0
        %1826 = vmatprep.subr.mxu0 0.0
        %1827 = vmatpush1.msra.mxu0 0.0
        %1828 = vmatprep.subr.mxu0 0.0
        %1829 = vmatpush1.msra.mxu0 0.0
        %1830 = vmatprep.subr.mxu0 0.0
        %1831 = vmatpush1.msra.mxu0 0.0
        %1832 = vmatprep.subr.mxu0 0.0
        %1833 = vmatpush1.msra.mxu0 0.0
        %1834 = vmatprep.subr.mxu0 0.0
        %1835 = vmatpush1.msra.mxu0 0.0
        %1836 = vmatprep.subr.mxu0 0.0
        %1837 = vmatpush1.msra.mxu0 0.0
        %1838 = vmatprep.subr.mxu0 0.0
        %1839 = vmatpush1.msra.mxu0 0.0
        %1840 = vmatprep.subr.mxu0 0.0
        %1841 = vmatpush1.msra.mxu0 0.0
        %1842 = vmatprep.subr.mxu0 0.0
        %1843 = vmatpush1.msra.mxu0 0.0
        %1844 = vmatprep.subr.mxu0 0.0
        %1845 = vmatpush1.msra.mxu0 0.0
        %1846 = vmatprep.subr.mxu0 0.0
        %1847 = vmatpush1.msra.mxu0 0.0
        %1848 = vmatprep.subr.mxu0 0.0
        %1849 = vmatpush1.msra.mxu0 0.0
        %1850 = vmatprep.mubr.f32.mxu0 0.0
        %1851 = vmatmul.mubr.f32.gmra.mrb[0].mxu0 %v1650
        %v1852 = vpop.f32.mrb[0].mxu0
        %v1853 = vadd.f32 0.0, %v1852
        %v1854 = vpop.f32.mrb[0].mxu0
        %v1855 = vadd.f32 0.0, %v1854
        %1856 = vdwg.mxu0
        %1857 = vmatprep.subr.mxu0 %v1428
        %1858 = vmatpush1.msra.mxu0 %v1427
        %1859 = vmatprep.subr.mxu0 %v1432
        %1860 = vmatpush1.msra.mxu0 %v1431
        %1861 = vmatprep.subr.mxu0 %v1436
        %1862 = vmatpush1.msra.mxu0 %v1435
        %1863 = vmatprep.subr.mxu0 %v1440
        %1864 = vmatpush1.msra.mxu0 %v1439
        %1865 = vmatprep.subr.mxu0 %v1444
        %1866 = vmatpush1.msra.mxu0 %v1443
        %1867 = vmatprep.subr.mxu0 %v1448
        %1868 = vmatpush1.msra.mxu0 %v1447
        %1869 = vmatprep.subr.mxu0 %v1452
        %1870 = vmatpush1.msra.mxu0 %v1451
        %1871 = vmatprep.subr.mxu0 %v1456
        %1872 = vmatpush1.msra.mxu0 %v1455
        %1873 = vmatprep.subr.mxu0 %v1460
        %1874 = vmatpush1.msra.mxu0 %v1459
        %1875 = vmatprep.subr.mxu0 %v1464
        %1876 = vmatpush1.msra.mxu0 %v1463
        %1877 = vmatprep.subr.mxu0 %v1468
        %1878 = vmatpush1.msra.mxu0 %v1467
        %1879 = vmatprep.subr.mxu0 %v1472
        %1880 = vmatpush1.msra.mxu0 %v1471
        %1881 = vmatprep.subr.mxu0 %v1476
        %1882 = vmatpush1.msra.mxu0 %v1475
        %1883 = vmatprep.subr.mxu0 %v1480
        %1884 = vmatpush1.msra.mxu0 %v1479
        %1885 = vmatprep.subr.mxu0 %v1484
        %1886 = vmatpush1.msra.mxu0 %v1483
        %1887 = vmatprep.subr.mxu0 %v1488
        %1888 = vmatpush1.msra.mxu0 %v1487
        %1889 = vmatprep.subr.mxu0 0.0
        %1890 = vmatpush1.msra.mxu0 0.0
        %1891 = vmatprep.subr.mxu0 0.0
        %1892 = vmatpush1.msra.mxu0 0.0
        %1893 = vmatprep.subr.mxu0 0.0
        %1894 = vmatpush1.msra.mxu0 0.0
        %1895 = vmatprep.subr.mxu0 0.0
        %1896 = vmatpush1.msra.mxu0 0.0
        %1897 = vmatprep.subr.mxu0 0.0
        %1898 = vmatpush1.msra.mxu0 0.0
        %1899 = vmatprep.subr.mxu0 0.0
        %1900 = vmatpush1.msra.mxu0 0.0
        %1901 = vmatprep.subr.mxu0 0.0
        %1902 = vmatpush1.msra.mxu0 0.0
        %1903 = vmatprep.subr.mxu0 0.0
        %1904 = vmatpush1.msra.mxu0 0.0
        %1905 = vmatprep.subr.mxu0 0.0
        %1906 = vmatpush1.msra.mxu0 0.0
        %1907 = vmatprep.subr.mxu0 0.0
        %1908 = vmatpush1.msra.mxu0 0.0
        %1909 = vmatprep.subr.mxu0 0.0
        %1910 = vmatpush1.msra.mxu0 0.0
        %1911 = vmatprep.subr.mxu0 0.0
        %1912 = vmatpush1.msra.mxu0 0.0
        %1913 = vmatprep.subr.mxu0 0.0
        %1914 = vmatpush1.msra.mxu0 0.0
        %1915 = vmatprep.subr.mxu0 0.0
        %1916 = vmatpush1.msra.mxu0 0.0
        %1917 = vmatprep.subr.mxu0 0.0
        %1918 = vmatpush1.msra.mxu0 0.0
        %1919 = vmatprep.subr.mxu0 0.0
        %1920 = vmatpush1.msra.mxu0 0.0
        %1921 = vmatprep.mubr.f32.mxu0 0.0
        %1922 = vmatmul.mubr.f32.gmra.mrb[0].mxu0 %v1426
        %v1923 = vpop.f32.mrb[0].mxu0
        %v1924 = vadd.f32 %v1782, %v1923
        %v1925 = vpop.f32.mrb[0].mxu0
        %v1926 = vadd.f32 %v1784, %v1925
        %1927 = vdwg.mxu0
        %1928 = vmatprep.subr.mxu0 %v1430
        %1929 = vmatpush1.msra.mxu0 %v1429
        %1930 = vmatprep.subr.mxu0 %v1434
        %1931 = vmatpush1.msra.mxu0 %v1433
        %1932 = vmatprep.subr.mxu0 %v1438
        %1933 = vmatpush1.msra.mxu0 %v1437
        %1934 = vmatprep.subr.mxu0 %v1442
        %1935 = vmatpush1.msra.mxu0 %v1441
        %1936 = vmatprep.subr.mxu0 %v1446
        %1937 = vmatpush1.msra.mxu0 %v1445
        %1938 = vmatprep.subr.mxu0 %v1450
        %1939 = vmatpush1.msra.mxu0 %v1449
        %1940 = vmatprep.subr.mxu0 %v1454
        %1941 = vmatpush1.msra.mxu0 %v1453
        %1942 = vmatprep.subr.mxu0 %v1458
        %1943 = vmatpush1.msra.mxu0 %v1457
        %1944 = vmatprep.subr.mxu0 %v1462
        %1945 = vmatpush1.msra.mxu0 %v1461
        %1946 = vmatprep.subr.mxu0 %v1466
        %1947 = vmatpush1.msra.mxu0 %v1465
        %1948 = vmatprep.subr.mxu0 %v1470
        %1949 = vmatpush1.msra.mxu0 %v1469
        %1950 = vmatprep.subr.mxu0 %v1474
        %1951 = vmatpush1.msra.mxu0 %v1473
        %1952 = vmatprep.subr.mxu0 %v1478
        %1953 = vmatpush1.msra.mxu0 %v1477
        %1954 = vmatprep.subr.mxu0 %v1482
        %1955 = vmatpush1.msra.mxu0 %v1481
        %1956 = vmatprep.subr.mxu0 %v1486
        %1957 = vmatpush1.msra.mxu0 %v1485
        %1958 = vmatprep.subr.mxu0 %v1490
        %1959 = vmatpush1.msra.mxu0 %v1489
        %1960 = vmatprep.subr.mxu0 0.0
        %1961 = vmatpush1.msra.mxu0 0.0
        %1962 = vmatprep.subr.mxu0 0.0
        %1963 = vmatpush1.msra.mxu0 0.0
        %1964 = vmatprep.subr.mxu0 0.0
        %1965 = vmatpush1.msra.mxu0 0.0
        %1966 = vmatprep.subr.mxu0 0.0
        %1967 = vmatpush1.msra.mxu0 0.0
        %1968 = vmatprep.subr.mxu0 0.0
        %1969 = vmatpush1.msra.mxu0 0.0
        %1970 = vmatprep.subr.mxu0 0.0
        %1971 = vmatpush1.msra.mxu0 0.0
        %1972 = vmatprep.subr.mxu0 0.0
        %1973 = vmatpush1.msra.mxu0 0.0
        %1974 = vmatprep.subr.mxu0 0.0
        %1975 = vmatpush1.msra.mxu0 0.0
        %1976 = vmatprep.subr.mxu0 0.0
        %1977 = vmatpush1.msra.mxu0 0.0
        %1978 = vmatprep.subr.mxu0 0.0
        %1979 = vmatpush1.msra.mxu0 0.0
        %1980 = vmatprep.subr.mxu0 0.0
        %1981 = vmatpush1.msra.mxu0 0.0
        %1982 = vmatprep.subr.mxu0 0.0
        %1983 = vmatpush1.msra.mxu0 0.0
        %1984 = vmatprep.subr.mxu0 0.0
        %1985 = vmatpush1.msra.mxu0 0.0
        %1986 = vmatprep.subr.mxu0 0.0
        %1987 = vmatpush1.msra.mxu0 0.0
        %1988 = vmatprep.subr.mxu0 0.0
        %1989 = vmatpush1.msra.mxu0 0.0
        %1990 = vmatprep.subr.mxu0 0.0
        %1991 = vmatpush1.msra.mxu0 0.0
        %1992 = vmatprep.mubr.f32.mxu0 0.0
        %1993 = vmatmul.mubr.f32.gmra.mrb[0].mxu0 %v1426
        %v1994 = vpop.f32.mrb[0].mxu0
        %v1995 = vadd.f32 %v1853, %v1994
        %v1996 = vpop.f32.mrb[0].mxu0
        %v1997 = vadd.f32 %v1855, %v1996
        %1998 = vdwg.mxu0
        %v1999 = vld [vmem:[#allocation2] sm:$0xff]
        %v2000 = vld [vmem:[#allocation2 + $0x8] sm:$0xff]
        %v2001 = vld [vmem:[#allocation2 + $0x10] sm:$0xff]
        %v2002 = vld [vmem:[#allocation2 + $0x18] sm:$0xff]
        %v2003 = vadd.f32 %v1999, %v1924
        %v2004 = vadd.f32 %v2000, %v1926
        %v2005 = vadd.f32 %v2001, %v1995
        %v2006 = vadd.f32 %v2002, %v1997
        %2007 = vst [vmem:[#allocation2] sm:$0xff] %v2003
        %2008 = vst [vmem:[#allocation2 + $0x8] sm:$0xff] %v2004
        %2009 = vst [vmem:[#allocation2 + $0x10] sm:$0xff] %v2005
        %2010 = vst [vmem:[#allocation2 + $0x18] sm:$0xff] %v2006
        %p2011 = scmp.eq.s32.totalorder %s32, 1
        // Predicated region
        $region89: #{llm_block_forward.2} parent=51 // pred_check
          %p2012 = pneg %p2011
        $region90: #{llm_block_forward.2} parent=51 // pred_check_branch
          %2014 = sbr.rel (%p2012) target = $region92
        $region91: #{llm_block_forward.2} parent=51 // pred_region
          %v2015 = vld [vmem:[#allocation2] sm:$0xff]
          %v2016 = vld [vmem:[#allocation2 + $0x8] sm:$0xff]
          %v2017 = vld [vmem:[#allocation2 + $0x10] sm:$0xff]
          %v2018 = vld [vmem:[#allocation2 + $0x18] sm:$0xff]
          %2019 = vst [vmem:[%s518] sm:$0xff] %v2015
          %2020 = vst [vmem:[%s518 + $0x8] sm:$0xff] %v2016
          %2021 = vst [vmem:[%s518 + $0x10] sm:$0xff] %v2017
          %2022 = vst [vmem:[%s518 + $0x18] sm:$0xff] %v2018
        $region92: #{llm_block_forward.2} parent=51 // pred_fallthru
          _
        %s2023 = sand.u32 %s240, 1
        %s2024 = scalar_lea.sflag [#allocation5], %s2023
        %s2025 = sand.u32 %s240, 1
        %s2026 = smul.addr %s2025, 32
        %s2027 = scalar_lea.vmem [#allocation15], %s2026
        // Predicated region
        $region93: #{llm_block_forward.2} parent=51 // pred_check
          %p2028 = pneg %p250
        $region94: #{llm_block_forward.2} parent=51 // pred_check_branch
          %2030 = sbr.rel (%p2028) target = $region96
        $region95: #{llm_block_forward.2} parent=51 // pred_region
          %s2032 = ssub.s32 512, 512
          %2033 = vsyncadd %s2024, %s2032
          %s2034 = smul.addr %s31, 4
          %s2035 = smul.addr %s2034, 128
          %s2036 = scalar_lea.hbm %s8, %s2035
          %s2038 = sshll.u32 %s2027, 4
          %s2039 = int_to_ptr.vmem [resolvable:$true] %s2038
          %2041 = dma.vmem_to_hbm [thread:$0]  %s2039, 512, %s2036, %s2024
        $region96: #{llm_block_forward.2} parent=51 // pred_fallthru
          _
      $region52: #{llm_block_forward.2} parent=5 // pred_fallthru
        _
      %p2042 = scmp.le.s32.totalorder 2, %s22
      // Predicated region
      $region97: #{llm_block_forward.2} parent=5 // pred_check
        %p2043 = pneg %p2042
      $region98: #{llm_block_forward.2} parent=5 // pred_check_branch
        %2045 = sbr.rel (%p2043) target = $region100
      $region99: #{llm_block_forward.2} parent=5 // pred_region
        %s2046 = ssub.s32 %s22, 2
        // Predicated region
        $region101: #{llm_block_forward.2} parent=99 // pred_check
          %p2047 = pneg %p256
        $region102: #{llm_block_forward.2} parent=99 // pred_check_branch
          %2049 = sbr.rel (%p2047) target = $region104
        $region103: #{llm_block_forward.2} parent=99 // pred_region
          %s2050 = sand.u32 %s241, 1
          %s2051 = scalar_lea.sflag [#allocation5], %s2050
          %s2052 = sand.u32 %s241, 1
          %s2053 = smul.addr %s2052, 32
          %s2054 = scalar_lea.vmem [#allocation15], %s2053
          %2055 = dma.done %s2051, 512
        $region104: #{llm_block_forward.2} parent=99 // pred_fallthru
          _
      $region100: #{llm_block_forward.2} parent=5 // pred_fallthru
        _
    $region6: #{llm_block_forward.2} parent=1 // loop_footer
      %s26 = sadd.s32 1, %s22
    $region7: #{llm_block_forward.2} parent=1 // loop_footer_branch
      %21 = sbr.rel target = $region3
    $region8: #{llm_block_forward.2} parent=1 // loop_exit
      _
    %2056 = vsyncpa [#allocation4], 1
    %s2057 = scalar_lea.sflag [#allocation4], 1
    %2058 = vsyncpa %s2057, 1
    %2059 = vsyncpa [#allocation7], 1
    %2060 = vsyncpa [#allocation10], 1
    %2061 = vsyncpa [#allocation5], 1
    %s2062 = scalar_lea.sflag [#allocation5], 1
    %2063 = vsyncpa %s2062, 1

</llo_original>
